<compile_context>
chip_gen: v5e
topology: v5e:2x2
jax: 0.10.0
libtpu: 0.0.40
codegen_flags: <defaults>
</compile_context>

<pallas_src>
import jax
import jax.numpy as jnp
from jax import lax
from jax.experimental import pallas as pl
from jax.experimental.pallas import tpu as pltpu


def _vmem():
    # whole-array block resident in VMEM (used only for tiny operands)
    return pl.BlockSpec(memory_space=pltpu.MemorySpace.VMEM)


def _pick_tile(n, max_tile):
    """Largest row tile <= max_tile that divides n and is a multiple of 8."""
    if n <= max_tile:
        return n
    t = max_tile - (max_tile % 8)
    while t >= 8:
        if n % t == 0:
            return t
        t -= 8
    return n


def _block_diag(w, p):
    """p-fold block-diagonal copy of w (built once in the wrapper, tiny)."""
    if p == 1:
        return w
    k, n = w.shape
    out = jnp.zeros((p * k, p * n), w.dtype)
    for r in range(p):
        out = out.at[r * k:(r + 1) * k, r * n:(r + 1) * n].set(w)
    return out


# ----------------------------------------------------------------------------
# Kernel 1: LSTM over a padded batch, returning the final cell state c
# (pack_padded_sequence + nn.LSTM: state stops updating once t >= q_len[b])
# ----------------------------------------------------------------------------
def _lstm_kernel(x_ref, len_ref, wih_ref, whh_ref, b_ref, c_out_ref, gx_ref):
    # x: (T*B, E) time-major rows, len: (B, 1) int32, wih: (E, 4H),
    # whh: (H, 4H), b: (1, 4H) (= b_ih + b_hh), c_out: (B, H), gx: VMEM scratch
    TB, _ = x_ref.shape
    B = len_ref.shape[0]
    T = TB // B
    H = whh_ref.shape[0]

    # Hoisted input projection: one matmul outside the recurrence.
    gx_ref[...] = (jnp.dot(x_ref[...], wih_ref[...],
                           preferred_element_type=jnp.float32) + b_ref[...])

    whh = whh_ref[...]
    lens = len_ref[...]                                  # (B, 1) int32
    lane = lax.broadcasted_iota(jnp.int32, (B, 4 * H), 1)
    is_g = (lane >= 2 * H) & (lane < 3 * H)              # cell-gate lanes -> tanh

    def step(t, carry):
        h, c = carry
        gates = (gx_ref[pl.ds(t * B, B), :]
                 + jnp.dot(h, whh, preferred_element_type=jnp.float32))
        # Full 128-lane transcendentals (EUP) + lane-mask select instead of
        # four separate 32-lane slices through sigmoid/tanh.
        act = jnp.where(is_g, jnp.tanh(gates), jax.nn.sigmoid(gates))
        i = act[:, 0:H]
        f = act[:, H:2 * H]
        g = act[:, 2 * H:3 * H]
        o = act[:, 3 * H:4 * H]
        c_new = f * c + i * g
        h_new = o * jnp.tanh(c_new)
        valid = t < lens                                 # packed-seq freeze
        return jnp.where(valid, h_new, h), jnp.where(valid, c_new, c)

    h0 = jnp.zeros((B, H), jnp.float32)
    c0 = jnp.zeros((B, H), jnp.float32)
    _, c_fin = lax.fori_loop(0, T, step, (h0, c0), unroll=True)
    c_out_ref[...] = c_fin


def lstm_final_c(ques_bte, q_len, wih, whh, b):
    B, T, E = ques_bte.shape
    H = whh.shape[0]
    x2d = jnp.transpose(ques_bte, (1, 0, 2)).reshape(T * B, E)   # time-major rows
    lens = q_len.reshape(B, 1).astype(jnp.int32)
    return pl.pallas_call(
        _lstm_kernel,
        out_shape=jax.ShapeDtypeStruct((B, H), jnp.float32),
        in_specs=[_vmem()] * 5,
        out_specs=_vmem(),
        scratch_shapes=[pltpu.VMEM((T * B, 4 * H), jnp.float32)],
    )(x2d, lens, wih, whh, b)


# ----------------------------------------------------------------------------
# Kernel 2: pointwise (1x1) conv + ReLU on a row-tiled (N, Cin) slab
# ----------------------------------------------------------------------------
def _pwconv_relu_kernel(x_ref, w_ref, b_ref, o_ref):
    y = jnp.dot(x_ref[...].astype(jnp.bfloat16), w_ref[...],
                preferred_element_type=jnp.float32) + b_ref[...]
    o_ref[...] = jnp.maximum(y, 0.0)


def pointwise_conv_relu(x_nhwc, w, b):
    B, H, W, Ci = x_nhwc.shape
    Co = w.shape[1]
    N = B * H * W
    x2d = x_nhwc.reshape(N, Ci)
    tile = _pick_tile(N, 1024)
    y = pl.pallas_call(
        _pwconv_relu_kernel,
        grid=(N // tile,),
        in_specs=[pl.BlockSpec((tile, Ci), lambda t: (t, 0)),
                  pl.BlockSpec((Ci, Co), lambda t: (0, 0)),
                  pl.BlockSpec((1, Co), lambda t: (0, 0))],
        out_specs=pl.BlockSpec((tile, Co), lambda t: (t, 0)),
        out_shape=jax.ShapeDtypeStruct((N, Co), jnp.float32),
        compiler_params=pltpu.CompilerParams(
            dimension_semantics=("parallel",),
            vmem_limit_bytes=32 * 1024 * 1024),
    )(x2d, w.astype(jnp.bfloat16), b.reshape(1, Co))
    return y.reshape(B, H, W, Co)


# ----------------------------------------------------------------------------
# Kernel 3: MaxPool2d(kernel_size=3, stride=2, padding=1), NHWC layout.
# Wrapper pads with -inf and splits padded columns into even/odd planes; the
# kernel then only needs contiguous slices + vectorized maxes (one store per
# output row instead of Ho*Wo tiny masked stores).
# ----------------------------------------------------------------------------
def _maxpool3x3_s2_p1_kernel(xe_ref, xo_ref, o_ref):
    _, Ho, Wo, _ = o_ref.shape
    a = xe_ref[:, :, 0:Wo, :]          # padded col 2j
    b = xo_ref[:, :, 0:Wo, :]          # padded col 2j+1
    c = xe_ref[:, :, 1:Wo + 1, :]      # padded col 2j+2
    colmax = jnp.maximum(jnp.maximum(a, b), c)         # (B, Hp, Wo, C)
    for i in range(Ho):                                # window rows 2i..2i+2
        o_ref[:, i, :, :] = jnp.max(colmax[:, 2 * i:2 * i + 3, :, :], axis=1)


def maxpool_3x3_s2_p1(x_nhwc):
    B, H, W, C = x_nhwc.shape
    Ho = (H + 2 - 3) // 2 + 1
    Wo = (W + 2 - 3) // 2 + 1
    neg = jnp.finfo(x_nhwc.dtype).min
    xpad = jnp.pad(x_nhwc, ((0, 0), (1, 1), (1, 1), (0, 0)), constant_values=neg)
    xe = xpad[:, :, 0::2, :]           # layout glue: even padded columns
    xo = xpad[:, :, 1::2, :]           # layout glue: odd padded columns
    return pl.pallas_call(
        _maxpool3x3_s2_p1_kernel,
        out_shape=jax.ShapeDtypeStruct((B, Ho, Wo, C), x_nhwc.dtype),
        in_specs=[_vmem(), _vmem()],
        out_specs=_vmem(),
    )(xe, xo)


# ----------------------------------------------------------------------------
# Kernel 4a: BatchNorm batch-statistics accumulation (per packed lane)
# ----------------------------------------------------------------------------
def _bn_stats_kernel(x_ref, sum_ref, sq_ref):
    @pl.when(pl.program_id(0) == 0)
    def _():
        sum_ref[...] = jnp.zeros_like(sum_ref)
        sq_ref[...] = jnp.zeros_like(sq_ref)
    x = x_ref[...]
    sum_ref[...] += jnp.sum(x, axis=0, keepdims=True)
    sq_ref[...] += jnp.sum(x * x, axis=0, keepdims=True)


# ----------------------------------------------------------------------------
# Kernel 4b: question-side contribution of the first bimodal conv:
#   BN(ques_feat) @ W0_q + b0   (per-image bias, computed once)
# ----------------------------------------------------------------------------
def _ques_side_kernel(q_ref, gamma_ref, beta_ref, w_ref, b_ref, o_ref):
    q = q_ref[...]                                       # (B, Q)
    mean = jnp.mean(q, axis=0, keepdims=True)
    var = jnp.mean(jnp.square(q - mean), axis=0, keepdims=True)   # biased
    qn = (q - mean) * lax.rsqrt(var + 1e-5) * gamma_ref[...] + beta_ref[...]
    o_ref[...] = (jnp.dot(qn.astype(w_ref.dtype), w_ref[...],
                          preferred_element_type=jnp.float32) + b_ref[...])


# ----------------------------------------------------------------------------
# Kernel 4c: bimodal apply pass on row-tiled, spatially-packed slabs:
#   BN affine -> [ +q-side bias after conv0 ] -> 4 x (1x1 conv + ReLU)
# All matmuls use block-diagonal packed weights (K, N >= 128) in bf16 with f32
# accumulation; the output store is 128-lane dense.
# ----------------------------------------------------------------------------
def _bimodal_kernel(x_ref, scale_ref, shift_ref, q_ref, *rest):
    o_ref = rest[-1]
    w0_ref = rest[0]
    layers = rest[1:-1]                                  # (w1, b1, w2, b2, ...)
    xn = x_ref[...] * scale_ref[...] + shift_ref[...]    # BatchNorm (f32)
    y = (jnp.dot(xn.astype(jnp.bfloat16), w0_ref[...],
                 preferred_element_type=jnp.float32) + q_ref[...])
    y = jnp.maximum(y, 0.0)
    for k in range(0, len(layers), 2):
        y = (jnp.dot(y.astype(jnp.bfloat16), layers[k][...],
                     preferred_element_type=jnp.float32) + layers[k + 1][...])
        y = jnp.maximum(y, 0.0)
    o_ref[...] = y.astype(o_ref.dtype)


def bimodal_embedding(img_feat_nhwc, ques_feat, bp):
    B, Hh, Ww, Ci = img_feat_nhwc.shape
    U = bp["w0_img"].shape[1]
    HW = Hh * Ww
    P = 4 if HW % 4 == 0 else 1                 # spatial packing (lane density)
    C4, U4 = P * Ci, P * U
    HWp = HW // P
    n_rows = B * HW                             # BN reduction count per channel

    x_packed = img_feat_nhwc.reshape(B, HWp, C4)          # free reshape

    # ---- pass 1: accumulate per-(packed)lane sum / sumsq over all rows ------
    x_rows = x_packed.reshape(B * HWp, C4)
    tile_s = _pick_tile(B * HWp, 2048)
    ssum, ssq = pl.pallas_call(
        _bn_stats_kernel,
        grid=(x_rows.shape[0] // tile_s,),
        in_specs=[pl.BlockSpec((tile_s, C4), lambda t: (t, 0))],
        out_specs=(pl.BlockSpec((1, C4), lambda t: (0, 0)),
                   pl.BlockSpec((1, C4), lambda t: (0, 0))),
        out_shape=(jax.ShapeDtypeStruct((1, C4), jnp.float32),
                   jax.ShapeDtypeStruct((1, C4), jnp.float32)),
        compiler_params=pltpu.CompilerParams(
            dimension_semantics=("arbitrary",),
            vmem_limit_bytes=32 * 1024 * 1024),
    )(x_rows)

    # finalize BN affine (tiny per-channel glue between the two Pallas passes)
    ch_sum = ssum.reshape(P, Ci).sum(axis=0)
    ch_sq = ssq.reshape(P, Ci).sum(axis=0)
    mean = ch_sum / n_rows
    var = ch_sq / n_rows - mean * mean                    # biased (training BN)
    scale = bp["gamma_img"] * lax.rsqrt(var + 1e-5)
    shift = bp["beta_img"] - mean * scale
    scale4 = jnp.tile(scale, P).reshape(1, C4)
    shift4 = jnp.tile(shift, P).reshape(1, C4)

    # ---- question side: BN(ques) @ W0_q + b0, once per image ----------------
    q_side = pl.pallas_call(
        _ques_side_kernel,
        out_shape=jax.ShapeDtypeStruct((B, U), jnp.float32),
        in_specs=[_vmem()] * 5,
        out_specs=_vmem(),
    )(ques_feat,
      bp["gamma_q"].reshape(1, -1), bp["beta_q"].reshape(1, -1),
      bp["w0_q"].astype(jnp.bfloat16), bp["b0"].reshape(1, U))
    q_side_p = jnp.tile(q_side, (1, P)).reshape(B, 1, U4)

    # packed (block-diagonal) weights / tiled biases
    w0p = _block_diag(bp["w0_img"], P).astype(jnp.bfloat16)
    wps = [_block_diag(w, P).astype(jnp.bfloat16) for w in bp["w"]]
    bps = [jnp.tile(b, P).reshape(1, U4) for b in bp["b"]]

    tile_r = _pick_tile(HWp, 512)
    in_specs = [
        pl.BlockSpec((None, tile_r, C4), lambda b, t: (b, t, 0)),   # img rows
        pl.BlockSpec((1, C4), lambda b, t: (0, 0)),                 # scale
        pl.BlockSpec((1, C4), lambda b, t: (0, 0)),                 # shift
        pl.BlockSpec((None, 1, U4), lambda b, t: (b, 0, 0)),        # q-side bias
        pl.BlockSpec((C4, U4), lambda b, t: (0, 0)),                # w0 packed
    ]
    args = [x_packed, scale4, shift4, q_side_p, w0p]
    for w, bb in zip(wps, bps):
        in_specs.append(pl.BlockSpec((U4, U4), lambda b, t: (0, 0)))
        args.append(w)
        in_specs.append(pl.BlockSpec((1, U4), lambda b, t: (0, 0)))
        args.append(bb)

    y = pl.pallas_call(
        _bimodal_kernel,
        grid=(B, HWp // tile_r),
        in_specs=in_specs,
        out_specs=pl.BlockSpec((None, tile_r, U4), lambda b, t: (b, t, 0)),
        out_shape=jax.ShapeDtypeStruct((B, HWp, U4), jnp.float32),
        compiler_params=pltpu.CompilerParams(
            dimension_semantics=("parallel", "parallel"),
            vmem_limit_bytes=32 * 1024 * 1024),
    )(*args)
    return y.reshape(B, Hh, Ww, U)                        # unpack (free reshape)


# ----------------------------------------------------------------------------
# DenseNet stand-in encoder + full forward
# ----------------------------------------------------------------------------
def avg_pool(x_nhwc, k):
    B, H, W, C = x_nhwc.shape
    return x_nhwc.reshape(B, H // k, k, W // k, k, C).mean(axis=(2, 4))


def densenet_encoder_standin(img_nhwc, p):
    # TODO(synk): real DenseNet definition not provided; deterministic stand-in.
    # feat_mid is never consumed by BasePReFIL.forward, so it is not computed.
    feat_low = pointwise_conv_relu(avg_pool(img_nhwc, 2), p["enc_low_w"], p["enc_low_b"])
    feat_high = pointwise_conv_relu(avg_pool(img_nhwc, 4), p["enc_high_w"], p["enc_high_b"])
    return feat_low, feat_high


def prefil_forward(p, img_nchw, ques, q_len):
    img_nhwc = jnp.transpose(img_nchw, (0, 2, 3, 1))
    # rnn: TranscriptEncoder -> final LSTM cell state
    ques_feat = lstm_final_c(ques, q_len, p["lstm_wih"], p["lstm_whh"], p["lstm_b"])
    # cnn: DenseNetEncoder (stand-in)
    feat_low, feat_high = densenet_encoder_standin(img_nhwc, p)
    # maxpool_low
    feat_low = maxpool_3x3_s2_p1(feat_low)
    # bimodal embeddings
    low = bimodal_embedding(feat_low, ques_feat, p["bimodal_low"])
    high = bimodal_embedding(feat_high, ques_feat, p["bimodal_high"])
    # back to PyTorch NCHW convention
    return jnp.transpose(low, (0, 3, 1, 2)), jnp.transpose(high, (0, 3, 1, 2))


def init_params(key, E, Q, U, c_low, c_high, num_mmc_layers=4):
    ks = iter(jax.random.split(key, 64))

    def nrm(shape, s=0.1):
        return s * jax.random.normal(next(ks), shape, jnp.float32)

    def bimodal(ci):
        return {
            "gamma_img": jnp.ones((ci,), jnp.float32),
            "beta_img": jnp.zeros((ci,), jnp.float32),
            "gamma_q": jnp.ones((Q,), jnp.float32),
            "beta_q": jnp.zeros((Q,), jnp.float32),
            "w0_img": nrm((ci, U)),                 # first conv, image rows
            "w0_q": nrm((Q, U)),                    # first conv, question rows
            "b0": nrm((U,)),
            "w": [nrm((U, U)) for _ in range(num_mmc_layers - 1)],
            "b": [nrm((U,)) for _ in range(num_mmc_layers - 1)],
        }

    return {
        "lstm_wih": nrm((E, 4 * Q)),
        "lstm_whh": nrm((Q, 4 * Q)),
        "lstm_b": nrm((1, 4 * Q)),                  # b_ih + b_hh combined
        "enc_low_w": nrm((3, c_low)), "enc_low_b": nrm((c_low,)),
        "enc_high_w": nrm((3, c_high)), "enc_high_b": nrm((c_high,)),
        "bimodal_low": bimodal(c_low),
        "bimodal_high": bimodal(c_high),
    }


if __name__ == "__main__":
    # small config consistent with the module:
    #   word_emb_dim=16, ques_lstm_out=32, num_bimodal_units=32,
    #   densenet_dim low/high = (8, 24), num_mmc_layers=4
    B, T, E = 2, 8, 16
    Q, U = 32, 32
    C_LOW, C_HIGH = 8, 24

    key = jax.random.PRNGKey(0)
    k_img, k_q, k_p = jax.random.split(key, 3)

    img = jax.random.normal(k_img, (B, 3, 32, 32), jnp.float32)   # NCHW like PyTorch
    ques = jax.random.normal(k_q, (B, T, E), jnp.float32)         # already-embedded tokens
    q_len = jnp.array([T, 5], jnp.int32)                          # sorted, packed-seq style

    params = init_params(k_p, E, Q, U, C_LOW, C_HIGH)

    fwd = jax.jit(prefil_forward)
    low, high = fwd(params, img, ques, q_len)
    jax.block_until_ready((low, high))

    assert low.shape == (B, U, 8, 8), low.shape
    assert high.shape == (B, U, 8, 8), high.shape
    assert bool(jnp.all(jnp.isfinite(low))) and bool(jnp.all(jnp.isfinite(high)))
    print("KERNEL_OK")
</pallas_src>

<mosaic_0001>
module attributes {stable_mosaic.version = 11 : i64} {
  func.func @_pwconv_relu_kernel(%arg0: i32, %arg1: memref<512x3xf32, #tpu.memory_space<vmem>>, %arg2: memref<3x8xbf16, #tpu.memory_space<vmem>>, %arg3: memref<1x8xf32, #tpu.memory_space<vmem>>, %arg4: memref<512x8xf32, #tpu.memory_space<vmem>>) attributes {dimension_semantics = [#tpu.dimension_semantics<parallel>], iteration_bounds = array<i64: 1>, scalar_prefetch = 0 : i64, scratch_operands = 0 : i64, tpu.core_type = #tpu.core_type<tc>, window_params = [{transform_indices = @transform_0, window_bounds = array<i64: 512, 3>}, {pipeline_mode = #tpu.pipeline_mode<synchronous>, transform_indices = @transform_1, window_bounds = array<i64: 3, 8>}, {pipeline_mode = #tpu.pipeline_mode<synchronous>, transform_indices = @transform_2, window_bounds = array<i64: 1, 8>}, {transform_indices = @transform_3, window_bounds = array<i64: 512, 8>}]} {
    %c0 = arith.constant 0 : index
    %c0_0 = arith.constant 0 : index
    %0 = vector.load %arg1[%c0, %c0_0] : memref<512x3xf32, #tpu.memory_space<vmem>>, vector<512x3xf32>
    %1 = arith.truncf %0 : vector<512x3xf32> to vector<512x3xbf16>
    %c0_1 = arith.constant 0 : index
    %c0_2 = arith.constant 0 : index
    %2 = vector.load %arg2[%c0_1, %c0_2] : memref<3x8xbf16, #tpu.memory_space<vmem>>, vector<3x8xbf16>
    %cst = arith.constant dense<0.000000e+00> : vector<512x8xf32>
    %3 = tpu.matmul %1, %2, %cst {dimension_numbers = #tpu.dot_dimension_numbers<[1], [0], [0], [1], [0, 0, 1, 1], [], []>} : vector<512x3xbf16>, vector<3x8xbf16>, vector<512x8xf32> -> vector<512x8xf32>
    %c0_3 = arith.constant 0 : index
    %c0_4 = arith.constant 0 : index
    %4 = vector.load %arg3[%c0_3, %c0_4] : memref<1x8xf32, #tpu.memory_space<vmem>>, vector<1x8xf32>
    %5 = vector.broadcast %4 : vector<1x8xf32> to vector<512x8xf32>
    %6 = arith.addf %3, %5 : vector<512x8xf32>
    %cst_5 = arith.constant 0.000000e+00 : f32
    %7 = vector.broadcast %cst_5 : f32 to vector<512x8xf32>
    %8 = arith.maximumf %6, %7 : vector<512x8xf32>
    %c0_6 = arith.constant 0 : index
    %c0_7 = arith.constant 0 : index
    %9 = vector.load %arg4[%c0_6, %c0_7] : memref<512x8xf32, #tpu.memory_space<vmem>>, vector<512x8xf32>
    tpu.vector_store %arg4[%c0_6, %c0_7], %8 {strides = array<i32>} : memref<512x8xf32, #tpu.memory_space<vmem>>, vector<512x8xf32>,
    return
  }
  func.func @transform_0(%arg0: i32) -> (i32, i32) {
    %c0_i32 = arith.constant 0 : i32
    %c0_i32_0 = arith.constant 0 : i32
    return %arg0, %c0_i32 : i32, i32
  }
  func.func @transform_1(%arg0: i32) -> (i32, i32) {
    %c0_i32 = arith.constant 0 : i32
    %c0_i32_0 = arith.constant 0 : i32
    %c0_i32_1 = arith.constant 0 : i32
    return %c0_i32, %c0_i32_0 : i32, i32
  }
  func.func @transform_2(%arg0: i32) -> (i32, i32) {
    %c0_i32 = arith.constant 0 : i32
    %c0_i32_0 = arith.constant 0 : i32
    %c0_i32_1 = arith.constant 0 : i32
    return %c0_i32, %c0_i32_0 : i32, i32
  }
  func.func @transform_3(%arg0: i32) -> (i32, i32) {
    %c0_i32 = arith.constant 0 : i32
    %c0_i32_0 = arith.constant 0 : i32
    return %arg0, %c0_i32 : i32, i32
  }
}

module attributes {stable_mosaic.version = 11 : i64} {
  func.func @_bn_stats_kernel(%arg0: i32, %arg1: memref<32x32xf32, #tpu.memory_space<vmem>>, %arg2: memref<1x32xf32, #tpu.memory_space<vmem>>, %arg3: memref<1x32xf32, #tpu.memory_space<vmem>>) attributes {dimension_semantics = [#tpu.dimension_semantics<arbitrary>], iteration_bounds = array<i64: 1>, scalar_prefetch = 0 : i64, scratch_operands = 0 : i64, tpu.core_type = #tpu.core_type<tc>, window_params = [{transform_indices = @transform_0, window_bounds = array<i64: 32, 32>}, {pipeline_mode = #tpu.pipeline_mode<synchronous>, transform_indices = @transform_1, window_bounds = array<i64: 1, 32>}, {pipeline_mode = #tpu.pipeline_mode<synchronous>, transform_indices = @transform_2, window_bounds = array<i64: 1, 32>}]} {
    %c0_i32 = arith.constant 0 : i32
    %0 = arith.cmpi eq, %arg0, %c0_i32 : i32
    %1 = arith.extui %0 : i1 to i32
    %c0_i32_0 = arith.constant 0 : i32
    %2 = arith.cmpi ne, %1, %c0_i32_0 : i32
    scf.if %2 {
      %cst_11 = arith.constant 0.000000e+00 : f32
      %15 = vector.broadcast %cst_11 : f32 to vector<1x32xf32>
      %c0_12 = arith.constant 0 : index
      %c0_13 = arith.constant 0 : index
      %16 = vector.load %arg2[%c0_12, %c0_13] : memref<1x32xf32, #tpu.memory_space<vmem>>, vector<1x32xf32>
      tpu.vector_store %arg2[%c0_12, %c0_13], %15 {strides = array<i32>} : memref<1x32xf32, #tpu.memory_space<vmem>>, vector<1x32xf32>,
      %cst_14 = arith.constant 0.000000e+00 : f32
      %17 = vector.broadcast %cst_14 : f32 to vector<1x32xf32>
      %c0_15 = arith.constant 0 : index
      %c0_16 = arith.constant 0 : index
      %18 = vector.load %arg3[%c0_15, %c0_16] : memref<1x32xf32, #tpu.memory_space<vmem>>, vector<1x32xf32>
      tpu.vector_store %arg3[%c0_15, %c0_16], %17 {strides = array<i32>} : memref<1x32xf32, #tpu.memory_space<vmem>>, vector<1x32xf32>,
    } else {
    }
    %c0 = arith.constant 0 : index
    %c0_1 = arith.constant 0 : index
    %3 = vector.load %arg1[%c0, %c0_1] : memref<32x32xf32, #tpu.memory_space<vmem>>, vector<32x32xf32>
    %c0_2 = arith.constant 0 : index
    %c0_3 = arith.constant 0 : index
    %4 = vector.load %arg2[%c0_2, %c0_3] : memref<1x32xf32, #tpu.memory_space<vmem>>, vector<1x32xf32>
    %cst = arith.constant dense<0.000000e+00> : vector<32xf32>
    %5 = vector.multi_reduction <add>, %3, %cst [0] : vector<32x32xf32> to vector<32xf32>
    %6 = vector.shape_cast %5 : vector<32xf32> to vector<1x32xf32>
    %7 = arith.addf %4, %6 : vector<1x32xf32>
    %c0_4 = arith.constant 0 : index
    %c0_5 = arith.constant 0 : index
    %8 = vector.load %arg2[%c0_4, %c0_5] : memref<1x32xf32, #tpu.memory_space<vmem>>, vector<1x32xf32>
    tpu.vector_store %arg2[%c0_4, %c0_5], %7 {strides = array<i32>} : memref<1x32xf32, #tpu.memory_space<vmem>>, vector<1x32xf32>,
    %c0_6 = arith.constant 0 : index
    %c0_7 = arith.constant 0 : index
    %9 = vector.load %arg3[%c0_6, %c0_7] : memref<1x32xf32, #tpu.memory_space<vmem>>, vector<1x32xf32>
    %10 = arith.mulf %3, %3 : vector<32x32xf32>
    %cst_8 = arith.constant dense<0.000000e+00> : vector<32xf32>
    %11 = vector.multi_reduction <add>, %10, %cst_8 [0] : vector<32x32xf32> to vector<32xf32>
    %12 = vector.shape_cast %11 : vector<32xf32> to vector<1x32xf32>
    %13 = arith.addf %9, %12 : vector<1x32xf32>
    %c0_9 = arith.constant 0 : index
    %c0_10 = arith.constant 0 : index
    %14 = vector.load %arg3[%c0_9, %c0_10] : memref<1x32xf32, #tpu.memory_space<vmem>>, vector<1x32xf32>
    tpu.vector_store %arg3[%c0_9, %c0_10], %13 {strides = array<i32>} : memref<1x32xf32, #tpu.memory_space<vmem>>, vector<1x32xf32>,
    return
  }
  func.func @transform_0(%arg0: i32) -> (i32, i32) {
    %c0_i32 = arith.constant 0 : i32
    %c0_i32_0 = arith.constant 0 : i32
    return %arg0, %c0_i32 : i32, i32
  }
  func.func @transform_1(%arg0: i32) -> (i32, i32) {
    %c0_i32 = arith.constant 0 : i32
    %c0_i32_0 = arith.constant 0 : i32
    %c0_i32_1 = arith.constant 0 : i32
    return %c0_i32, %c0_i32_0 : i32, i32
  }
  func.func @transform_2(%arg0: i32) -> (i32, i32) {
    %c0_i32 = arith.constant 0 : i32
    %c0_i32_0 = arith.constant 0 : i32
    %c0_i32_1 = arith.constant 0 : i32
    return %c0_i32, %c0_i32_0 : i32, i32
  }
}

module attributes {stable_mosaic.version = 11 : i64} {
  func.func @_maxpool3x3_s2_p1_kernel(%arg0: memref<2x18x9x8xf32, #tpu.memory_space<vmem>>, %arg1: memref<2x18x9x8xf32, #tpu.memory_space<vmem>>, %arg2: memref<2x8x8x8xf32, #tpu.memory_space<vmem>>) attributes {dimension_semantics = [], scalar_prefetch = 0 : i64, scratch_operands = 0 : i64, tpu.core_type = #tpu.core_type<tc>} {
    %c0 = arith.constant 0 : index
    %c0_0 = arith.constant 0 : index
    %c0_1 = arith.constant 0 : index
    %c0_2 = arith.constant 0 : index
    %0 = vector.load %arg0[%c0, %c0_0, %c0_1, %c0_2] : memref<2x18x9x8xf32, #tpu.memory_space<vmem>>, vector<2x18x8x8xf32>
    %c0_3 = arith.constant 0 : index
    %c0_4 = arith.constant 0 : index
    %c0_5 = arith.constant 0 : index
    %c0_6 = arith.constant 0 : index
    %1 = vector.load %arg1[%c0_3, %c0_4, %c0_5, %c0_6] : memref<2x18x9x8xf32, #tpu.memory_space<vmem>>, vector<2x18x8x8xf32>
    %c0_7 = arith.constant 0 : index
    %c0_8 = arith.constant 0 : index
    %c1 = arith.constant 1 : index
    %c0_9 = arith.constant 0 : index
    %2 = vector.load %arg0[%c0_7, %c0_8, %c1, %c0_9] : memref<2x18x9x8xf32, #tpu.memory_space<vmem>>, vector<2x18x8x8xf32>
    %3 = arith.maximumf %0, %1 : vector<2x18x8x8xf32>
    %4 = arith.maximumf %3, %2 : vector<2x18x8x8xf32>
    %5 = vector.extract_strided_slice %4 {offsets = [0, 0, 0, 0], sizes = [2, 3, 8, 8], strides = [1, 1, 1, 1]} : vector<2x18x8x8xf32> to vector<2x3x8x8xf32>
    %cst = arith.constant dense<0xFF800000> : vector<2x8x8xf32>
    %6 = vector.multi_reduction <maximumf>, %5, %cst [1] : vector<2x3x8x8xf32> to vector<2x8x8xf32>
    %c0_10 = arith.constant 0 : index
    %c0_11 = arith.constant 0 : index
    %c0_12 = arith.constant 0 : index
    %c0_13 = arith.constant 0 : index
    %7 = vector.load %arg2[%c0_10, %c0_11, %c0_12, %c0_13] : memref<2x8x8x8xf32, #tpu.memory_space<vmem>>, vector<2x1x8x8xf32>
    %8 = vector.shape_cast %7 : vector<2x1x8x8xf32> to vector<2x8x8xf32>
    %9 = vector.shape_cast %6 : vector<2x8x8xf32> to vector<2x1x8x8xf32>
    tpu.vector_store %arg2[%c0_10, %c0_11, %c0_12, %c0_13], %9 {strides = array<i32>} : memref<2x8x8x8xf32, #tpu.memory_space<vmem>>, vector<2x1x8x8xf32>,
    %10 = vector.extract_strided_slice %4 {offsets = [0, 2, 0, 0], sizes = [2, 3, 8, 8], strides = [1, 1, 1, 1]} : vector<2x18x8x8xf32> to vector<2x3x8x8xf32>
    %cst_14 = arith.constant dense<0xFF800000> : vector<2x8x8xf32>
    %11 = vector.multi_reduction <maximumf>, %10, %cst_14 [1] : vector<2x3x8x8xf32> to vector<2x8x8xf32>
    %c0_15 = arith.constant 0 : index
    %c1_16 = arith.constant 1 : index
    %c0_17 = arith.constant 0 : index
    %c0_18 = arith.constant 0 : index
    %12 = vector.load %arg2[%c0_15, %c1_16, %c0_17, %c0_18] : memref<2x8x8x8xf32, #tpu.memory_space<vmem>>, vector<2x1x8x8xf32>
    %13 = vector.shape_cast %12 : vector<2x1x8x8xf32> to vector<2x8x8xf32>
    %14 = vector.shape_cast %11 : vector<2x8x8xf32> to vector<2x1x8x8xf32>
    tpu.vector_store %arg2[%c0_15, %c1_16, %c0_17, %c0_18], %14 {strides = array<i32>} : memref<2x8x8x8xf32, #tpu.memory_space<vmem>>, vector<2x1x8x8xf32>,
    %15 = vector.extract_strided_slice %4 {offsets = [0, 4, 0, 0], sizes = [2, 3, 8, 8], strides = [1, 1, 1, 1]} : vector<2x18x8x8xf32> to vector<2x3x8x8xf32>
    %cst_19 = arith.constant dense<0xFF800000> : vector<2x8x8xf32>
    %16 = vector.multi_reduction <maximumf>, %15, %cst_19 [1] : vector<2x3x8x8xf32> to vector<2x8x8xf32>
    %c0_20 = arith.constant 0 : index
    %c2 = arith.constant 2 : index
    %c0_21 = arith.constant 0 : index
    %c0_22 = arith.constant 0 : index
    %17 = vector.load %arg2[%c0_20, %c2, %c0_21, %c0_22] : memref<2x8x8x8xf32, #tpu.memory_space<vmem>>, vector<2x1x8x8xf32>
    %18 = vector.shape_cast %17 : vector<2x1x8x8xf32> to vector<2x8x8xf32>
    %19 = vector.shape_cast %16 : vector<2x8x8xf32> to vector<2x1x8x8xf32>
    tpu.vector_store %arg2[%c0_20, %c2, %c0_21, %c0_22], %19 {strides = array<i32>} : memref<2x8x8x8xf32, #tpu.memory_space<vmem>>, vector<2x1x8x8xf32>,
    %20 = vector.extract_strided_slice %4 {offsets = [0, 6, 0, 0], sizes = [2, 3, 8, 8], strides = [1, 1, 1, 1]} : vector<2x18x8x8xf32> to vector<2x3x8x8xf32>
    %cst_23 = arith.constant dense<0xFF800000> : vector<2x8x8xf32>
    %21 = vector.multi_reduction <maximumf>, %20, %cst_23 [1] : vector<2x3x8x8xf32> to vector<2x8x8xf32>
    %c0_24 = arith.constant 0 : index
    %c3 = arith.constant 3 : index
    %c0_25 = arith.constant 0 : index
    %c0_26 = arith.constant 0 : index
    %22 = vector.load %arg2[%c0_24, %c3, %c0_25, %c0_26] : memref<2x8x8x8xf32, #tpu.memory_space<vmem>>, vector<2x1x8x8xf32>
    %23 = vector.shape_cast %22 : vector<2x1x8x8xf32> to vector<2x8x8xf32>
    %24 = vector.shape_cast %21 : vector<2x8x8xf32> to vector<2x1x8x8xf32>
    tpu.vector_store %arg2[%c0_24, %c3, %c0_25, %c0_26], %24 {strides = array<i32>} : memref<2x8x8x8xf32, #tpu.memory_space<vmem>>, vector<2x1x8x8xf32>,
    %25 = vector.extract_strided_slice %4 {offsets = [0, 8, 0, 0], sizes = [2, 3, 8, 8], strides = [1, 1, 1, 1]} : vector<2x18x8x8xf32> to vector<2x3x8x8xf32>
    %cst_27 = arith.constant dense<0xFF800000> : vector<2x8x8xf32>
    %26 = vector.multi_reduction <maximumf>, %25, %cst_27 [1] : vector<2x3x8x8xf32> to vector<2x8x8xf32>
    %c0_28 = arith.constant 0 : index
    %c4 = arith.constant 4 : index
    %c0_29 = arith.constant 0 : index
    %c0_30 = arith.constant 0 : index
    %27 = vector.load %arg2[%c0_28, %c4, %c0_29, %c0_30] : memref<2x8x8x8xf32, #tpu.memory_space<vmem>>, vector<2x1x8x8xf32>
    %28 = vector.shape_cast %27 : vector<2x1x8x8xf32> to vector<2x8x8xf32>
    %29 = vector.shape_cast %26 : vector<2x8x8xf32> to vector<2x1x8x8xf32>
    tpu.vector_store %arg2[%c0_28, %c4, %c0_29, %c0_30], %29 {strides = array<i32>} : memref<2x8x8x8xf32, #tpu.memory_space<vmem>>, vector<2x1x8x8xf32>,
    %30 = vector.extract_strided_slice %4 {offsets = [0, 10, 0, 0], sizes = [2, 3, 8, 8], strides = [1, 1, 1, 1]} : vector<2x18x8x8xf32> to vector<2x3x8x8xf32>
    %cst_31 = arith.constant dense<0xFF800000> : vector<2x8x8xf32>
    %31 = vector.multi_reduction <maximumf>, %30, %cst_31 [1] : vector<2x3x8x8xf32> to vector<2x8x8xf32>
    %c0_32 = arith.constant 0 : index
    %c5 = arith.constant 5 : index
    %c0_33 = arith.constant 0 : index
    %c0_34 = arith.constant 0 : index
    %32 = vector.load %arg2[%c0_32, %c5, %c0_33, %c0_34] : memref<2x8x8x8xf32, #tpu.memory_space<vmem>>, vector<2x1x8x8xf32>
    %33 = vector.shape_cast %32 : vector<2x1x8x8xf32> to vector<2x8x8xf32>
    %34 = vector.shape_cast %31 : vector<2x8x8xf32> to vector<2x1x8x8xf32>
    tpu.vector_store %arg2[%c0_32, %c5, %c0_33, %c0_34], %34 {strides = array<i32>} : memref<2x8x8x8xf32, #tpu.memory_space<vmem>>, vector<2x1x8x8xf32>,
    %35 = vector.extract_strided_slice %4 {offsets = [0, 12, 0, 0], sizes = [2, 3, 8, 8], strides = [1, 1, 1, 1]} : vector<2x18x8x8xf32> to vector<2x3x8x8xf32>
    %cst_35 = arith.constant dense<0xFF800000> : vector<2x8x8xf32>
    %36 = vector.multi_reduction <maximumf>, %35, %cst_35 [1] : vector<2x3x8x8xf32> to vector<2x8x8xf32>
    %c0_36 = arith.constant 0 : index
    %c6 = arith.constant 6 : index
    %c0_37 = arith.constant 0 : index
    %c0_38 = arith.constant 0 : index
    %37 = vector.load %arg2[%c0_36, %c6, %c0_37, %c0_38] : memref<2x8x8x8xf32, #tpu.memory_space<vmem>>, vector<2x1x8x8xf32>
    %38 = vector.shape_cast %37 : vector<2x1x8x8xf32> to vector<2x8x8xf32>
    %39 = vector.shape_cast %36 : vector<2x8x8xf32> to vector<2x1x8x8xf32>
    tpu.vector_store %arg2[%c0_36, %c6, %c0_37, %c0_38], %39 {strides = array<i32>} : memref<2x8x8x8xf32, #tpu.memory_space<vmem>>, vector<2x1x8x8xf32>,
    %40 = vector.extract_strided_slice %4 {offsets = [0, 14, 0, 0], sizes = [2, 3, 8, 8], strides = [1, 1, 1, 1]} : vector<2x18x8x8xf32> to vector<2x3x8x8xf32>
    %cst_39 = arith.constant dense<0xFF800000> : vector<2x8x8xf32>
    %41 = vector.multi_reduction <maximumf>, %40, %cst_39 [1] : vector<2x3x8x8xf32> to vector<2x8x8xf32>
    %c0_40 = arith.constant 0 : index
    %c7 = arith.constant 7 : index
    %c0_41 = arith.constant 0 : index
    %c0_42 = arith.constant 0 : index
    %42 = vector.load %arg2[%c0_40, %c7, %c0_41, %c0_42] : memref<2x8x8x8xf32, #tpu.memory_space<vmem>>, vector<2x1x8x8xf32>
    %43 = vector.shape_cast %42 : vector<2x1x8x8xf32> to vector<2x8x8xf32>
    %44 = vector.shape_cast %41 : vector<2x8x8xf32> to vector<2x1x8x8xf32>
    tpu.vector_store %arg2[%c0_40, %c7, %c0_41, %c0_42], %44 {strides = array<i32>} : memref<2x8x8x8xf32, #tpu.memory_space<vmem>>, vector<2x1x8x8xf32>,
    return
  }
}

module attributes {stable_mosaic.version = 11 : i64} {
  func.func @_lstm_kernel(%arg0: memref<16x16xf32, #tpu.memory_space<vmem>>, %arg1: memref<2x1xi32, #tpu.memory_space<vmem>>, %arg2: memref<16x128xf32, #tpu.memory_space<vmem>>, %arg3: memref<32x128xf32, #tpu.memory_space<vmem>>, %arg4: memref<1x128xf32, #tpu.memory_space<vmem>>, %arg5: memref<2x32xf32, #tpu.memory_space<vmem>>, %arg6: memref<16x128xf32, #tpu.memory_space<vmem>>) attributes {dimension_semantics = [], scalar_prefetch = 0 : i64, scratch_operands = 1 : i64, tpu.core_type = #tpu.core_type<tc>} {
    %c0 = arith.constant 0 : index
    %c0_0 = arith.constant 0 : index
    %0 = vector.load %arg0[%c0, %c0_0] : memref<16x16xf32, #tpu.memory_space<vmem>>, vector<16x16xf32>
    %c0_1 = arith.constant 0 : index
    %c0_2 = arith.constant 0 : index
    %1 = vector.load %arg2[%c0_1, %c0_2] : memref<16x128xf32, #tpu.memory_space<vmem>>, vector<16x128xf32>
    %cst = arith.constant dense<0.000000e+00> : vector<16x128xf32>
    %2 = tpu.matmul %0, %1, %cst {dimension_numbers = #tpu.dot_dimension_numbers<[1], [0], [0], [1], [0, 0, 1, 1], [], []>} : vector<16x16xf32>, vector<16x128xf32>, vector<16x128xf32> -> vector<16x128xf32>
    %c0_3 = arith.constant 0 : index
    %c0_4 = arith.constant 0 : index
    %3 = vector.load %arg4[%c0_3, %c0_4] : memref<1x128xf32, #tpu.memory_space<vmem>>, vector<1x128xf32>
    %4 = vector.broadcast %3 : vector<1x128xf32> to vector<16x128xf32>
    %5 = arith.addf %2, %4 : vector<16x128xf32>
    %c0_5 = arith.constant 0 : index
    %c0_6 = arith.constant 0 : index
    %6 = vector.load %arg6[%c0_5, %c0_6] : memref<16x128xf32, #tpu.memory_space<vmem>>, vector<16x128xf32>
    tpu.vector_store %arg6[%c0_5, %c0_6], %5 {strides = array<i32>} : memref<16x128xf32, #tpu.memory_space<vmem>>, vector<16x128xf32>,
    %c0_7 = arith.constant 0 : index
    %c0_8 = arith.constant 0 : index
    %7 = vector.load %arg3[%c0_7, %c0_8] : memref<32x128xf32, #tpu.memory_space<vmem>>, vector<32x128xf32>
    %c0_9 = arith.constant 0 : index
    %c0_10 = arith.constant 0 : index
    %8 = vector.load %arg1[%c0_9, %c0_10] : memref<2x1xi32, #tpu.memory_space<vmem>>, vector<2x1xi32>
    %9 = tpu.iota {dimensions = array<i32: 1>} : vector<2x128xi32>
    %c64_i32 = arith.constant 64 : i32
    %10 = vector.broadcast %c64_i32 : i32 to vector<2x128xi32>
    %11 = arith.cmpi sge, %9, %10 : vector<2x128xi32>
    %c96_i32 = arith.constant 96 : i32
    %12 = vector.broadcast %c96_i32 : i32 to vector<2x128xi32>
    %13 = arith.cmpi slt, %9, %12 : vector<2x128xi32>
    %14 = arith.andi %11, %13 : vector<2x128xi1>
    %cst_11 = arith.constant 0.000000e+00 : f32
    %15 = vector.broadcast %cst_11 : f32 to vector<2x32xf32>
    %cst_12 = arith.constant 0.000000e+00 : f32
    %16 = vector.broadcast %cst_12 : f32 to vector<2x32xf32>
    %c0_i32 = arith.constant 0 : i32
    %c2_i32 = arith.constant 2 : i32
    %17 = arith.muli %c0_i32, %c2_i32 : i32
    %18 = arith.index_cast %17 : i32 to index
    %c0_13 = arith.constant 0 : index
    %19 = vector.load %arg6[%18, %c0_13] : memref<16x128xf32, #tpu.memory_space<vmem>>, vector<2x128xf32>
    %cst_14 = arith.constant dense<0.000000e+00> : vector<2x128xf32>
    %20 = tpu.matmul %15, %7, %cst_14 {dimension_numbers = #tpu.dot_dimension_numbers<[1], [0], [0], [1], [0, 0, 1, 1], [], []>} : vector<2x32xf32>, vector<32x128xf32>, vector<2x128xf32> -> vector<2x128xf32>
    %21 = arith.addf %19, %20 : vector<2x128xf32>
    %22 = math.tanh %21 : vector<2x128xf32>
    %23 = arith.negf %21 : vector<2x128xf32>
    %24 = math.exp %23 : vector<2x128xf32>
    %cst_15 = arith.constant 1.000000e+00 : f32
    %25 = vector.broadcast %cst_15 : f32 to vector<2x128xf32>
    %26 = arith.addf %25, %24 : vector<2x128xf32>
    %27 = arith.divf %25, %26 : vector<2x128xf32>
    %28 = arith.select %14, %22, %27 : vector<2x128xi1>, vector<2x128xf32>
    %29 = vector.extract_strided_slice %28 {offsets = [0, 0], sizes = [2, 32], strides = [1, 1]} : vector<2x128xf32> to vector<2x32xf32>
    %30 = vector.extract_strided_slice %28 {offsets = [0, 32], sizes = [2, 32], strides = [1, 1]} : vector<2x128xf32> to vector<2x32xf32>
    %31 = vector.extract_strided_slice %28 {offsets = [0, 64], sizes = [2, 32], strides = [1, 1]} : vector<2x128xf32> to vector<2x32xf32>
    %32 = vector.extract_strided_slice %28 {offsets = [0, 96], sizes = [2, 32], strides = [1, 1]} : vector<2x128xf32> to vector<2x32xf32>
    %33 = arith.mulf %30, %16 : vector<2x32xf32>
    %34 = arith.mulf %29, %31 : vector<2x32xf32>
    %35 = arith.addf %33, %34 : vector<2x32xf32>
    %36 = math.tanh %35 : vector<2x32xf32>
    %37 = arith.mulf %32, %36 : vector<2x32xf32>
    %38 = vector.broadcast %c0_i32 : i32 to vector<2x1xi32>
    %39 = arith.cmpi slt, %38, %8 : vector<2x1xi32>
    %40 = vector.shape_cast %39 : vector<2x1xi1> to vector<2x1xi1>
    %41 = vector.broadcast %40 : vector<2x1xi1> to vector<2x32xi1>
    %42 = arith.select %41, %37, %15 : vector<2x32xi1>, vector<2x32xf32>
    %43 = vector.shape_cast %39 : vector<2x1xi1> to vector<2x1xi1>
    %44 = vector.broadcast %43 : vector<2x1xi1> to vector<2x32xi1>
    %45 = arith.select %44, %35, %16 : vector<2x32xi1>, vector<2x32xf32>
    %c1_i32 = arith.constant 1 : i32
    %c2_i32_16 = arith.constant 2 : i32
    %46 = arith.muli %c1_i32, %c2_i32_16 : i32
    %47 = arith.index_cast %46 : i32 to index
    %c0_17 = arith.constant 0 : index
    %48 = vector.load %arg6[%47, %c0_17] : memref<16x128xf32, #tpu.memory_space<vmem>>, vector<2x128xf32>
    %cst_18 = arith.constant dense<0.000000e+00> : vector<2x128xf32>
    %49 = tpu.matmul %42, %7, %cst_18 {dimension_numbers = #tpu.dot_dimension_numbers<[1], [0], [0], [1], [0, 0, 1, 1], [], []>} : vector<2x32xf32>, vector<32x128xf32>, vector<2x128xf32> -> vector<2x128xf32>
    %50 = arith.addf %48, %49 : vector<2x128xf32>
    %51 = math.tanh %50 : vector<2x128xf32>
    %52 = arith.negf %50 : vector<2x128xf32>
    %53 = math.exp %52 : vector<2x128xf32>
    %cst_19 = arith.constant 1.000000e+00 : f32
    %54 = vector.broadcast %cst_19 : f32 to vector<2x128xf32>
    %55 = arith.addf %54, %53 : vector<2x128xf32>
    %56 = arith.divf %54, %55 : vector<2x128xf32>
    %57 = arith.select %14, %51, %56 : vector<2x128xi1>, vector<2x128xf32>
    %58 = vector.extract_strided_slice %57 {offsets = [0, 0], sizes = [2, 32], strides = [1, 1]} : vector<2x128xf32> to vector<2x32xf32>
    %59 = vector.extract_strided_slice %57 {offsets = [0, 32], sizes = [2, 32], strides = [1, 1]} : vector<2x128xf32> to vector<2x32xf32>
    %60 = vector.extract_strided_slice %57 {offsets = [0, 64], sizes = [2, 32], strides = [1, 1]} : vector<2x128xf32> to vector<2x32xf32>
    %61 = vector.extract_strided_slice %57 {offsets = [0, 96], sizes = [2, 32], strides = [1, 1]} : vector<2x128xf32> to vector<2x32xf32>
    %62 = arith.mulf %59, %45 : vector<2x32xf32>
    %63 = arith.mulf %58, %60 : vector<2x32xf32>
    %64 = arith.addf %62, %63 : vector<2x32xf32>
    %65 = math.tanh %64 : vector<2x32xf32>
    %66 = arith.mulf %61, %65 : vector<2x32xf32>
    %67 = vector.broadcast %c1_i32 : i32 to vector<2x1xi32>
    %68 = arith.cmpi slt, %67, %8 : vector<2x1xi32>
    %69 = vector.shape_cast %68 : vector<2x1xi1> to vector<2x1xi1>
    %70 = vector.broadcast %69 : vector<2x1xi1> to vector<2x32xi1>
    %71 = arith.select %70, %66, %42 : vector<2x32xi1>, vector<2x32xf32>
    %72 = vector.shape_cast %68 : vector<2x1xi1> to vector<2x1xi1>
    %73 = vector.broadcast %72 : vector<2x1xi1> to vector<2x32xi1>
    %74 = arith.select %73, %64, %45 : vector<2x32xi1>, vector<2x32xf32>
    %c2_i32_20 = arith.constant 2 : i32
    %c2_i32_21 = arith.constant 2 : i32
    %75 = arith.muli %c2_i32_20, %c2_i32_21 : i32
    %76 = arith.index_cast %75 : i32 to index
    %c0_22 = arith.constant 0 : index
    %77 = vector.load %arg6[%76, %c0_22] : memref<16x128xf32, #tpu.memory_space<vmem>>, vector<2x128xf32>
    %cst_23 = arith.constant dense<0.000000e+00> : vector<2x128xf32>
    %78 = tpu.matmul %71, %7, %cst_23 {dimension_numbers = #tpu.dot_dimension_numbers<[1], [0], [0], [1], [0, 0, 1, 1], [], []>} : vector<2x32xf32>, vector<32x128xf32>, vector<2x128xf32> -> vector<2x128xf32>
    %79 = arith.addf %77, %78 : vector<2x128xf32>
    %80 = math.tanh %79 : vector<2x128xf32>
    %81 = arith.negf %79 : vector<2x128xf32>
    %82 = math.exp %81 : vector<2x128xf32>
    %cst_24 = arith.constant 1.000000e+00 : f32
    %83 = vector.broadcast %cst_24 : f32 to vector<2x128xf32>
    %84 = arith.addf %83, %82 : vector<2x128xf32>
    %85 = arith.divf %83, %84 : vector<2x128xf32>
    %86 = arith.select %14, %80, %85 : vector<2x128xi1>, vector<2x128xf32>
    %87 = vector.extract_strided_slice %86 {offsets = [0, 0], sizes = [2, 32], strides = [1, 1]} : vector<2x128xf32> to vector<2x32xf32>
    %88 = vector.extract_strided_slice %86 {offsets = [0, 32], sizes = [2, 32], strides = [1, 1]} : vector<2x128xf32> to vector<2x32xf32>
    %89 = vector.extract_strided_slice %86 {offsets = [0, 64], sizes = [2, 32], strides = [1, 1]} : vector<2x128xf32> to vector<2x32xf32>
    %90 = vector.extract_strided_slice %86 {offsets = [0, 96], sizes = [2, 32], strides = [1, 1]} : vector<2x128xf32> to vector<2x32xf32>
    %91 = arith.mulf %88, %74 : vector<2x32xf32>
    %92 = arith.mulf %87, %89 : vector<2x32xf32>
    %93 = arith.addf %91, %92 : vector<2x32xf32>
    %94 = math.tanh %93 : vector<2x32xf32>
    %95 = arith.mulf %90, %94 : vector<2x32xf32>
    %96 = vector.broadcast %c2_i32_20 : i32 to vector<2x1xi32>
    %97 = arith.cmpi slt, %96, %8 : vector<2x1xi32>
    %98 = vector.shape_cast %97 : vector<2x1xi1> to vector<2x1xi1>
    %99 = vector.broadcast %98 : vector<2x1xi1> to vector<2x32xi1>
    %100 = arith.select %99, %95, %71 : vector<2x32xi1>, vector<2x32xf32>
    %101 = vector.shape_cast %97 : vector<2x1xi1> to vector<2x1xi1>
    %102 = vector.broadcast %101 : vector<2x1xi1> to vector<2x32xi1>
    %103 = arith.select %102, %93, %74 : vector<2x32xi1>, vector<2x32xf32>
    %c3_i32 = arith.constant 3 : i32
    %c2_i32_25 = arith.constant 2 : i32
    %104 = arith.muli %c3_i32, %c2_i32_25 : i32
    %105 = arith.index_cast %104 : i32 to index
    %c0_26 = arith.constant 0 : index
    %106 = vector.load %arg6[%105, %c0_26] : memref<16x128xf32, #tpu.memory_space<vmem>>, vector<2x128xf32>
    %cst_27 = arith.constant dense<0.000000e+00> : vector<2x128xf32>
    %107 = tpu.matmul %100, %7, %cst_27 {dimension_numbers = #tpu.dot_dimension_numbers<[1], [0], [0], [1], [0, 0, 1, 1], [], []>} : vector<2x32xf32>, vector<32x128xf32>, vector<2x128xf32> -> vector<2x128xf32>
    %108 = arith.addf %106, %107 : vector<2x128xf32>
    %109 = math.tanh %108 : vector<2x128xf32>
    %110 = arith.negf %108 : vector<2x128xf32>
    %111 = math.exp %110 : vector<2x128xf32>
    %cst_28 = arith.constant 1.000000e+00 : f32
    %112 = vector.broadcast %cst_28 : f32 to vector<2x128xf32>
    %113 = arith.addf %112, %111 : vector<2x128xf32>
    %114 = arith.divf %112, %113 : vector<2x128xf32>
    %115 = arith.select %14, %109, %114 : vector<2x128xi1>, vector<2x128xf32>
    %116 = vector.extract_strided_slice %115 {offsets = [0, 0], sizes = [2, 32], strides = [1, 1]} : vector<2x128xf32> to vector<2x32xf32>
    %117 = vector.extract_strided_slice %115 {offsets = [0, 32], sizes = [2, 32], strides = [1, 1]} : vector<2x128xf32> to vector<2x32xf32>
    %118 = vector.extract_strided_slice %115 {offsets = [0, 64], sizes = [2, 32], strides = [1, 1]} : vector<2x128xf32> to vector<2x32xf32>
    %119 = vector.extract_strided_slice %115 {offsets = [0, 96], sizes = [2, 32], strides = [1, 1]} : vector<2x128xf32> to vector<2x32xf32>
    %120 = arith.mulf %117, %103 : vector<2x32xf32>
    %121 = arith.mulf %116, %118 : vector<2x32xf32>
    %122 = arith.addf %120, %121 : vector<2x32xf32>
    %123 = math.tanh %122 : vector<2x32xf32>
    %124 = arith.mulf %119, %123 : vector<2x32xf32>
    %125 = vector.broadcast %c3_i32 : i32 to vector<2x1xi32>
    %126 = arith.cmpi slt, %125, %8 : vector<2x1xi32>
    %127 = vector.shape_cast %126 : vector<2x1xi1> to vector<2x1xi1>
    %128 = vector.broadcast %127 : vector<2x1xi1> to vector<2x32xi1>
    %129 = arith.select %128, %124, %100 : vector<2x32xi1>, vector<2x32xf32>
    %130 = vector.shape_cast %126 : vector<2x1xi1> to vector<2x1xi1>
    %131 = vector.broadcast %130 : vector<2x1xi1> to vector<2x32xi1>
    %132 = arith.select %131, %122, %103 : vector<2x32xi1>, vector<2x32xf32>
    %c4_i32 = arith.constant 4 : i32
    %c2_i32_29 = arith.constant 2 : i32
    %133 = arith.muli %c4_i32, %c2_i32_29 : i32
    %134 = arith.index_cast %133 : i32 to index
    %c0_30 = arith.constant 0 : index
    %135 = vector.load %arg6[%134, %c0_30] : memref<16x128xf32, #tpu.memory_space<vmem>>, vector<2x128xf32>
    %cst_31 = arith.constant dense<0.000000e+00> : vector<2x128xf32>
    %136 = tpu.matmul %129, %7, %cst_31 {dimension_numbers = #tpu.dot_dimension_numbers<[1], [0], [0], [1], [0, 0, 1, 1], [], []>} : vector<2x32xf32>, vector<32x128xf32>, vector<2x128xf32> -> vector<2x128xf32>
    %137 = arith.addf %135, %136 : vector<2x128xf32>
    %138 = math.tanh %137 : vector<2x128xf32>
    %139 = arith.negf %137 : vector<2x128xf32>
    %140 = math.exp %139 : vector<2x128xf32>
    %cst_32 = arith.constant 1.000000e+00 : f32
    %141 = vector.broadcast %cst_32 : f32 to vector<2x128xf32>
    %142 = arith.addf %141, %140 : vector<2x128xf32>
    %143 = arith.divf %141, %142 : vector<2x128xf32>
    %144 = arith.select %14, %138, %143 : vector<2x128xi1>, vector<2x128xf32>
    %145 = vector.extract_strided_slice %144 {offsets = [0, 0], sizes = [2, 32], strides = [1, 1]} : vector<2x128xf32> to vector<2x32xf32>
    %146 = vector.extract_strided_slice %144 {offsets = [0, 32], sizes = [2, 32], strides = [1, 1]} : vector<2x128xf32> to vector<2x32xf32>
    %147 = vector.extract_strided_slice %144 {offsets = [0, 64], sizes = [2, 32], strides = [1, 1]} : vector<2x128xf32> to vector<2x32xf32>
    %148 = vector.extract_strided_slice %144 {offsets = [0, 96], sizes = [2, 32], strides = [1, 1]} : vector<2x128xf32> to vector<2x32xf32>
    %149 = arith.mulf %146, %132 : vector<2x32xf32>
    %150 = arith.mulf %145, %147 : vector<2x32xf32>
    %151 = arith.addf %149, %150 : vector<2x32xf32>
    %152 = math.tanh %151 : vector<2x32xf32>
    %153 = arith.mulf %148, %152 : vector<2x32xf32>
    %154 = vector.broadcast %c4_i32 : i32 to vector<2x1xi32>
    %155 = arith.cmpi slt, %154, %8 : vector<2x1xi32>
    %156 = vector.shape_cast %155 : vector<2x1xi1> to vector<2x1xi1>
    %157 = vector.broadcast %156 : vector<2x1xi1> to vector<2x32xi1>
    %158 = arith.select %157, %153, %129 : vector<2x32xi1>, vector<2x32xf32>
    %159 = vector.shape_cast %155 : vector<2x1xi1> to vector<2x1xi1>
    %160 = vector.broadcast %159 : vector<2x1xi1> to vector<2x32xi1>
    %161 = arith.select %160, %151, %132 : vector<2x32xi1>, vector<2x32xf32>
    %c5_i32 = arith.constant 5 : i32
    %c2_i32_33 = arith.constant 2 : i32
    %162 = arith.muli %c5_i32, %c2_i32_33 : i32
    %163 = arith.index_cast %162 : i32 to index
    %c0_34 = arith.constant 0 : index
    %164 = vector.load %arg6[%163, %c0_34] : memref<16x128xf32, #tpu.memory_space<vmem>>, vector<2x128xf32>
    %cst_35 = arith.constant dense<0.000000e+00> : vector<2x128xf32>
    %165 = tpu.matmul %158, %7, %cst_35 {dimension_numbers = #tpu.dot_dimension_numbers<[1], [0], [0], [1], [0, 0, 1, 1], [], []>} : vector<2x32xf32>, vector<32x128xf32>, vector<2x128xf32> -> vector<2x128xf32>
    %166 = arith.addf %164, %165 : vector<2x128xf32>
    %167 = math.tanh %166 : vector<2x128xf32>
    %168 = arith.negf %166 : vector<2x128xf32>
    %169 = math.exp %168 : vector<2x128xf32>
    %cst_36 = arith.constant 1.000000e+00 : f32
    %170 = vector.broadcast %cst_36 : f32 to vector<2x128xf32>
    %171 = arith.addf %170, %169 : vector<2x128xf32>
    %172 = arith.divf %170, %171 : vector<2x128xf32>
    %173 = arith.select %14, %167, %172 : vector<2x128xi1>, vector<2x128xf32>
    %174 = vector.extract_strided_slice %173 {offsets = [0, 0], sizes = [2, 32], strides = [1, 1]} : vector<2x128xf32> to vector<2x32xf32>
    %175 = vector.extract_strided_slice %173 {offsets = [0, 32], sizes = [2, 32], strides = [1, 1]} : vector<2x128xf32> to vector<2x32xf32>
    %176 = vector.extract_strided_slice %173 {offsets = [0, 64], sizes = [2, 32], strides = [1, 1]} : vector<2x128xf32> to vector<2x32xf32>
    %177 = vector.extract_strided_slice %173 {offsets = [0, 96], sizes = [2, 32], strides = [1, 1]} : vector<2x128xf32> to vector<2x32xf32>
    %178 = arith.mulf %175, %161 : vector<2x32xf32>
    %179 = arith.mulf %174, %176 : vector<2x32xf32>
    %180 = arith.addf %178, %179 : vector<2x32xf32>
    %181 = math.tanh %180 : vector<2x32xf32>
    %182 = arith.mulf %177, %181 : vector<2x32xf32>
    %183 = vector.broadcast %c5_i32 : i32 to vector<2x1xi32>
    %184 = arith.cmpi slt, %183, %8 : vector<2x1xi32>
    %185 = vector.shape_cast %184 : vector<2x1xi1> to vector<2x1xi1>
    %186 = vector.broadcast %185 : vector<2x1xi1> to vector<2x32xi1>
    %187 = arith.select %186, %182, %158 : vector<2x32xi1>, vector<2x32xf32>
    %188 = vector.shape_cast %184 : vector<2x1xi1> to vector<2x1xi1>
    %189 = vector.broadcast %188 : vector<2x1xi1> to vector<2x32xi1>
    %190 = arith.select %189, %180, %161 : vector<2x32xi1>, vector<2x32xf32>
    %c6_i32 = arith.constant 6 : i32
    %c2_i32_37 = arith.constant 2 : i32
    %191 = arith.muli %c6_i32, %c2_i32_37 : i32
    %192 = arith.index_cast %191 : i32 to index
    %c0_38 = arith.constant 0 : index
    %193 = vector.load %arg6[%192, %c0_38] : memref<16x128xf32, #tpu.memory_space<vmem>>, vector<2x128xf32>
    %cst_39 = arith.constant dense<0.000000e+00> : vector<2x128xf32>
    %194 = tpu.matmul %187, %7, %cst_39 {dimension_numbers = #tpu.dot_dimension_numbers<[1], [0], [0], [1], [0, 0, 1, 1], [], []>} : vector<2x32xf32>, vector<32x128xf32>, vector<2x128xf32> -> vector<2x128xf32>
    %195 = arith.addf %193, %194 : vector<2x128xf32>
    %196 = math.tanh %195 : vector<2x128xf32>
    %197 = arith.negf %195 : vector<2x128xf32>
    %198 = math.exp %197 : vector<2x128xf32>
    %cst_40 = arith.constant 1.000000e+00 : f32
    %199 = vector.broadcast %cst_40 : f32 to vector<2x128xf32>
    %200 = arith.addf %199, %198 : vector<2x128xf32>
    %201 = arith.divf %199, %200 : vector<2x128xf32>
    %202 = arith.select %14, %196, %201 : vector<2x128xi1>, vector<2x128xf32>
    %203 = vector.extract_strided_slice %202 {offsets = [0, 0], sizes = [2, 32], strides = [1, 1]} : vector<2x128xf32> to vector<2x32xf32>
    %204 = vector.extract_strided_slice %202 {offsets = [0, 32], sizes = [2, 32], strides = [1, 1]} : vector<2x128xf32> to vector<2x32xf32>
    %205 = vector.extract_strided_slice %202 {offsets = [0, 64], sizes = [2, 32], strides = [1, 1]} : vector<2x128xf32> to vector<2x32xf32>
    %206 = vector.extract_strided_slice %202 {offsets = [0, 96], sizes = [2, 32], strides = [1, 1]} : vector<2x128xf32> to vector<2x32xf32>
    %207 = arith.mulf %204, %190 : vector<2x32xf32>
    %208 = arith.mulf %203, %205 : vector<2x32xf32>
    %209 = arith.addf %207, %208 : vector<2x32xf32>
    %210 = math.tanh %209 : vector<2x32xf32>
    %211 = arith.mulf %206, %210 : vector<2x32xf32>
    %212 = vector.broadcast %c6_i32 : i32 to vector<2x1xi32>
    %213 = arith.cmpi slt, %212, %8 : vector<2x1xi32>
    %214 = vector.shape_cast %213 : vector<2x1xi1> to vector<2x1xi1>
    %215 = vector.broadcast %214 : vector<2x1xi1> to vector<2x32xi1>
    %216 = arith.select %215, %211, %187 : vector<2x32xi1>, vector<2x32xf32>
    %217 = vector.shape_cast %213 : vector<2x1xi1> to vector<2x1xi1>
    %218 = vector.broadcast %217 : vector<2x1xi1> to vector<2x32xi1>
    %219 = arith.select %218, %209, %190 : vector<2x32xi1>, vector<2x32xf32>
    %c7_i32 = arith.constant 7 : i32
    %c2_i32_41 = arith.constant 2 : i32
    %220 = arith.muli %c7_i32, %c2_i32_41 : i32
    %221 = arith.index_cast %220 : i32 to index
    %c0_42 = arith.constant 0 : index
    %222 = vector.load %arg6[%221, %c0_42] : memref<16x128xf32, #tpu.memory_space<vmem>>, vector<2x128xf32>
    %cst_43 = arith.constant dense<0.000000e+00> : vector<2x128xf32>
    %223 = tpu.matmul %216, %7, %cst_43 {dimension_numbers = #tpu.dot_dimension_numbers<[1], [0], [0], [1], [0, 0, 1, 1], [], []>} : vector<2x32xf32>, vector<32x128xf32>, vector<2x128xf32> -> vector<2x128xf32>
    %224 = arith.addf %222, %223 : vector<2x128xf32>
    %225 = math.tanh %224 : vector<2x128xf32>
    %226 = arith.negf %224 : vector<2x128xf32>
    %227 = math.exp %226 : vector<2x128xf32>
    %cst_44 = arith.constant 1.000000e+00 : f32
    %228 = vector.broadcast %cst_44 : f32 to vector<2x128xf32>
    %229 = arith.addf %228, %227 : vector<2x128xf32>
    %230 = arith.divf %228, %229 : vector<2x128xf32>
    %231 = arith.select %14, %225, %230 : vector<2x128xi1>, vector<2x128xf32>
    %232 = vector.extract_strided_slice %231 {offsets = [0, 0], sizes = [2, 32], strides = [1, 1]} : vector<2x128xf32> to vector<2x32xf32>
    %233 = vector.extract_strided_slice %231 {offsets = [0, 32], sizes = [2, 32], strides = [1, 1]} : vector<2x128xf32> to vector<2x32xf32>
    %234 = vector.extract_strided_slice %231 {offsets = [0, 64], sizes = [2, 32], strides = [1, 1]} : vector<2x128xf32> to vector<2x32xf32>
    %235 = vector.extract_strided_slice %231 {offsets = [0, 96], sizes = [2, 32], strides = [1, 1]} : vector<2x128xf32> to vector<2x32xf32>
    %236 = arith.mulf %233, %219 : vector<2x32xf32>
    %237 = arith.mulf %232, %234 : vector<2x32xf32>
    %238 = arith.addf %236, %237 : vector<2x32xf32>
    %239 = math.tanh %238 : vector<2x32xf32>
    %240 = arith.mulf %235, %239 : vector<2x32xf32>
    %241 = vector.broadcast %c7_i32 : i32 to vector<2x1xi32>
    %242 = arith.cmpi slt, %241, %8 : vector<2x1xi32>
    %243 = vector.shape_cast %242 : vector<2x1xi1> to vector<2x1xi1>
    %244 = vector.broadcast %243 : vector<2x1xi1> to vector<2x32xi1>
    %245 = arith.select %244, %240, %216 : vector<2x32xi1>, vector<2x32xf32>
    %246 = vector.shape_cast %242 : vector<2x1xi1> to vector<2x1xi1>
    %247 = vector.broadcast %246 : vector<2x1xi1> to vector<2x32xi1>
    %248 = arith.select %247, %238, %219 : vector<2x32xi1>, vector<2x32xf32>
    %c8_i32 = arith.constant 8 : i32
    %c0_45 = arith.constant 0 : index
    %c0_46 = arith.constant 0 : index
    %249 = vector.load %arg5[%c0_45, %c0_46] : memref<2x32xf32, #tpu.memory_space<vmem>>, vector<2x32xf32>
    tpu.vector_store %arg5[%c0_45, %c0_46], %248 {strides = array<i32>} : memref<2x32xf32, #tpu.memory_space<vmem>>, vector<2x32xf32>,
    return
  }
}

module attributes {stable_mosaic.version = 11 : i64} {
  func.func @_ques_side_kernel(%arg0: memref<2x32xf32, #tpu.memory_space<vmem>>, %arg1: memref<1x32xf32, #tpu.memory_space<vmem>>, %arg2: memref<1x32xf32, #tpu.memory_space<vmem>>, %arg3: memref<32x32xbf16, #tpu.memory_space<vmem>>, %arg4: memref<1x32xf32, #tpu.memory_space<vmem>>, %arg5: memref<2x32xf32, #tpu.memory_space<vmem>>) attributes {dimension_semantics = [], scalar_prefetch = 0 : i64, scratch_operands = 0 : i64, tpu.core_type = #tpu.core_type<tc>} {
    %c0 = arith.constant 0 : index
    %c0_0 = arith.constant 0 : index
    %0 = vector.load %arg0[%c0, %c0_0] : memref<2x32xf32, #tpu.memory_space<vmem>>, vector<2x32xf32>
    %cst = arith.constant dense<0.000000e+00> : vector<32xf32>
    %1 = vector.multi_reduction <add>, %0, %cst [0] : vector<2x32xf32> to vector<32xf32>
    %2 = vector.shape_cast %1 : vector<32xf32> to vector<1x32xf32>
    %cst_1 = arith.constant 2.000000e+00 : f32
    %3 = vector.broadcast %cst_1 : f32 to vector<1x32xf32>
    %4 = arith.divf %2, %3 : vector<1x32xf32>
    %5 = vector.broadcast %4 : vector<1x32xf32> to vector<2x32xf32>
    %6 = arith.subf %0, %5 : vector<2x32xf32>
    %7 = arith.mulf %6, %6 : vector<2x32xf32>
    %cst_2 = arith.constant dense<0.000000e+00> : vector<32xf32>
    %8 = vector.multi_reduction <add>, %7, %cst_2 [0] : vector<2x32xf32> to vector<32xf32>
    %9 = vector.shape_cast %8 : vector<32xf32> to vector<1x32xf32>
    %cst_3 = arith.constant 2.000000e+00 : f32
    %10 = vector.broadcast %cst_3 : f32 to vector<1x32xf32>
    %11 = arith.divf %9, %10 : vector<1x32xf32>
    %12 = vector.broadcast %4 : vector<1x32xf32> to vector<2x32xf32>
    %13 = arith.subf %0, %12 : vector<2x32xf32>
    %cst_4 = arith.constant 9.99999974E-6 : f32
    %14 = vector.broadcast %cst_4 : f32 to vector<1x32xf32>
    %15 = arith.addf %11, %14 : vector<1x32xf32>
    %16 = math.rsqrt %15 : vector<1x32xf32>
    %17 = vector.broadcast %16 : vector<1x32xf32> to vector<2x32xf32>
    %18 = arith.mulf %13, %17 : vector<2x32xf32>
    %c0_5 = arith.constant 0 : index
    %c0_6 = arith.constant 0 : index
    %19 = vector.load %arg1[%c0_5, %c0_6] : memref<1x32xf32, #tpu.memory_space<vmem>>, vector<1x32xf32>
    %20 = vector.broadcast %19 : vector<1x32xf32> to vector<2x32xf32>
    %21 = arith.mulf %18, %20 : vector<2x32xf32>
    %c0_7 = arith.constant 0 : index
    %c0_8 = arith.constant 0 : index
    %22 = vector.load %arg2[%c0_7, %c0_8] : memref<1x32xf32, #tpu.memory_space<vmem>>, vector<1x32xf32>
    %23 = vector.broadcast %22 : vector<1x32xf32> to vector<2x32xf32>
    %24 = arith.addf %21, %23 : vector<2x32xf32>
    %25 = arith.truncf %24 : vector<2x32xf32> to vector<2x32xbf16>
    %c0_9 = arith.constant 0 : index
    %c0_10 = arith.constant 0 : index
    %26 = vector.load %arg3[%c0_9, %c0_10] : memref<32x32xbf16, #tpu.memory_space<vmem>>, vector<32x32xbf16>
    %cst_11 = arith.constant dense<0.000000e+00> : vector<2x32xf32>
    %27 = tpu.matmul %25, %26, %cst_11 {dimension_numbers = #tpu.dot_dimension_numbers<[1], [0], [0], [1], [0, 0, 1, 1], [], []>} : vector<2x32xbf16>, vector<32x32xbf16>, vector<2x32xf32> -> vector<2x32xf32>
    %c0_12 = arith.constant 0 : index
    %c0_13 = arith.constant 0 : index
    %28 = vector.load %arg4[%c0_12, %c0_13] : memref<1x32xf32, #tpu.memory_space<vmem>>, vector<1x32xf32>
    %29 = vector.broadcast %28 : vector<1x32xf32> to vector<2x32xf32>
    %30 = arith.addf %27, %29 : vector<2x32xf32>
    %c0_14 = arith.constant 0 : index
    %c0_15 = arith.constant 0 : index
    %31 = vector.load %arg5[%c0_14, %c0_15] : memref<2x32xf32, #tpu.memory_space<vmem>>, vector<2x32xf32>
    tpu.vector_store %arg5[%c0_14, %c0_15], %30 {strides = array<i32>} : memref<2x32xf32, #tpu.memory_space<vmem>>, vector<2x32xf32>,
    return
  }
}

module attributes {stable_mosaic.version = 11 : i64} {
  func.func @_bimodal_kernel(%arg0: i32, %arg1: i32, %arg2: memref<1x16x32xf32, #tpu.memory_space<vmem>>, %arg3: memref<1x32xf32, #tpu.memory_space<vmem>>, %arg4: memref<1x32xf32, #tpu.memory_space<vmem>>, %arg5: memref<1x1x128xf32, #tpu.memory_space<vmem>>, %arg6: memref<32x128xbf16, #tpu.memory_space<vmem>>, %arg7: memref<128x128xbf16, #tpu.memory_space<vmem>>, %arg8: memref<1x128xf32, #tpu.memory_space<vmem>>, %arg9: memref<128x128xbf16, #tpu.memory_space<vmem>>, %arg10: memref<1x128xf32, #tpu.memory_space<vmem>>, %arg11: memref<128x128xbf16, #tpu.memory_space<vmem>>, %arg12: memref<1x128xf32, #tpu.memory_space<vmem>>, %arg13: memref<1x16x128xf32, #tpu.memory_space<vmem>>) attributes {dimension_semantics = [#tpu.dimension_semantics<parallel>, #tpu.dimension_semantics<parallel>], iteration_bounds = array<i64: 2, 1>, scalar_prefetch = 0 : i64, scratch_operands = 0 : i64, tpu.core_type = #tpu.core_type<tc>, window_params = [{transform_indices = @transform_0, window_bounds = array<i64: 1, 16, 32>}, {pipeline_mode = #tpu.pipeline_mode<synchronous>, transform_indices = @transform_1, window_bounds = array<i64: 1, 32>}, {pipeline_mode = #tpu.pipeline_mode<synchronous>, transform_indices = @transform_2, window_bounds = array<i64: 1, 32>}, {transform_indices = @transform_3, window_bounds = array<i64: 1, 1, 128>}, {pipeline_mode = #tpu.pipeline_mode<synchronous>, transform_indices = @transform_4, window_bounds = array<i64: 32, 128>}, {pipeline_mode = #tpu.pipeline_mode<synchronous>, transform_indices = @transform_5, window_bounds = array<i64: 128, 128>}, {pipeline_mode = #tpu.pipeline_mode<synchronous>, transform_indices = @transform_6, window_bounds = array<i64: 1, 128>}, {pipeline_mode = #tpu.pipeline_mode<synchronous>, transform_indices = @transform_7, window_bounds = array<i64: 128, 128>}, {pipeline_mode = #tpu.pipeline_mode<synchronous>, transform_indices = @transform_8, window_bounds = array<i64: 1, 128>}, {pipeline_mode = #tpu.pipeline_mode<synchronous>, transform_indices = @transform_9, window_bounds = array<i64: 128, 128>}, {pipeline_mode = #tpu.pipeline_mode<synchronous>, transform_indices = @transform_10, window_bounds = array<i64: 1, 128>}, {transform_indices = @transform_11, window_bounds = array<i64: 1, 16, 128>}]} {
    %c0 = arith.constant 0 : index
    %c0_0 = arith.constant 0 : index
    %c0_1 = arith.constant 0 : index
    %0 = vector.load %arg2[%c0, %c0_0, %c0_1] : memref<1x16x32xf32, #tpu.memory_space<vmem>>, vector<1x16x32xf32>
    %1 = vector.shape_cast %0 : vector<1x16x32xf32> to vector<16x32xf32>
    %c0_2 = arith.constant 0 : index
    %c0_3 = arith.constant 0 : index
    %2 = vector.load %arg3[%c0_2, %c0_3] : memref<1x32xf32, #tpu.memory_space<vmem>>, vector<1x32xf32>
    %3 = vector.broadcast %2 : vector<1x32xf32> to vector<16x32xf32>
    %4 = arith.mulf %1, %3 : vector<16x32xf32>
    %c0_4 = arith.constant 0 : index
    %c0_5 = arith.constant 0 : index
    %5 = vector.load %arg4[%c0_4, %c0_5] : memref<1x32xf32, #tpu.memory_space<vmem>>, vector<1x32xf32>
    %6 = vector.broadcast %5 : vector<1x32xf32> to vector<16x32xf32>
    %7 = arith.addf %4, %6 : vector<16x32xf32>
    %8 = arith.truncf %7 : vector<16x32xf32> to vector<16x32xbf16>
    %c0_6 = arith.constant 0 : index
    %c0_7 = arith.constant 0 : index
    %9 = vector.load %arg6[%c0_6, %c0_7] : memref<32x128xbf16, #tpu.memory_space<vmem>>, vector<32x128xbf16>
    %cst = arith.constant dense<0.000000e+00> : vector<16x128xf32>
    %10 = tpu.matmul %8, %9, %cst {dimension_numbers = #tpu.dot_dimension_numbers<[1], [0], [0], [1], [0, 0, 1, 1], [], []>} : vector<16x32xbf16>, vector<32x128xbf16>, vector<16x128xf32> -> vector<16x128xf32>
    %c0_8 = arith.constant 0 : index
    %c0_9 = arith.constant 0 : index
    %c0_10 = arith.constant 0 : index
    %11 = vector.load %arg5[%c0_8, %c0_9, %c0_10] : memref<1x1x128xf32, #tpu.memory_space<vmem>>, vector<1x1x128xf32>
    %12 = vector.shape_cast %11 : vector<1x1x128xf32> to vector<1x128xf32>
    %13 = vector.broadcast %12 : vector<1x128xf32> to vector<16x128xf32>
    %14 = arith.addf %10, %13 : vector<16x128xf32>
    %cst_11 = arith.constant 0.000000e+00 : f32
    %15 = vector.broadcast %cst_11 : f32 to vector<16x128xf32>
    %16 = arith.maximumf %14, %15 : vector<16x128xf32>
    %17 = arith.truncf %16 : vector<16x128xf32> to vector<16x128xbf16>
    %c0_12 = arith.constant 0 : index
    %c0_13 = arith.constant 0 : index
    %18 = vector.load %arg7[%c0_12, %c0_13] : memref<128x128xbf16, #tpu.memory_space<vmem>>, vector<128x128xbf16>
    %cst_14 = arith.constant dense<0.000000e+00> : vector<16x128xf32>
    %19 = tpu.matmul %17, %18, %cst_14 {dimension_numbers = #tpu.dot_dimension_numbers<[1], [0], [0], [1], [0, 0, 1, 1], [], []>} : vector<16x128xbf16>, vector<128x128xbf16>, vector<16x128xf32> -> vector<16x128xf32>
    %c0_15 = arith.constant 0 : index
    %c0_16 = arith.constant 0 : index
    %20 = vector.load %arg8[%c0_15, %c0_16] : memref<1x128xf32, #tpu.memory_space<vmem>>, vector<1x128xf32>
    %21 = vector.broadcast %20 : vector<1x128xf32> to vector<16x128xf32>
    %22 = arith.addf %19, %21 : vector<16x128xf32>
    %cst_17 = arith.constant 0.000000e+00 : f32
    %23 = vector.broadcast %cst_17 : f32 to vector<16x128xf32>
    %24 = arith.maximumf %22, %23 : vector<16x128xf32>
    %25 = arith.truncf %24 : vector<16x128xf32> to vector<16x128xbf16>
    %c0_18 = arith.constant 0 : index
    %c0_19 = arith.constant 0 : index
    %26 = vector.load %arg9[%c0_18, %c0_19] : memref<128x128xbf16, #tpu.memory_space<vmem>>, vector<128x128xbf16>
    %cst_20 = arith.constant dense<0.000000e+00> : vector<16x128xf32>
    %27 = tpu.matmul %25, %26, %cst_20 {dimension_numbers = #tpu.dot_dimension_numbers<[1], [0], [0], [1], [0, 0, 1, 1], [], []>} : vector<16x128xbf16>, vector<128x128xbf16>, vector<16x128xf32> -> vector<16x128xf32>
    %c0_21 = arith.constant 0 : index
    %c0_22 = arith.constant 0 : index
    %28 = vector.load %arg10[%c0_21, %c0_22] : memref<1x128xf32, #tpu.memory_space<vmem>>, vector<1x128xf32>
    %29 = vector.broadcast %28 : vector<1x128xf32> to vector<16x128xf32>
    %30 = arith.addf %27, %29 : vector<16x128xf32>
    %cst_23 = arith.constant 0.000000e+00 : f32
    %31 = vector.broadcast %cst_23 : f32 to vector<16x128xf32>
    %32 = arith.maximumf %30, %31 : vector<16x128xf32>
    %33 = arith.truncf %32 : vector<16x128xf32> to vector<16x128xbf16>
    %c0_24 = arith.constant 0 : index
    %c0_25 = arith.constant 0 : index
    %34 = vector.load %arg11[%c0_24, %c0_25] : memref<128x128xbf16, #tpu.memory_space<vmem>>, vector<128x128xbf16>
    %cst_26 = arith.constant dense<0.000000e+00> : vector<16x128xf32>
    %35 = tpu.matmul %33, %34, %cst_26 {dimension_numbers = #tpu.dot_dimension_numbers<[1], [0], [0], [1], [0, 0, 1, 1], [], []>} : vector<16x128xbf16>, vector<128x128xbf16>, vector<16x128xf32> -> vector<16x128xf32>
    %c0_27 = arith.constant 0 : index
    %c0_28 = arith.constant 0 : index
    %36 = vector.load %arg12[%c0_27, %c0_28] : memref<1x128xf32, #tpu.memory_space<vmem>>, vector<1x128xf32>
    %37 = vector.broadcast %36 : vector<1x128xf32> to vector<16x128xf32>
    %38 = arith.addf %35, %37 : vector<16x128xf32>
    %cst_29 = arith.constant 0.000000e+00 : f32
    %39 = vector.broadcast %cst_29 : f32 to vector<16x128xf32>
    %40 = arith.maximumf %38, %39 : vector<16x128xf32>
    %c0_30 = arith.constant 0 : index
    %c0_31 = arith.constant 0 : index
    %c0_32 = arith.constant 0 : index
    %41 = vector.load %arg13[%c0_30, %c0_31, %c0_32] : memref<1x16x128xf32, #tpu.memory_space<vmem>>, vector<1x16x128xf32>
    %42 = vector.shape_cast %41 : vector<1x16x128xf32> to vector<16x128xf32>
    %43 = vector.shape_cast %40 : vector<16x128xf32> to vector<1x16x128xf32>
    tpu.vector_store %arg13[%c0_30, %c0_31, %c0_32], %43 {strides = array<i32>} : memref<1x16x128xf32, #tpu.memory_space<vmem>>, vector<1x16x128xf32>,
    return
  }
  func.func @transform_0(%arg0: i32, %arg1: i32) -> (i32, i32, i32) {
    %c0_i32 = arith.constant 0 : i32
    %c0_i32_0 = arith.constant 0 : i32
    return %arg0, %arg1, %c0_i32 : i32, i32, i32
  }
  func.func @transform_1(%arg0: i32, %arg1: i32) -> (i32, i32) {
    %c0_i32 = arith.constant 0 : i32
    %c0_i32_0 = arith.constant 0 : i32
    %c0_i32_1 = arith.constant 0 : i32
    return %c0_i32, %c0_i32_0 : i32, i32
  }
  func.func @transform_2(%arg0: i32, %arg1: i32) -> (i32, i32) {
    %c0_i32 = arith.constant 0 : i32
    %c0_i32_0 = arith.constant 0 : i32
    %c0_i32_1 = arith.constant 0 : i32
    return %c0_i32, %c0_i32_0 : i32, i32
  }
  func.func @transform_3(%arg0: i32, %arg1: i32) -> (i32, i32, i32) {
    %c0_i32 = arith.constant 0 : i32
    %c0_i32_0 = arith.constant 0 : i32
    %c0_i32_1 = arith.constant 0 : i32
    return %arg0, %c0_i32, %c0_i32_0 : i32, i32, i32
  }
  func.func @transform_4(%arg0: i32, %arg1: i32) -> (i32, i32) {
    %c0_i32 = arith.constant 0 : i32
    %c0_i32_0 = arith.constant 0 : i32
    %c0_i32_1 = arith.constant 0 : i32
    return %c0_i32, %c0_i32_0 : i32, i32
  }
  func.func @transform_5(%arg0: i32, %arg1: i32) -> (i32, i32) {
    %c0_i32 = arith.constant 0 : i32
    %c0_i32_0 = arith.constant 0 : i32
    %c0_i32_1 = arith.constant 0 : i32
    return %c0_i32, %c0_i32_0 : i32, i32
  }
  func.func @transform_6(%arg0: i32, %arg1: i32) -> (i32, i32) {
    %c0_i32 = arith.constant 0 : i32
    %c0_i32_0 = arith.constant 0 : i32
    %c0_i32_1 = arith.constant 0 : i32
    return %c0_i32, %c0_i32_0 : i32, i32
  }
  func.func @transform_7(%arg0: i32, %arg1: i32) -> (i32, i32) {
    %c0_i32 = arith.constant 0 : i32
    %c0_i32_0 = arith.constant 0 : i32
    %c0_i32_1 = arith.constant 0 : i32
    return %c0_i32, %c0_i32_0 : i32, i32
  }
  func.func @transform_8(%arg0: i32, %arg1: i32) -> (i32, i32) {
    %c0_i32 = arith.constant 0 : i32
    %c0_i32_0 = arith.constant 0 : i32
    %c0_i32_1 = arith.constant 0 : i32
    return %c0_i32, %c0_i32_0 : i32, i32
  }
  func.func @transform_9(%arg0: i32, %arg1: i32) -> (i32, i32) {
    %c0_i32 = arith.constant 0 : i32
    %c0_i32_0 = arith.constant 0 : i32
    %c0_i32_1 = arith.constant 0 : i32
    return %c0_i32, %c0_i32_0 : i32, i32
  }
  func.func @transform_10(%arg0: i32, %arg1: i32) -> (i32, i32) {
    %c0_i32 = arith.constant 0 : i32
    %c0_i32_0 = arith.constant 0 : i32
    %c0_i32_1 = arith.constant 0 : i32
    return %c0_i32, %c0_i32_0 : i32, i32
  }
  func.func @transform_11(%arg0: i32, %arg1: i32) -> (i32, i32, i32) {
    %c0_i32 = arith.constant 0 : i32
    %c0_i32_0 = arith.constant 0 : i32
    return %arg0, %arg1, %c0_i32 : i32, i32, i32
  }
}

module attributes {stable_mosaic.version = 11 : i64} {
  func.func @_pwconv_relu_kernel(%arg0: i32, %arg1: memref<128x3xf32, #tpu.memory_space<vmem>>, %arg2: memref<3x24xbf16, #tpu.memory_space<vmem>>, %arg3: memref<1x24xf32, #tpu.memory_space<vmem>>, %arg4: memref<128x24xf32, #tpu.memory_space<vmem>>) attributes {dimension_semantics = [#tpu.dimension_semantics<parallel>], iteration_bounds = array<i64: 1>, scalar_prefetch = 0 : i64, scratch_operands = 0 : i64, tpu.core_type = #tpu.core_type<tc>, window_params = [{transform_indices = @transform_0, window_bounds = array<i64: 128, 3>}, {pipeline_mode = #tpu.pipeline_mode<synchronous>, transform_indices = @transform_1, window_bounds = array<i64: 3, 24>}, {pipeline_mode = #tpu.pipeline_mode<synchronous>, transform_indices = @transform_2, window_bounds = array<i64: 1, 24>}, {transform_indices = @transform_3, window_bounds = array<i64: 128, 24>}]} {
    %c0 = arith.constant 0 : index
    %c0_0 = arith.constant 0 : index
    %0 = vector.load %arg1[%c0, %c0_0] : memref<128x3xf32, #tpu.memory_space<vmem>>, vector<128x3xf32>
    %1 = arith.truncf %0 : vector<128x3xf32> to vector<128x3xbf16>
    %c0_1 = arith.constant 0 : index
    %c0_2 = arith.constant 0 : index
    %2 = vector.load %arg2[%c0_1, %c0_2] : memref<3x24xbf16, #tpu.memory_space<vmem>>, vector<3x24xbf16>
    %cst = arith.constant dense<0.000000e+00> : vector<128x24xf32>
    %3 = tpu.matmul %1, %2, %cst {dimension_numbers = #tpu.dot_dimension_numbers<[1], [0], [0], [1], [0, 0, 1, 1], [], []>} : vector<128x3xbf16>, vector<3x24xbf16>, vector<128x24xf32> -> vector<128x24xf32>
    %c0_3 = arith.constant 0 : index
    %c0_4 = arith.constant 0 : index
    %4 = vector.load %arg3[%c0_3, %c0_4] : memref<1x24xf32, #tpu.memory_space<vmem>>, vector<1x24xf32>
    %5 = vector.broadcast %4 : vector<1x24xf32> to vector<128x24xf32>
    %6 = arith.addf %3, %5 : vector<128x24xf32>
    %cst_5 = arith.constant 0.000000e+00 : f32
    %7 = vector.broadcast %cst_5 : f32 to vector<128x24xf32>
    %8 = arith.maximumf %6, %7 : vector<128x24xf32>
    %c0_6 = arith.constant 0 : index
    %c0_7 = arith.constant 0 : index
    %9 = vector.load %arg4[%c0_6, %c0_7] : memref<128x24xf32, #tpu.memory_space<vmem>>, vector<128x24xf32>
    tpu.vector_store %arg4[%c0_6, %c0_7], %8 {strides = array<i32>} : memref<128x24xf32, #tpu.memory_space<vmem>>, vector<128x24xf32>,
    return
  }
  func.func @transform_0(%arg0: i32) -> (i32, i32) {
    %c0_i32 = arith.constant 0 : i32
    %c0_i32_0 = arith.constant 0 : i32
    return %arg0, %c0_i32 : i32, i32
  }
  func.func @transform_1(%arg0: i32) -> (i32, i32) {
    %c0_i32 = arith.constant 0 : i32
    %c0_i32_0 = arith.constant 0 : i32
    %c0_i32_1 = arith.constant 0 : i32
    return %c0_i32, %c0_i32_0 : i32, i32
  }
  func.func @transform_2(%arg0: i32) -> (i32, i32) {
    %c0_i32 = arith.constant 0 : i32
    %c0_i32_0 = arith.constant 0 : i32
    %c0_i32_1 = arith.constant 0 : i32
    return %c0_i32, %c0_i32_0 : i32, i32
  }
  func.func @transform_3(%arg0: i32) -> (i32, i32) {
    %c0_i32 = arith.constant 0 : i32
    %c0_i32_0 = arith.constant 0 : i32
    return %arg0, %c0_i32 : i32, i32
  }
}

module attributes {stable_mosaic.version = 11 : i64} {
  func.func @_bn_stats_kernel(%arg0: i32, %arg1: memref<32x96xf32, #tpu.memory_space<vmem>>, %arg2: memref<1x96xf32, #tpu.memory_space<vmem>>, %arg3: memref<1x96xf32, #tpu.memory_space<vmem>>) attributes {dimension_semantics = [#tpu.dimension_semantics<arbitrary>], iteration_bounds = array<i64: 1>, scalar_prefetch = 0 : i64, scratch_operands = 0 : i64, tpu.core_type = #tpu.core_type<tc>, window_params = [{transform_indices = @transform_0, window_bounds = array<i64: 32, 96>}, {pipeline_mode = #tpu.pipeline_mode<synchronous>, transform_indices = @transform_1, window_bounds = array<i64: 1, 96>}, {pipeline_mode = #tpu.pipeline_mode<synchronous>, transform_indices = @transform_2, window_bounds = array<i64: 1, 96>}]} {
    %c0_i32 = arith.constant 0 : i32
    %0 = arith.cmpi eq, %arg0, %c0_i32 : i32
    %1 = arith.extui %0 : i1 to i32
    %c0_i32_0 = arith.constant 0 : i32
    %2 = arith.cmpi ne, %1, %c0_i32_0 : i32
    scf.if %2 {
      %cst_11 = arith.constant 0.000000e+00 : f32
      %15 = vector.broadcast %cst_11 : f32 to vector<1x96xf32>
      %c0_12 = arith.constant 0 : index
      %c0_13 = arith.constant 0 : index
      %16 = vector.load %arg2[%c0_12, %c0_13] : memref<1x96xf32, #tpu.memory_space<vmem>>, vector<1x96xf32>
      tpu.vector_store %arg2[%c0_12, %c0_13], %15 {strides = array<i32>} : memref<1x96xf32, #tpu.memory_space<vmem>>, vector<1x96xf32>,
      %cst_14 = arith.constant 0.000000e+00 : f32
      %17 = vector.broadcast %cst_14 : f32 to vector<1x96xf32>
      %c0_15 = arith.constant 0 : index
      %c0_16 = arith.constant 0 : index
      %18 = vector.load %arg3[%c0_15, %c0_16] : memref<1x96xf32, #tpu.memory_space<vmem>>, vector<1x96xf32>
      tpu.vector_store %arg3[%c0_15, %c0_16], %17 {strides = array<i32>} : memref<1x96xf32, #tpu.memory_space<vmem>>, vector<1x96xf32>,
    } else {
    }
    %c0 = arith.constant 0 : index
    %c0_1 = arith.constant 0 : index
    %3 = vector.load %arg1[%c0, %c0_1] : memref<32x96xf32, #tpu.memory_space<vmem>>, vector<32x96xf32>
    %c0_2 = arith.constant 0 : index
    %c0_3 = arith.constant 0 : index
    %4 = vector.load %arg2[%c0_2, %c0_3] : memref<1x96xf32, #tpu.memory_space<vmem>>, vector<1x96xf32>
    %cst = arith.constant dense<0.000000e+00> : vector<96xf32>
    %5 = vector.multi_reduction <add>, %3, %cst [0] : vector<32x96xf32> to vector<96xf32>
    %6 = vector.shape_cast %5 : vector<96xf32> to vector<1x96xf32>
    %7 = arith.addf %4, %6 : vector<1x96xf32>
    %c0_4 = arith.constant 0 : index
    %c0_5 = arith.constant 0 : index
    %8 = vector.load %arg2[%c0_4, %c0_5] : memref<1x96xf32, #tpu.memory_space<vmem>>, vector<1x96xf32>
    tpu.vector_store %arg2[%c0_4, %c0_5], %7 {strides = array<i32>} : memref<1x96xf32, #tpu.memory_space<vmem>>, vector<1x96xf32>,
    %c0_6 = arith.constant 0 : index
    %c0_7 = arith.constant 0 : index
    %9 = vector.load %arg3[%c0_6, %c0_7] : memref<1x96xf32, #tpu.memory_space<vmem>>, vector<1x96xf32>
    %10 = arith.mulf %3, %3 : vector<32x96xf32>
    %cst_8 = arith.constant dense<0.000000e+00> : vector<96xf32>
    %11 = vector.multi_reduction <add>, %10, %cst_8 [0] : vector<32x96xf32> to vector<96xf32>
    %12 = vector.shape_cast %11 : vector<96xf32> to vector<1x96xf32>
    %13 = arith.addf %9, %12 : vector<1x96xf32>
    %c0_9 = arith.constant 0 : index
    %c0_10 = arith.constant 0 : index
    %14 = vector.load %arg3[%c0_9, %c0_10] : memref<1x96xf32, #tpu.memory_space<vmem>>, vector<1x96xf32>
    tpu.vector_store %arg3[%c0_9, %c0_10], %13 {strides = array<i32>} : memref<1x96xf32, #tpu.memory_space<vmem>>, vector<1x96xf32>,
    return
  }
  func.func @transform_0(%arg0: i32) -> (i32, i32) {
    %c0_i32 = arith.constant 0 : i32
    %c0_i32_0 = arith.constant 0 : i32
    return %arg0, %c0_i32 : i32, i32
  }
  func.func @transform_1(%arg0: i32) -> (i32, i32) {
    %c0_i32 = arith.constant 0 : i32
    %c0_i32_0 = arith.constant 0 : i32
    %c0_i32_1 = arith.constant 0 : i32
    return %c0_i32, %c0_i32_0 : i32, i32
  }
  func.func @transform_2(%arg0: i32) -> (i32, i32) {
    %c0_i32 = arith.constant 0 : i32
    %c0_i32_0 = arith.constant 0 : i32
    %c0_i32_1 = arith.constant 0 : i32
    return %c0_i32, %c0_i32_0 : i32, i32
  }
}

module attributes {stable_mosaic.version = 11 : i64} {
  func.func @_bimodal_kernel(%arg0: i32, %arg1: i32, %arg2: memref<1x16x96xf32, #tpu.memory_space<vmem>>, %arg3: memref<1x96xf32, #tpu.memory_space<vmem>>, %arg4: memref<1x96xf32, #tpu.memory_space<vmem>>, %arg5: memref<1x1x128xf32, #tpu.memory_space<vmem>>, %arg6: memref<96x128xbf16, #tpu.memory_space<vmem>>, %arg7: memref<128x128xbf16, #tpu.memory_space<vmem>>, %arg8: memref<1x128xf32, #tpu.memory_space<vmem>>, %arg9: memref<128x128xbf16, #tpu.memory_space<vmem>>, %arg10: memref<1x128xf32, #tpu.memory_space<vmem>>, %arg11: memref<128x128xbf16, #tpu.memory_space<vmem>>, %arg12: memref<1x128xf32, #tpu.memory_space<vmem>>, %arg13: memref<1x16x128xf32, #tpu.memory_space<vmem>>) attributes {dimension_semantics = [#tpu.dimension_semantics<parallel>, #tpu.dimension_semantics<parallel>], iteration_bounds = array<i64: 2, 1>, scalar_prefetch = 0 : i64, scratch_operands = 0 : i64, tpu.core_type = #tpu.core_type<tc>, window_params = [{transform_indices = @transform_0, window_bounds = array<i64: 1, 16, 96>}, {pipeline_mode = #tpu.pipeline_mode<synchronous>, transform_indices = @transform_1, window_bounds = array<i64: 1, 96>}, {pipeline_mode = #tpu.pipeline_mode<synchronous>, transform_indices = @transform_2, window_bounds = array<i64: 1, 96>}, {transform_indices = @transform_3, window_bounds = array<i64: 1, 1, 128>}, {pipeline_mode = #tpu.pipeline_mode<synchronous>, transform_indices = @transform_4, window_bounds = array<i64: 96, 128>}, {pipeline_mode = #tpu.pipeline_mode<synchronous>, transform_indices = @transform_5, window_bounds = array<i64: 128, 128>}, {pipeline_mode = #tpu.pipeline_mode<synchronous>, transform_indices = @transform_6, window_bounds = array<i64: 1, 128>}, {pipeline_mode = #tpu.pipeline_mode<synchronous>, transform_indices = @transform_7, window_bounds = array<i64: 128, 128>}, {pipeline_mode = #tpu.pipeline_mode<synchronous>, transform_indices = @transform_8, window_bounds = array<i64: 1, 128>}, {pipeline_mode = #tpu.pipeline_mode<synchronous>, transform_indices = @transform_9, window_bounds = array<i64: 128, 128>}, {pipeline_mode = #tpu.pipeline_mode<synchronous>, transform_indices = @transform_10, window_bounds = array<i64: 1, 128>}, {transform_indices = @transform_11, window_bounds = array<i64: 1, 16, 128>}]} {
    %c0 = arith.constant 0 : index
    %c0_0 = arith.constant 0 : index
    %c0_1 = arith.constant 0 : index
    %0 = vector.load %arg2[%c0, %c0_0, %c0_1] : memref<1x16x96xf32, #tpu.memory_space<vmem>>, vector<1x16x96xf32>
    %1 = vector.shape_cast %0 : vector<1x16x96xf32> to vector<16x96xf32>
    %c0_2 = arith.constant 0 : index
    %c0_3 = arith.constant 0 : index
    %2 = vector.load %arg3[%c0_2, %c0_3] : memref<1x96xf32, #tpu.memory_space<vmem>>, vector<1x96xf32>
    %3 = vector.broadcast %2 : vector<1x96xf32> to vector<16x96xf32>
    %4 = arith.mulf %1, %3 : vector<16x96xf32>
    %c0_4 = arith.constant 0 : index
    %c0_5 = arith.constant 0 : index
    %5 = vector.load %arg4[%c0_4, %c0_5] : memref<1x96xf32, #tpu.memory_space<vmem>>, vector<1x96xf32>
    %6 = vector.broadcast %5 : vector<1x96xf32> to vector<16x96xf32>
    %7 = arith.addf %4, %6 : vector<16x96xf32>
    %8 = arith.truncf %7 : vector<16x96xf32> to vector<16x96xbf16>
    %c0_6 = arith.constant 0 : index
    %c0_7 = arith.constant 0 : index
    %9 = vector.load %arg6[%c0_6, %c0_7] : memref<96x128xbf16, #tpu.memory_space<vmem>>, vector<96x128xbf16>
    %cst = arith.constant dense<0.000000e+00> : vector<16x128xf32>
    %10 = tpu.matmul %8, %9, %cst {dimension_numbers = #tpu.dot_dimension_numbers<[1], [0], [0], [1], [0, 0, 1, 1], [], []>} : vector<16x96xbf16>, vector<96x128xbf16>, vector<16x128xf32> -> vector<16x128xf32>
    %c0_8 = arith.constant 0 : index
    %c0_9 = arith.constant 0 : index
    %c0_10 = arith.constant 0 : index
    %11 = vector.load %arg5[%c0_8, %c0_9, %c0_10] : memref<1x1x128xf32, #tpu.memory_space<vmem>>, vector<1x1x128xf32>
    %12 = vector.shape_cast %11 : vector<1x1x128xf32> to vector<1x128xf32>
    %13 = vector.broadcast %12 : vector<1x128xf32> to vector<16x128xf32>
    %14 = arith.addf %10, %13 : vector<16x128xf32>
    %cst_11 = arith.constant 0.000000e+00 : f32
    %15 = vector.broadcast %cst_11 : f32 to vector<16x128xf32>
    %16 = arith.maximumf %14, %15 : vector<16x128xf32>
    %17 = arith.truncf %16 : vector<16x128xf32> to vector<16x128xbf16>
    %c0_12 = arith.constant 0 : index
    %c0_13 = arith.constant 0 : index
    %18 = vector.load %arg7[%c0_12, %c0_13] : memref<128x128xbf16, #tpu.memory_space<vmem>>, vector<128x128xbf16>
    %cst_14 = arith.constant dense<0.000000e+00> : vector<16x128xf32>
    %19 = tpu.matmul %17, %18, %cst_14 {dimension_numbers = #tpu.dot_dimension_numbers<[1], [0], [0], [1], [0, 0, 1, 1], [], []>} : vector<16x128xbf16>, vector<128x128xbf16>, vector<16x128xf32> -> vector<16x128xf32>
    %c0_15 = arith.constant 0 : index
    %c0_16 = arith.constant 0 : index
    %20 = vector.load %arg8[%c0_15, %c0_16] : memref<1x128xf32, #tpu.memory_space<vmem>>, vector<1x128xf32>
    %21 = vector.broadcast %20 : vector<1x128xf32> to vector<16x128xf32>
    %22 = arith.addf %19, %21 : vector<16x128xf32>
    %cst_17 = arith.constant 0.000000e+00 : f32
    %23 = vector.broadcast %cst_17 : f32 to vector<16x128xf32>
    %24 = arith.maximumf %22, %23 : vector<16x128xf32>
    %25 = arith.truncf %24 : vector<16x128xf32> to vector<16x128xbf16>
    %c0_18 = arith.constant 0 : index
    %c0_19 = arith.constant 0 : index
    %26 = vector.load %arg9[%c0_18, %c0_19] : memref<128x128xbf16, #tpu.memory_space<vmem>>, vector<128x128xbf16>
    %cst_20 = arith.constant dense<0.000000e+00> : vector<16x128xf32>
    %27 = tpu.matmul %25, %26, %cst_20 {dimension_numbers = #tpu.dot_dimension_numbers<[1], [0], [0], [1], [0, 0, 1, 1], [], []>} : vector<16x128xbf16>, vector<128x128xbf16>, vector<16x128xf32> -> vector<16x128xf32>
    %c0_21 = arith.constant 0 : index
    %c0_22 = arith.constant 0 : index
    %28 = vector.load %arg10[%c0_21, %c0_22] : memref<1x128xf32, #tpu.memory_space<vmem>>, vector<1x128xf32>
    %29 = vector.broadcast %28 : vector<1x128xf32> to vector<16x128xf32>
    %30 = arith.addf %27, %29 : vector<16x128xf32>
    %cst_23 = arith.constant 0.000000e+00 : f32
    %31 = vector.broadcast %cst_23 : f32 to vector<16x128xf32>
    %32 = arith.maximumf %30, %31 : vector<16x128xf32>
    %33 = arith.truncf %32 : vector<16x128xf32> to vector<16x128xbf16>
    %c0_24 = arith.constant 0 : index
    %c0_25 = arith.constant 0 : index
    %34 = vector.load %arg11[%c0_24, %c0_25] : memref<128x128xbf16, #tpu.memory_space<vmem>>, vector<128x128xbf16>
    %cst_26 = arith.constant dense<0.000000e+00> : vector<16x128xf32>
    %35 = tpu.matmul %33, %34, %cst_26 {dimension_numbers = #tpu.dot_dimension_numbers<[1], [0], [0], [1], [0, 0, 1, 1], [], []>} : vector<16x128xbf16>, vector<128x128xbf16>, vector<16x128xf32> -> vector<16x128xf32>
    %c0_27 = arith.constant 0 : index
    %c0_28 = arith.constant 0 : index
    %36 = vector.load %arg12[%c0_27, %c0_28] : memref<1x128xf32, #tpu.memory_space<vmem>>, vector<1x128xf32>
    %37 = vector.broadcast %36 : vector<1x128xf32> to vector<16x128xf32>
    %38 = arith.addf %35, %37 : vector<16x128xf32>
    %cst_29 = arith.constant 0.000000e+00 : f32
    %39 = vector.broadcast %cst_29 : f32 to vector<16x128xf32>
    %40 = arith.maximumf %38, %39 : vector<16x128xf32>
    %c0_30 = arith.constant 0 : index
    %c0_31 = arith.constant 0 : index
    %c0_32 = arith.constant 0 : index
    %41 = vector.load %arg13[%c0_30, %c0_31, %c0_32] : memref<1x16x128xf32, #tpu.memory_space<vmem>>, vector<1x16x128xf32>
    %42 = vector.shape_cast %41 : vector<1x16x128xf32> to vector<16x128xf32>
    %43 = vector.shape_cast %40 : vector<16x128xf32> to vector<1x16x128xf32>
    tpu.vector_store %arg13[%c0_30, %c0_31, %c0_32], %43 {strides = array<i32>} : memref<1x16x128xf32, #tpu.memory_space<vmem>>, vector<1x16x128xf32>,
    return
  }
  func.func @transform_0(%arg0: i32, %arg1: i32) -> (i32, i32, i32) {
    %c0_i32 = arith.constant 0 : i32
    %c0_i32_0 = arith.constant 0 : i32
    return %arg0, %arg1, %c0_i32 : i32, i32, i32
  }
  func.func @transform_1(%arg0: i32, %arg1: i32) -> (i32, i32) {
    %c0_i32 = arith.constant 0 : i32
    %c0_i32_0 = arith.constant 0 : i32
    %c0_i32_1 = arith.constant 0 : i32
    return %c0_i32, %c0_i32_0 : i32, i32
  }
  func.func @transform_2(%arg0: i32, %arg1: i32) -> (i32, i32) {
    %c0_i32 = arith.constant 0 : i32
    %c0_i32_0 = arith.constant 0 : i32
    %c0_i32_1 = arith.constant 0 : i32
    return %c0_i32, %c0_i32_0 : i32, i32
  }
  func.func @transform_3(%arg0: i32, %arg1: i32) -> (i32, i32, i32) {
    %c0_i32 = arith.constant 0 : i32
    %c0_i32_0 = arith.constant 0 : i32
    %c0_i32_1 = arith.constant 0 : i32
    return %arg0, %c0_i32, %c0_i32_0 : i32, i32, i32
  }
  func.func @transform_4(%arg0: i32, %arg1: i32) -> (i32, i32) {
    %c0_i32 = arith.constant 0 : i32
    %c0_i32_0 = arith.constant 0 : i32
    %c0_i32_1 = arith.constant 0 : i32
    return %c0_i32, %c0_i32_0 : i32, i32
  }
  func.func @transform_5(%arg0: i32, %arg1: i32) -> (i32, i32) {
    %c0_i32 = arith.constant 0 : i32
    %c0_i32_0 = arith.constant 0 : i32
    %c0_i32_1 = arith.constant 0 : i32
    return %c0_i32, %c0_i32_0 : i32, i32
  }
  func.func @transform_6(%arg0: i32, %arg1: i32) -> (i32, i32) {
    %c0_i32 = arith.constant 0 : i32
    %c0_i32_0 = arith.constant 0 : i32
    %c0_i32_1 = arith.constant 0 : i32
    return %c0_i32, %c0_i32_0 : i32, i32
  }
  func.func @transform_7(%arg0: i32, %arg1: i32) -> (i32, i32) {
    %c0_i32 = arith.constant 0 : i32
    %c0_i32_0 = arith.constant 0 : i32
    %c0_i32_1 = arith.constant 0 : i32
    return %c0_i32, %c0_i32_0 : i32, i32
  }
  func.func @transform_8(%arg0: i32, %arg1: i32) -> (i32, i32) {
    %c0_i32 = arith.constant 0 : i32
    %c0_i32_0 = arith.constant 0 : i32
    %c0_i32_1 = arith.constant 0 : i32
    return %c0_i32, %c0_i32_0 : i32, i32
  }
  func.func @transform_9(%arg0: i32, %arg1: i32) -> (i32, i32) {
    %c0_i32 = arith.constant 0 : i32
    %c0_i32_0 = arith.constant 0 : i32
    %c0_i32_1 = arith.constant 0 : i32
    return %c0_i32, %c0_i32_0 : i32, i32
  }
  func.func @transform_10(%arg0: i32, %arg1: i32) -> (i32, i32) {
    %c0_i32 = arith.constant 0 : i32
    %c0_i32_0 = arith.constant 0 : i32
    %c0_i32_1 = arith.constant 0 : i32
    return %c0_i32, %c0_i32_0 : i32, i32
  }
  func.func @transform_11(%arg0: i32, %arg1: i32) -> (i32, i32, i32) {
    %c0_i32 = arith.constant 0 : i32
    %c0_i32_0 = arith.constant 0 : i32
    return %arg0, %arg1, %c0_i32 : i32, i32, i32
  }
}

</mosaic_0001>

<llo_original>
// kernel: prefil_forward.11
$region0: #{prefil_forward.11}
  #allocation0 [shape = 'u32[]', space=smem, size = 0x4, offset = 0x4, fixed_abs, tag = 'smem constant byte address 0x4 - core index']
  #allocation1 [shape = 'u32[72,128]{1,0:T(1,128)}', space=vmem, size = 0x9000, scoped, tag = 'internal scratch']
  %s0 = inlined_call_operand.vmem [shape: f32[512,3], index: 0, kind: input, shape index: {}]
  %s1 = inlined_call_operand.vmem [shape: bf16[3,8], index: 1, kind: input, shape index: {}]
  %s2 = inlined_call_operand.vmem [shape: f32[1,8], index: 2, kind: input, shape index: {}]
  %s3 = inlined_call_operand.vmem [shape: f32[512,8], index: 3, kind: output, shape index: {}]
  %s4 = sld [smem:[#allocation0]]
  $region22: #{prefil_forward.11} parent=0
    _
  %s6 = ssub.s32 1, %s4
  %s7 = scalar_select 0, %s6, %s4
  // Predicated region
  $region2: #{prefil_forward.11} parent=0 // pred_check
    _
  $region3: #{prefil_forward.11} parent=0 // pred_check_branch
    %9 = sbr.rel (0) target = $region5
  $region4: #{prefil_forward.11} parent=0 // pred_region
    _
  $region5: #{prefil_forward.11} parent=0 // pred_fallthru
    _
  // Predicated region
  $region6: #{prefil_forward.11} parent=0 // pred_check
    _
  $region7: #{prefil_forward.11} parent=0 // pred_check_branch
    %11 = sbr.rel (0) target = $region9
  $region8: #{prefil_forward.11} parent=0 // pred_region
    _
  $region9: #{prefil_forward.11} parent=0 // pred_fallthru
    _
  // Predicated region
  $region10: #{prefil_forward.11} parent=0 // pred_check
    _
  $region11: #{prefil_forward.11} parent=0 // pred_check_branch
    %13 = sbr.rel (0) target = $region13
  $region12: #{prefil_forward.11} parent=0 // pred_region
    _
  $region13: #{prefil_forward.11} parent=0 // pred_fallthru
    _
  %v15 = vld [vmem:[%s0] sm:$0xff]
  %v16 = vld [vmem:[%s0 + $0x8] sm:$0xff]
  %v17 = vld [vmem:[%s0 + $0x10] sm:$0xff]
  %v18 = vld [vmem:[%s0 + $0x18] sm:$0xff]
  %v19 = vld [vmem:[%s0 + $0x20] sm:$0xff]
  %v20 = vld [vmem:[%s0 + $0x28] sm:$0xff]
  %v21 = vld [vmem:[%s0 + $0x30] sm:$0xff]
  %v22 = vld [vmem:[%s0 + $0x38] sm:$0xff]
  %v23 = vld [vmem:[%s0 + $0x40] sm:$0xff]
  %v24 = vld [vmem:[%s0 + $0x48] sm:$0xff]
  %v25 = vld [vmem:[%s0 + $0x50] sm:$0xff]
  %v26 = vld [vmem:[%s0 + $0x58] sm:$0xff]
  %v27 = vld [vmem:[%s0 + $0x60] sm:$0xff]
  %v28 = vld [vmem:[%s0 + $0x68] sm:$0xff]
  %v29 = vld [vmem:[%s0 + $0x70] sm:$0xff]
  %v30 = vld [vmem:[%s0 + $0x78] sm:$0xff]
  %v31 = vld [vmem:[%s0 + $0x80] sm:$0xff]
  %v32 = vld [vmem:[%s0 + $0x88] sm:$0xff]
  %v33 = vld [vmem:[%s0 + $0x90] sm:$0xff]
  %v34 = vld [vmem:[%s0 + $0x98] sm:$0xff]
  %v35 = vld [vmem:[%s0 + $0xa0] sm:$0xff]
  %v36 = vld [vmem:[%s0 + $0xa8] sm:$0xff]
  %v37 = vld [vmem:[%s0 + $0xb0] sm:$0xff]
  %v38 = vld [vmem:[%s0 + $0xb8] sm:$0xff]
  %v39 = vld [vmem:[%s0 + $0xc0] sm:$0xff]
  %v40 = vld [vmem:[%s0 + $0xc8] sm:$0xff]
  %v41 = vld [vmem:[%s0 + $0xd0] sm:$0xff]
  %v42 = vld [vmem:[%s0 + $0xd8] sm:$0xff]
  %v43 = vld [vmem:[%s0 + $0xe0] sm:$0xff]
  %v44 = vld [vmem:[%s0 + $0xe8] sm:$0xff]
  %v45 = vld [vmem:[%s0 + $0xf0] sm:$0xff]
  %v46 = vld [vmem:[%s0 + $0xf8] sm:$0xff]
  %v47 = vld [vmem:[%s0 + $0x100] sm:$0xff]
  %v48 = vld [vmem:[%s0 + $0x108] sm:$0xff]
  %v49 = vld [vmem:[%s0 + $0x110] sm:$0xff]
  %v50 = vld [vmem:[%s0 + $0x118] sm:$0xff]
  %v51 = vld [vmem:[%s0 + $0x120] sm:$0xff]
  %v52 = vld [vmem:[%s0 + $0x128] sm:$0xff]
  %v53 = vld [vmem:[%s0 + $0x130] sm:$0xff]
  %v54 = vld [vmem:[%s0 + $0x138] sm:$0xff]
  %v55 = vld [vmem:[%s0 + $0x140] sm:$0xff]
  %v56 = vld [vmem:[%s0 + $0x148] sm:$0xff]
  %v57 = vld [vmem:[%s0 + $0x150] sm:$0xff]
  %v58 = vld [vmem:[%s0 + $0x158] sm:$0xff]
  %v59 = vld [vmem:[%s0 + $0x160] sm:$0xff]
  %v60 = vld [vmem:[%s0 + $0x168] sm:$0xff]
  %v61 = vld [vmem:[%s0 + $0x170] sm:$0xff]
  %v62 = vld [vmem:[%s0 + $0x178] sm:$0xff]
  %v63 = vld [vmem:[%s0 + $0x180] sm:$0xff]
  %v64 = vld [vmem:[%s0 + $0x188] sm:$0xff]
  %v65 = vld [vmem:[%s0 + $0x190] sm:$0xff]
  %v66 = vld [vmem:[%s0 + $0x198] sm:$0xff]
  %v67 = vld [vmem:[%s0 + $0x1a0] sm:$0xff]
  %v68 = vld [vmem:[%s0 + $0x1a8] sm:$0xff]
  %v69 = vld [vmem:[%s0 + $0x1b0] sm:$0xff]
  %v70 = vld [vmem:[%s0 + $0x1b8] sm:$0xff]
  %v71 = vld [vmem:[%s0 + $0x1c0] sm:$0xff]
  %v72 = vld [vmem:[%s0 + $0x1c8] sm:$0xff]
  %v73 = vld [vmem:[%s0 + $0x1d0] sm:$0xff]
  %v74 = vld [vmem:[%s0 + $0x1d8] sm:$0xff]
  %v75 = vld [vmem:[%s0 + $0x1e0] sm:$0xff]
  %v76 = vld [vmem:[%s0 + $0x1e8] sm:$0xff]
  %v77 = vld [vmem:[%s0 + $0x1f0] sm:$0xff]
  %v78 = vld [vmem:[%s0 + $0x1f8] sm:$0xff]
  %v79 = vpack.c.bf16 %v16, %v15
  %v80 = vpack.c.bf16 %v18, %v17
  %v81 = vpack.c.bf16 %v20, %v19
  %v82 = vpack.c.bf16 %v22, %v21
  %v83 = vpack.c.bf16 %v24, %v23
  %v84 = vpack.c.bf16 %v26, %v25
  %v85 = vpack.c.bf16 %v28, %v27
  %v86 = vpack.c.bf16 %v30, %v29
  %v87 = vpack.c.bf16 %v32, %v31
  %v88 = vpack.c.bf16 %v34, %v33
  %v89 = vpack.c.bf16 %v36, %v35
  %v90 = vpack.c.bf16 %v38, %v37
  %v91 = vpack.c.bf16 %v40, %v39
  %v92 = vpack.c.bf16 %v42, %v41
  %v93 = vpack.c.bf16 %v44, %v43
  %v94 = vpack.c.bf16 %v46, %v45
  %v95 = vpack.c.bf16 %v48, %v47
  %v96 = vpack.c.bf16 %v50, %v49
  %v97 = vpack.c.bf16 %v52, %v51
  %v98 = vpack.c.bf16 %v54, %v53
  %v99 = vpack.c.bf16 %v56, %v55
  %v100 = vpack.c.bf16 %v58, %v57
  %v101 = vpack.c.bf16 %v60, %v59
  %v102 = vpack.c.bf16 %v62, %v61
  %v103 = vpack.c.bf16 %v64, %v63
  %v104 = vpack.c.bf16 %v66, %v65
  %v105 = vpack.c.bf16 %v68, %v67
  %v106 = vpack.c.bf16 %v70, %v69
  %v107 = vpack.c.bf16 %v72, %v71
  %v108 = vpack.c.bf16 %v74, %v73
  %v109 = vpack.c.bf16 %v76, %v75
  %v110 = vpack.c.bf16 %v78, %v77
  %v111 = vld [vmem:[%s1] sm:$0x3]
  %v112 = vld [vmem:[%s2] sm:$0x1]
  %v114 = vperm.slane %v112, 0
  %vm116 = vcmask 23552
  %v118 = vsel %vm116, %v79, 0
  %v121 = vsel %vm116, %v80, 0
  %v124 = vsel %vm116, %v81, 0
  %v127 = vsel %vm116, %v82, 0
  %v130 = vsel %vm116, %v83, 0
  %v133 = vsel %vm116, %v84, 0
  %v136 = vsel %vm116, %v85, 0
  %v139 = vsel %vm116, %v86, 0
  %v142 = vsel %vm116, %v87, 0
  %v145 = vsel %vm116, %v88, 0
  %v148 = vsel %vm116, %v89, 0
  %v151 = vsel %vm116, %v90, 0
  %v154 = vsel %vm116, %v91, 0
  %v157 = vsel %vm116, %v92, 0
  %v160 = vsel %vm116, %v93, 0
  %v163 = vsel %vm116, %v94, 0
  %v166 = vsel %vm116, %v95, 0
  %v169 = vsel %vm116, %v96, 0
  %v172 = vsel %vm116, %v97, 0
  %v175 = vsel %vm116, %v98, 0
  %v178 = vsel %vm116, %v99, 0
  %v181 = vsel %vm116, %v100, 0
  %v184 = vsel %vm116, %v101, 0
  %v187 = vsel %vm116, %v102, 0
  %v190 = vsel %vm116, %v103, 0
  %v193 = vsel %vm116, %v104, 0
  %v196 = vsel %vm116, %v105, 0
  %v199 = vsel %vm116, %v106, 0
  %v202 = vsel %vm116, %v107, 0
  %v205 = vsel %vm116, %v108, 0
  %v208 = vsel %vm116, %v109, 0
  %v211 = vsel %vm116, %v110, 0
  %vm213 = vcmask 1040384
  %vm214 = vcmask 1041408
  %v215 = vsel %vm213, 4294967295, 65535
  %v216 = vsel %vm214, %v215, 0
  %v218 = vand.u32 %v111, %v216
  %220 = vmatpush.bf16.msra.mxu0 0
  %221 = vmatpush.bf16.msra.mxu0 0
  %222 = vmatpush.bf16.msra.mxu0 0
  %223 = vmatpush.bf16.msra.mxu0 0
  %224 = vmatpush.bf16.msra.mxu0 0
  %225 = vmatpush.bf16.msra.mxu0 0
  %226 = vmatpush.bf16.msra.mxu0 0
  %227 = vmatpush.bf16.msra.mxu0 %v218
  %228 = vmatmul.bf16.gmra.mxu0 %v118
  %v229 = vpop.f32.mrf.mxu0
  %v230 = vadd.f32 %v114, %v229
  %v231 = vpop.f32.mrf.mxu0
  %v232 = vadd.f32 %v114, %v231
  %233 = vmatmul.bf16.gmra.mxu0 %v121
  %v234 = vpop.f32.mrf.mxu0
  %v235 = vadd.f32 %v114, %v234
  %v236 = vpop.f32.mrf.mxu0
  %v237 = vadd.f32 %v114, %v236
  %238 = vmatmul.bf16.gmra.mxu0 %v124
  %v239 = vpop.f32.mrf.mxu0
  %v240 = vadd.f32 %v114, %v239
  %v241 = vpop.f32.mrf.mxu0
  %v242 = vadd.f32 %v114, %v241
  %243 = vmatmul.bf16.gmra.mxu0 %v127
  %v244 = vpop.f32.mrf.mxu0
  %v245 = vadd.f32 %v114, %v244
  %v246 = vpop.f32.mrf.mxu0
  %v247 = vadd.f32 %v114, %v246
  %248 = vmatmul.bf16.gmra.mxu0 %v130
  %v249 = vpop.f32.mrf.mxu0
  %v250 = vadd.f32 %v114, %v249
  %v251 = vpop.f32.mrf.mxu0
  %v252 = vadd.f32 %v114, %v251
  %253 = vmatmul.bf16.gmra.mxu0 %v133
  %v254 = vpop.f32.mrf.mxu0
  %v255 = vadd.f32 %v114, %v254
  %v256 = vpop.f32.mrf.mxu0
  %v257 = vadd.f32 %v114, %v256
  %258 = vmatmul.bf16.gmra.mxu0 %v136
  %v259 = vpop.f32.mrf.mxu0
  %v260 = vadd.f32 %v114, %v259
  %v261 = vpop.f32.mrf.mxu0
  %v262 = vadd.f32 %v114, %v261
  %263 = vmatmul.bf16.gmra.mxu0 %v139
  %v264 = vpop.f32.mrf.mxu0
  %v265 = vadd.f32 %v114, %v264
  %v266 = vpop.f32.mrf.mxu0
  %v267 = vadd.f32 %v114, %v266
  %268 = vmatmul.bf16.gmra.mxu0 %v142
  %v269 = vpop.f32.mrf.mxu0
  %v270 = vadd.f32 %v114, %v269
  %v271 = vpop.f32.mrf.mxu0
  %v272 = vadd.f32 %v114, %v271
  %273 = vmatmul.bf16.gmra.mxu0 %v145
  %v274 = vpop.f32.mrf.mxu0
  %v275 = vadd.f32 %v114, %v274
  %v276 = vpop.f32.mrf.mxu0
  %v277 = vadd.f32 %v114, %v276
  %278 = vmatmul.bf16.gmra.mxu0 %v148
  %v279 = vpop.f32.mrf.mxu0
  %v280 = vadd.f32 %v114, %v279
  %v281 = vpop.f32.mrf.mxu0
  %v282 = vadd.f32 %v114, %v281
  %283 = vmatmul.bf16.gmra.mxu0 %v151
  %v284 = vpop.f32.mrf.mxu0
  %v285 = vadd.f32 %v114, %v284
  %v286 = vpop.f32.mrf.mxu0
  %v287 = vadd.f32 %v114, %v286
  %288 = vmatmul.bf16.gmra.mxu0 %v154
  %v289 = vpop.f32.mrf.mxu0
  %v290 = vadd.f32 %v114, %v289
  %v291 = vpop.f32.mrf.mxu0
  %v292 = vadd.f32 %v114, %v291
  %293 = vmatmul.bf16.gmra.mxu0 %v157
  %v294 = vpop.f32.mrf.mxu0
  %v295 = vadd.f32 %v114, %v294
  %v296 = vpop.f32.mrf.mxu0
  %v297 = vadd.f32 %v114, %v296
  %298 = vmatmul.bf16.gmra.mxu0 %v160
  %v299 = vpop.f32.mrf.mxu0
  %v300 = vadd.f32 %v114, %v299
  %v301 = vpop.f32.mrf.mxu0
  %v302 = vadd.f32 %v114, %v301
  %303 = vmatmul.bf16.gmra.mxu0 %v163
  %v304 = vpop.f32.mrf.mxu0
  %v305 = vadd.f32 %v114, %v304
  %v306 = vpop.f32.mrf.mxu0
  %v307 = vadd.f32 %v114, %v306
  %308 = vmatmul.bf16.gmra.mxu0 %v166
  %v309 = vpop.f32.mrf.mxu0
  %v310 = vadd.f32 %v114, %v309
  %v311 = vpop.f32.mrf.mxu0
  %v312 = vadd.f32 %v114, %v311
  %313 = vmatmul.bf16.gmra.mxu0 %v169
  %v314 = vpop.f32.mrf.mxu0
  %v315 = vadd.f32 %v114, %v314
  %v316 = vpop.f32.mrf.mxu0
  %v317 = vadd.f32 %v114, %v316
  %318 = vmatmul.bf16.gmra.mxu0 %v172
  %v319 = vpop.f32.mrf.mxu0
  %v320 = vadd.f32 %v114, %v319
  %v321 = vpop.f32.mrf.mxu0
  %v322 = vadd.f32 %v114, %v321
  %323 = vmatmul.bf16.gmra.mxu0 %v175
  %v324 = vpop.f32.mrf.mxu0
  %v325 = vadd.f32 %v114, %v324
  %v326 = vpop.f32.mrf.mxu0
  %v327 = vadd.f32 %v114, %v326
  %328 = vmatmul.bf16.gmra.mxu0 %v178
  %v329 = vpop.f32.mrf.mxu0
  %v330 = vadd.f32 %v114, %v329
  %v331 = vpop.f32.mrf.mxu0
  %v332 = vadd.f32 %v114, %v331
  %333 = vmatmul.bf16.gmra.mxu0 %v181
  %v334 = vpop.f32.mrf.mxu0
  %v335 = vadd.f32 %v114, %v334
  %v336 = vpop.f32.mrf.mxu0
  %v337 = vadd.f32 %v114, %v336
  %338 = vmatmul.bf16.gmra.mxu0 %v184
  %v339 = vpop.f32.mrf.mxu0
  %v340 = vadd.f32 %v114, %v339
  %v341 = vpop.f32.mrf.mxu0
  %v342 = vadd.f32 %v114, %v341
  %343 = vmatmul.bf16.gmra.mxu0 %v187
  %v344 = vpop.f32.mrf.mxu0
  %v345 = vadd.f32 %v114, %v344
  %v346 = vpop.f32.mrf.mxu0
  %v347 = vadd.f32 %v114, %v346
  %348 = vmatmul.bf16.gmra.mxu0 %v190
  %v349 = vpop.f32.mrf.mxu0
  %v350 = vadd.f32 %v114, %v349
  %v351 = vpop.f32.mrf.mxu0
  %v352 = vadd.f32 %v114, %v351
  %353 = vmatmul.bf16.gmra.mxu0 %v193
  %v354 = vpop.f32.mrf.mxu0
  %v355 = vadd.f32 %v114, %v354
  %v356 = vpop.f32.mrf.mxu0
  %v357 = vadd.f32 %v114, %v356
  %358 = vmatmul.bf16.gmra.mxu0 %v196
  %v359 = vpop.f32.mrf.mxu0
  %v360 = vadd.f32 %v114, %v359
  %v361 = vpop.f32.mrf.mxu0
  %v362 = vadd.f32 %v114, %v361
  %363 = vmatmul.bf16.gmra.mxu0 %v199
  %v364 = vpop.f32.mrf.mxu0
  %v365 = vadd.f32 %v114, %v364
  %v366 = vpop.f32.mrf.mxu0
  %v367 = vadd.f32 %v114, %v366
  %368 = vmatmul.bf16.gmra.mxu0 %v202
  %v369 = vpop.f32.mrf.mxu0
  %v370 = vadd.f32 %v114, %v369
  %v371 = vpop.f32.mrf.mxu0
  %v372 = vadd.f32 %v114, %v371
  %373 = vmatmul.bf16.gmra.mxu0 %v205
  %v374 = vpop.f32.mrf.mxu0
  %v375 = vadd.f32 %v114, %v374
  %v376 = vpop.f32.mrf.mxu0
  %v377 = vadd.f32 %v114, %v376
  %378 = vmatmul.bf16.gmra.mxu0 %v208
  %v379 = vpop.f32.mrf.mxu0
  %v380 = vadd.f32 %v114, %v379
  %v381 = vpop.f32.mrf.mxu0
  %v382 = vadd.f32 %v114, %v381
  %383 = vmatmul.bf16.gmra.mxu0 %v211
  %v384 = vpop.f32.mrf.mxu0
  %v385 = vadd.f32 %v114, %v384
  %v386 = vpop.f32.mrf.mxu0
  %v387 = vadd.f32 %v114, %v386
  %388 = vdwg.mxu0
  %v389 = vmax.f32 %v230, 0.0
  %v390 = vmax.f32 %v232, 0.0
  %v391 = vmax.f32 %v235, 0.0
  %v392 = vmax.f32 %v237, 0.0
  %v393 = vmax.f32 %v240, 0.0
  %v394 = vmax.f32 %v242, 0.0
  %v395 = vmax.f32 %v245, 0.0
  %v396 = vmax.f32 %v247, 0.0
  %v397 = vmax.f32 %v250, 0.0
  %v398 = vmax.f32 %v252, 0.0
  %v399 = vmax.f32 %v255, 0.0
  %v400 = vmax.f32 %v257, 0.0
  %v401 = vmax.f32 %v260, 0.0
  %v402 = vmax.f32 %v262, 0.0
  %v403 = vmax.f32 %v265, 0.0
  %v404 = vmax.f32 %v267, 0.0
  %v405 = vmax.f32 %v270, 0.0
  %v406 = vmax.f32 %v272, 0.0
  %v407 = vmax.f32 %v275, 0.0
  %v408 = vmax.f32 %v277, 0.0
  %v409 = vmax.f32 %v280, 0.0
  %v410 = vmax.f32 %v282, 0.0
  %v411 = vmax.f32 %v285, 0.0
  %v412 = vmax.f32 %v287, 0.0
  %v413 = vmax.f32 %v290, 0.0
  %v414 = vmax.f32 %v292, 0.0
  %v415 = vmax.f32 %v295, 0.0
  %v416 = vmax.f32 %v297, 0.0
  %v417 = vmax.f32 %v300, 0.0
  %v418 = vmax.f32 %v302, 0.0
  %v419 = vmax.f32 %v305, 0.0
  %v420 = vmax.f32 %v307, 0.0
  %v421 = vmax.f32 %v310, 0.0
  %v422 = vmax.f32 %v312, 0.0
  %v423 = vmax.f32 %v315, 0.0
  %v424 = vmax.f32 %v317, 0.0
  %v425 = vmax.f32 %v320, 0.0
  %v426 = vmax.f32 %v322, 0.0
  %v427 = vmax.f32 %v325, 0.0
  %v428 = vmax.f32 %v327, 0.0
  %v429 = vmax.f32 %v330, 0.0
  %v430 = vmax.f32 %v332, 0.0
  %v431 = vmax.f32 %v335, 0.0
  %v432 = vmax.f32 %v337, 0.0
  %v433 = vmax.f32 %v340, 0.0
  %v434 = vmax.f32 %v342, 0.0
  %v435 = vmax.f32 %v345, 0.0
  %v436 = vmax.f32 %v347, 0.0
  %v437 = vmax.f32 %v350, 0.0
  %v438 = vmax.f32 %v352, 0.0
  %v439 = vmax.f32 %v355, 0.0
  %v440 = vmax.f32 %v357, 0.0
  %v441 = vmax.f32 %v360, 0.0
  %v442 = vmax.f32 %v362, 0.0
  %v443 = vmax.f32 %v365, 0.0
  %v444 = vmax.f32 %v367, 0.0
  %v445 = vmax.f32 %v370, 0.0
  %v446 = vmax.f32 %v372, 0.0
  %v447 = vmax.f32 %v375, 0.0
  %v448 = vmax.f32 %v377, 0.0
  %v449 = vmax.f32 %v380, 0.0
  %v450 = vmax.f32 %v382, 0.0
  %v451 = vmax.f32 %v385, 0.0
  %v452 = vmax.f32 %v387, 0.0
  %vm453 = vcmask 64512
  %454 = vst.msk [vmem:[%s3] sm:$0xff] %vm453, %v389
  %455 = vst.msk [vmem:[%s3 + $0x8] sm:$0xff] %vm453, %v390
  %456 = vst.msk [vmem:[%s3 + $0x10] sm:$0xff] %vm453, %v391
  %457 = vst.msk [vmem:[%s3 + $0x18] sm:$0xff] %vm453, %v392
  %458 = vst.msk [vmem:[%s3 + $0x20] sm:$0xff] %vm453, %v393
  %459 = vst.msk [vmem:[%s3 + $0x28] sm:$0xff] %vm453, %v394
  %460 = vst.msk [vmem:[%s3 + $0x30] sm:$0xff] %vm453, %v395
  %461 = vst.msk [vmem:[%s3 + $0x38] sm:$0xff] %vm453, %v396
  %462 = vst.msk [vmem:[%s3 + $0x40] sm:$0xff] %vm453, %v397
  %463 = vst.msk [vmem:[%s3 + $0x48] sm:$0xff] %vm453, %v398
  %464 = vst.msk [vmem:[%s3 + $0x50] sm:$0xff] %vm453, %v399
  %465 = vst.msk [vmem:[%s3 + $0x58] sm:$0xff] %vm453, %v400
  %466 = vst.msk [vmem:[%s3 + $0x60] sm:$0xff] %vm453, %v401
  %467 = vst.msk [vmem:[%s3 + $0x68] sm:$0xff] %vm453, %v402
  %468 = vst.msk [vmem:[%s3 + $0x70] sm:$0xff] %vm453, %v403
  %469 = vst.msk [vmem:[%s3 + $0x78] sm:$0xff] %vm453, %v404
  %470 = vst.msk [vmem:[%s3 + $0x80] sm:$0xff] %vm453, %v405
  %471 = vst.msk [vmem:[%s3 + $0x88] sm:$0xff] %vm453, %v406
  %472 = vst.msk [vmem:[%s3 + $0x90] sm:$0xff] %vm453, %v407
  %473 = vst.msk [vmem:[%s3 + $0x98] sm:$0xff] %vm453, %v408
  %474 = vst.msk [vmem:[%s3 + $0xa0] sm:$0xff] %vm453, %v409
  %475 = vst.msk [vmem:[%s3 + $0xa8] sm:$0xff] %vm453, %v410
  %476 = vst.msk [vmem:[%s3 + $0xb0] sm:$0xff] %vm453, %v411
  %477 = vst.msk [vmem:[%s3 + $0xb8] sm:$0xff] %vm453, %v412
  %478 = vst.msk [vmem:[%s3 + $0xc0] sm:$0xff] %vm453, %v413
  %479 = vst.msk [vmem:[%s3 + $0xc8] sm:$0xff] %vm453, %v414
  %480 = vst.msk [vmem:[%s3 + $0xd0] sm:$0xff] %vm453, %v415
  %481 = vst.msk [vmem:[%s3 + $0xd8] sm:$0xff] %vm453, %v416
  %482 = vst.msk [vmem:[%s3 + $0xe0] sm:$0xff] %vm453, %v417
  %483 = vst.msk [vmem:[%s3 + $0xe8] sm:$0xff] %vm453, %v418
  %484 = vst.msk [vmem:[%s3 + $0xf0] sm:$0xff] %vm453, %v419
  %485 = vst.msk [vmem:[%s3 + $0xf8] sm:$0xff] %vm453, %v420
  %486 = vst.msk [vmem:[%s3 + $0x100] sm:$0xff] %vm453, %v421
  %487 = vst.msk [vmem:[%s3 + $0x108] sm:$0xff] %vm453, %v422
  %488 = vst.msk [vmem:[%s3 + $0x110] sm:$0xff] %vm453, %v423
  %489 = vst.msk [vmem:[%s3 + $0x118] sm:$0xff] %vm453, %v424
  %490 = vst.msk [vmem:[%s3 + $0x120] sm:$0xff] %vm453, %v425
  %491 = vst.msk [vmem:[%s3 + $0x128] sm:$0xff] %vm453, %v426
  %492 = vst.msk [vmem:[%s3 + $0x130] sm:$0xff] %vm453, %v427
  %493 = vst.msk [vmem:[%s3 + $0x138] sm:$0xff] %vm453, %v428
  %494 = vst.msk [vmem:[%s3 + $0x140] sm:$0xff] %vm453, %v429
  %495 = vst.msk [vmem:[%s3 + $0x148] sm:$0xff] %vm453, %v430
  %496 = vst.msk [vmem:[%s3 + $0x150] sm:$0xff] %vm453, %v431
  %497 = vst.msk [vmem:[%s3 + $0x158] sm:$0xff] %vm453, %v432
  %498 = vst.msk [vmem:[%s3 + $0x160] sm:$0xff] %vm453, %v433
  %499 = vst.msk [vmem:[%s3 + $0x168] sm:$0xff] %vm453, %v434
  %500 = vst.msk [vmem:[%s3 + $0x170] sm:$0xff] %vm453, %v435
  %501 = vst.msk [vmem:[%s3 + $0x178] sm:$0xff] %vm453, %v436
  %502 = vst.msk [vmem:[%s3 + $0x180] sm:$0xff] %vm453, %v437
  %503 = vst.msk [vmem:[%s3 + $0x188] sm:$0xff] %vm453, %v438
  %504 = vst.msk [vmem:[%s3 + $0x190] sm:$0xff] %vm453, %v439
  %505 = vst.msk [vmem:[%s3 + $0x198] sm:$0xff] %vm453, %v440
  %506 = vst.msk [vmem:[%s3 + $0x1a0] sm:$0xff] %vm453, %v441
  %507 = vst.msk [vmem:[%s3 + $0x1a8] sm:$0xff] %vm453, %v442
  %508 = vst.msk [vmem:[%s3 + $0x1b0] sm:$0xff] %vm453, %v443
  %509 = vst.msk [vmem:[%s3 + $0x1b8] sm:$0xff] %vm453, %v444
  %510 = vst.msk [vmem:[%s3 + $0x1c0] sm:$0xff] %vm453, %v445
  %511 = vst.msk [vmem:[%s3 + $0x1c8] sm:$0xff] %vm453, %v446
  %512 = vst.msk [vmem:[%s3 + $0x1d0] sm:$0xff] %vm453, %v447
  %513 = vst.msk [vmem:[%s3 + $0x1d8] sm:$0xff] %vm453, %v448
  %514 = vst.msk [vmem:[%s3 + $0x1e0] sm:$0xff] %vm453, %v449
  %515 = vst.msk [vmem:[%s3 + $0x1e8] sm:$0xff] %vm453, %v450
  %516 = vst.msk [vmem:[%s3 + $0x1f0] sm:$0xff] %vm453, %v451
  %517 = vst.msk [vmem:[%s3 + $0x1f8] sm:$0xff] %vm453, %v452
  // Predicated region
  $region14: #{prefil_forward.11} parent=0 // pred_check
    _
  $region15: #{prefil_forward.11} parent=0 // pred_check_branch
    %519 = sbr.rel (0) target = $region17
  $region16: #{prefil_forward.11} parent=0 // pred_region
    _
  $region17: #{prefil_forward.11} parent=0 // pred_fallthru
    _
  // Predicated region
  $region18: #{prefil_forward.11} parent=0 // pred_check
    _
  $region19: #{prefil_forward.11} parent=0 // pred_check_branch
    %521 = sbr.rel (0) target = $region21
  $region20: #{prefil_forward.11} parent=0 // pred_region
    _
  $region21: #{prefil_forward.11} parent=0 // pred_fallthru
    _

// kernel: prefil_forward.14
$region0: #{prefil_forward.14}
  #allocation0 [shape = 'u32[]', space=smem, size = 0x4, offset = 0x4, fixed_abs, tag = 'smem constant byte address 0x4 - core index']
  #allocation1 [shape = 'u32[72,128]{1,0:T(1,128)}', space=vmem, size = 0x9000, scoped, tag = 'internal scratch']
  %s0 = inlined_call_operand.vmem [shape: f32[32,32], index: 0, kind: input, shape index: {}]
  %s1 = inlined_call_operand.vmem [shape: f32[1,32], index: 1, kind: output, shape index: {0}]
  %s2 = inlined_call_operand.vmem [shape: f32[1,32], index: 2, kind: output, shape index: {1}]
  %3 = xla_tuple %s1, %s2
  %s4 = sld [smem:[#allocation0]]
  $region26: #{prefil_forward.14} parent=0
    _
  %s6 = ssub.s32 1, %s4
  %s7 = scalar_select 0, %s6, %s4
  // Predicated region
  $region2: #{prefil_forward.14} parent=0 // pred_check
    _
  $region3: #{prefil_forward.14} parent=0 // pred_check_branch
    %9 = sbr.rel (0) target = $region5
  $region4: #{prefil_forward.14} parent=0 // pred_region
    _
  $region5: #{prefil_forward.14} parent=0 // pred_fallthru
    _
  %p10 = scmp.eq.s32.totalorder 0, 0
  // Predicated region
  $region6: #{prefil_forward.14} parent=0 // pred_check
    %p11 = pneg %p10
  $region7: #{prefil_forward.14} parent=0 // pred_check_branch
    %13 = sbr.rel (%p11) target = $region9
  $region8: #{prefil_forward.14} parent=0 // pred_region
    %vm14 = vcmask 253952
    %15 = vst.msk [vmem:[%s1] sm:$0x1] %vm14, 0.0
    %16 = vst.msk [vmem:[%s2] sm:$0x1] %vm14, 0.0
  $region9: #{prefil_forward.14} parent=0 // pred_fallthru
    _
  %v17 = vld [vmem:[%s0] sm:$0xff]
  %v18 = vld [vmem:[%s0 + $0x8] sm:$0xff]
  %v19 = vld [vmem:[%s0 + $0x10] sm:$0xff]
  %v20 = vld [vmem:[%s0 + $0x18] sm:$0xff]
  %v21 = vld [vmem:[%s1] sm:$0x1]
  %vm22 = vcmask 261120
  %v23 = vsel %vm22, %v17, 0.0
  %v24 = vsel %vm22, %v18, 0.0
  %v25 = vadd.f32 %v23, %v24
  %v26 = vsel %vm22, %v19, 0.0
  %v27 = vadd.f32 %v25, %v26
  %v28 = vsel %vm22, %v20, 0.0
  %v29 = vadd.f32 %v27, %v28
  %v30 = vrot.slane %v29, 4
  %v31 = vadd.f32 %v29, %v30
  %v32 = vrot.slane %v31, 2
  %v33 = vadd.f32 %v31, %v32
  %v34 = vrot.slane %v33, 1
  %v35 = vadd.f32 %v33, %v34
  %v36 = vadd.f32 %v21, %v35
  %vm37 = vcmask 253952
  %38 = vst.msk [vmem:[%s1] sm:$0x1] %vm37, %v36
  %v39 = vld [vmem:[%s2] sm:$0x1]
  %v40 = vmul.f32 %v17, %v17
  %v41 = vmul.f32 %v18, %v18
  %v42 = vmul.f32 %v19, %v19
  %v43 = vmul.f32 %v20, %v20
  %v44 = vsel %vm22, %v40, 0.0
  %v45 = vsel %vm22, %v41, 0.0
  %v46 = vadd.f32 %v44, %v45
  %v47 = vsel %vm22, %v42, 0.0
  %v48 = vadd.f32 %v46, %v47
  %v49 = vsel %vm22, %v43, 0.0
  %v50 = vadd.f32 %v48, %v49
  %v51 = vrot.slane %v50, 4
  %v52 = vadd.f32 %v50, %v51
  %v53 = vrot.slane %v52, 2
  %v54 = vadd.f32 %v52, %v53
  %v55 = vrot.slane %v54, 1
  %v56 = vadd.f32 %v54, %v55
  %v57 = vadd.f32 %v39, %v56
  %58 = vst.msk [vmem:[%s2] sm:$0x1] %vm37, %v57
  // Predicated region
  $region10: #{prefil_forward.14} parent=0 // pred_check
    _
  $region11: #{prefil_forward.14} parent=0 // pred_check_branch
    %60 = sbr.rel (0) target = $region13
  $region12: #{prefil_forward.14} parent=0 // pred_region
    _
  $region13: #{prefil_forward.14} parent=0 // pred_fallthru
    _
  // Predicated region
  $region14: #{prefil_forward.14} parent=0 // pred_check
    _
  $region15: #{prefil_forward.14} parent=0 // pred_check_branch
    %62 = sbr.rel (0) target = $region17
  $region16: #{prefil_forward.14} parent=0 // pred_region
    _
  $region17: #{prefil_forward.14} parent=0 // pred_fallthru
    _
  // Predicated region
  $region18: #{prefil_forward.14} parent=0 // pred_check
    _
  $region19: #{prefil_forward.14} parent=0 // pred_check_branch
    %64 = sbr.rel (0) target = $region21
  $region20: #{prefil_forward.14} parent=0 // pred_region
    _
  $region21: #{prefil_forward.14} parent=0 // pred_fallthru
    _
  // Predicated region
  $region22: #{prefil_forward.14} parent=0 // pred_check
    _
  $region23: #{prefil_forward.14} parent=0 // pred_check_branch
    %66 = sbr.rel (0) target = $region25
  $region24: #{prefil_forward.14} parent=0 // pred_region
    _
  $region25: #{prefil_forward.14} parent=0 // pred_fallthru
    _

// kernel: tile.63
$region0: #{tile.63}
  #allocation0 [shape = 's32[1]{0}', space=sflag, size = 0x4, scoped, tag = 'scoped memory for tile.63']
  %s0 = inlined_call_operand.vmem [shape: f32[8], index: 0, kind: input, shape index: {}]
  %s1 = inlined_call_operand.vmem [shape: f32[4,8], index: 1, kind: output, shape index: {}]
  // Predicated region
  $region2: #{tile.63} parent=0 // pred_check
    _
  $region3: #{tile.63} parent=0 // pred_check_branch
    %3 = sbr.rel (0) target = $region5
  $region4: #{tile.63} parent=0 // pred_region
    _
  $region5: #{tile.63} parent=0 // pred_fallthru
    _
  %v4 = vld [vmem:[%s0] ss:$0 sm:$0xff]
  %5 = vst [vmem:[%s1] sm:$0xf] %v4

// kernel: tile.64
$region0: #{tile.64}
  %s0 = inlined_call_operand.vmem [shape: f32[4,8], index: 0, kind: input, shape index: {}]
  %s1 = inlined_call_operand.vmem [shape: f32[1,32], index: 1, kind: output, shape index: {}]
  $region1: #{tile.64} parent=0
    #allocation0 [shape = 'u8[4096]{0}', space=vmem, size = 0x1000, scoped, tag = 'scoped mem for output reshape']
    #allocation1 [shape = 'u8[4096]{0}', space=vmem, size = 0x1000, scoped, tag = 'scoped mem for input reshape']
    %s3 = ssub.s32 16, 1
    %v4 = vld [vmem:[%s0] sm:%s3]
    %5 = vst [vmem:[#allocation1] sm:%s3] %v4
    %v6 = vld [vmem:[#allocation1] sm:$0x1]
    %vm7 = vcmask 64512
    %8 = vst.msk [vmem:[#allocation0] sm:$0x1] %vm7, %v6
    %s9 = scalar_lea.vmem [#allocation1], 3
    %v10 = vld [vmem:[%s9] sm:$0x1]
    %11 = vrot.lane.b32.xlu0 %v10, 24
    %v12 = vpop.permute.xlu0 %11
    %vm13 = vcmask 261312
    %14 = vst.msk [vmem:[#allocation0] sm:$0x1] %vm13, %v12
    %s15 = scalar_lea.vmem [#allocation1], 2
    %v16 = vld [vmem:[%s15] sm:$0x1]
    %17 = vrot.lane.b32.xlu0 %v16, 16
    %v18 = vpop.permute.xlu0 %17
    %vm19 = vcmask 195712
    %20 = vst.msk [vmem:[#allocation0] sm:$0x1] %vm19, %v18
    %s21 = scalar_lea.vmem [#allocation1], 1
    %v22 = vld [vmem:[%s21] sm:$0x1]
    %23 = vrot.lane.b32.xlu0 %v22, 8
    %v24 = vpop.permute.xlu0 %23
    %vm25 = vcmask 130112
    %26 = vst.msk [vmem:[#allocation0] sm:$0x1] %vm25, %v24
    %s28 = ssub.s32 2, 1
    %v29 = vld [vmem:[#allocation0] sm:%s28]
    %s31 = ssub.s32 2, 1
    %32 = vst [vmem:[%s1] sm:%s31] %v29

// kernel: prefil_forward.13
$region0: #{prefil_forward.13}
  #allocation0 [shape = 'u32[]', space=smem, size = 0x4, offset = 0x4, fixed_abs, tag = 'smem constant byte address 0x4 - core index']
  #allocation1 [shape = 'u32[72,128]{1,0:T(1,128)}', space=vmem, size = 0x9000, scoped, tag = 'internal scratch']
  %s0 = inlined_call_operand.vmem [shape: f32[2,18,9,8], index: 0, kind: input, shape index: {}]
  %s1 = inlined_call_operand.vmem [shape: f32[2,18,9,8], index: 1, kind: input, shape index: {}]
  %s2 = inlined_call_operand.vmem [shape: f32[2,8,8,8], index: 2, kind: output, shape index: {}]
  %s3 = sld [smem:[#allocation0]]
  $region18: #{prefil_forward.13} parent=0
    _
  %s5 = ssub.s32 1, %s3
  %s6 = scalar_select 0, %s5, %s3
  // Predicated region
  $region2: #{prefil_forward.13} parent=0 // pred_check
    _
  $region3: #{prefil_forward.13} parent=0 // pred_check_branch
    %8 = sbr.rel (0) target = $region5
  $region4: #{prefil_forward.13} parent=0 // pred_region
    _
  $region5: #{prefil_forward.13} parent=0 // pred_fallthru
    _
  // Predicated region
  $region6: #{prefil_forward.13} parent=0 // pred_check
    _
  $region7: #{prefil_forward.13} parent=0 // pred_check_branch
    %10 = sbr.rel (0) target = $region9
  $region8: #{prefil_forward.13} parent=0 // pred_region
    _
  $region9: #{prefil_forward.13} parent=0 // pred_fallthru
    _
  %v11 = vld [vmem:[%s0] sm:$0xff]
  %v12 = vld [vmem:[%s0 + $0x10] sm:$0xff]
  %v13 = vld [vmem:[%s0 + $0x20] sm:$0xff]
  %v14 = vld [vmem:[%s0 + $0x30] sm:$0xff]
  %v15 = vld [vmem:[%s0 + $0x40] sm:$0xff]
  %v16 = vld [vmem:[%s0 + $0x50] sm:$0xff]
  %v17 = vld [vmem:[%s0 + $0x60] sm:$0xff]
  %v18 = vld [vmem:[%s0 + $0x70] sm:$0xff]
  %v19 = vld [vmem:[%s0 + $0x80] sm:$0xff]
  %v20 = vld [vmem:[%s0 + $0x90] sm:$0xff]
  %v21 = vld [vmem:[%s0 + $0xa0] sm:$0xff]
  %v22 = vld [vmem:[%s0 + $0xb0] sm:$0xff]
  %v23 = vld [vmem:[%s0 + $0xc0] sm:$0xff]
  %v24 = vld [vmem:[%s0 + $0xd0] sm:$0xff]
  %v25 = vld [vmem:[%s0 + $0xe0] sm:$0xff]
  %v26 = vld [vmem:[%s0 + $0xf0] sm:$0xff]
  %v27 = vld [vmem:[%s0 + $0x100] sm:$0xff]
  %v28 = vld [vmem:[%s0 + $0x120] sm:$0xff]
  %v29 = vld [vmem:[%s0 + $0x130] sm:$0xff]
  %v30 = vld [vmem:[%s0 + $0x140] sm:$0xff]
  %v31 = vld [vmem:[%s0 + $0x150] sm:$0xff]
  %v32 = vld [vmem:[%s0 + $0x160] sm:$0xff]
  %v33 = vld [vmem:[%s0 + $0x170] sm:$0xff]
  %v34 = vld [vmem:[%s0 + $0x180] sm:$0xff]
  %v35 = vld [vmem:[%s0 + $0x190] sm:$0xff]
  %v36 = vld [vmem:[%s0 + $0x1a0] sm:$0xff]
  %v37 = vld [vmem:[%s0 + $0x1b0] sm:$0xff]
  %v38 = vld [vmem:[%s0 + $0x1c0] sm:$0xff]
  %v39 = vld [vmem:[%s0 + $0x1d0] sm:$0xff]
  %v40 = vld [vmem:[%s0 + $0x1e0] sm:$0xff]
  %v41 = vld [vmem:[%s0 + $0x1f0] sm:$0xff]
  %v42 = vld [vmem:[%s0 + $0x200] sm:$0xff]
  %v43 = vld [vmem:[%s0 + $0x210] sm:$0xff]
  %v44 = vld [vmem:[%s0 + $0x220] sm:$0xff]
  %v45 = vld [vmem:[%s1] sm:$0xff]
  %v46 = vld [vmem:[%s1 + $0x10] sm:$0xff]
  %v47 = vld [vmem:[%s1 + $0x20] sm:$0xff]
  %v48 = vld [vmem:[%s1 + $0x30] sm:$0xff]
  %v49 = vld [vmem:[%s1 + $0x40] sm:$0xff]
  %v50 = vld [vmem:[%s1 + $0x50] sm:$0xff]
  %v51 = vld [vmem:[%s1 + $0x60] sm:$0xff]
  %v52 = vld [vmem:[%s1 + $0x70] sm:$0xff]
  %v53 = vld [vmem:[%s1 + $0x80] sm:$0xff]
  %v54 = vld [vmem:[%s1 + $0x90] sm:$0xff]
  %v55 = vld [vmem:[%s1 + $0xa0] sm:$0xff]
  %v56 = vld [vmem:[%s1 + $0xb0] sm:$0xff]
  %v57 = vld [vmem:[%s1 + $0xc0] sm:$0xff]
  %v58 = vld [vmem:[%s1 + $0xd0] sm:$0xff]
  %v59 = vld [vmem:[%s1 + $0xe0] sm:$0xff]
  %v60 = vld [vmem:[%s1 + $0xf0] sm:$0xff]
  %v61 = vld [vmem:[%s1 + $0x100] sm:$0xff]
  %v62 = vld [vmem:[%s1 + $0x120] sm:$0xff]
  %v63 = vld [vmem:[%s1 + $0x130] sm:$0xff]
  %v64 = vld [vmem:[%s1 + $0x140] sm:$0xff]
  %v65 = vld [vmem:[%s1 + $0x150] sm:$0xff]
  %v66 = vld [vmem:[%s1 + $0x160] sm:$0xff]
  %v67 = vld [vmem:[%s1 + $0x170] sm:$0xff]
  %v68 = vld [vmem:[%s1 + $0x180] sm:$0xff]
  %v69 = vld [vmem:[%s1 + $0x190] sm:$0xff]
  %v70 = vld [vmem:[%s1 + $0x1a0] sm:$0xff]
  %v71 = vld [vmem:[%s1 + $0x1b0] sm:$0xff]
  %v72 = vld [vmem:[%s1 + $0x1c0] sm:$0xff]
  %v73 = vld [vmem:[%s1 + $0x1d0] sm:$0xff]
  %v74 = vld [vmem:[%s1 + $0x1e0] sm:$0xff]
  %v75 = vld [vmem:[%s1 + $0x1f0] sm:$0xff]
  %v76 = vld [vmem:[%s1 + $0x200] sm:$0xff]
  %v77 = vld [vmem:[%s1 + $0x210] sm:$0xff]
  %v78 = vld [vmem:[%s1 + $0x220] sm:$0xff]
  %v79 = vld [vmem:[%s0 + $0x1] sm:$0xff]
  %v80 = vld [vmem:[%s0 + $0x11] sm:$0xff]
  %v81 = vld [vmem:[%s0 + $0x21] sm:$0xff]
  %v82 = vld [vmem:[%s0 + $0x31] sm:$0xff]
  %v83 = vld [vmem:[%s0 + $0x41] sm:$0xff]
  %v84 = vld [vmem:[%s0 + $0x51] sm:$0xff]
  %v85 = vld [vmem:[%s0 + $0x61] sm:$0xff]
  %v86 = vld [vmem:[%s0 + $0x71] sm:$0xff]
  %v87 = vld [vmem:[%s0 + $0x81] sm:$0xff]
  %v88 = vld [vmem:[%s0 + $0x91] sm:$0xff]
  %v89 = vld [vmem:[%s0 + $0xa1] sm:$0xff]
  %v90 = vld [vmem:[%s0 + $0xb1] sm:$0xff]
  %v91 = vld [vmem:[%s0 + $0xc1] sm:$0xff]
  %v92 = vld [vmem:[%s0 + $0xd1] sm:$0xff]
  %v93 = vld [vmem:[%s0 + $0xe1] sm:$0xff]
  %v94 = vld [vmem:[%s0 + $0xf1] sm:$0xff]
  %v95 = vld [vmem:[%s0 + $0x101] sm:$0xff]
  %v96 = vld [vmem:[%s0 + $0x121] sm:$0xff]
  %v97 = vld [vmem:[%s0 + $0x131] sm:$0xff]
  %v98 = vld [vmem:[%s0 + $0x141] sm:$0xff]
  %v99 = vld [vmem:[%s0 + $0x151] sm:$0xff]
  %v100 = vld [vmem:[%s0 + $0x161] sm:$0xff]
  %v101 = vld [vmem:[%s0 + $0x171] sm:$0xff]
  %v102 = vld [vmem:[%s0 + $0x181] sm:$0xff]
  %v103 = vld [vmem:[%s0 + $0x191] sm:$0xff]
  %v104 = vld [vmem:[%s0 + $0x1a1] sm:$0xff]
  %v105 = vld [vmem:[%s0 + $0x1b1] sm:$0xff]
  %v106 = vld [vmem:[%s0 + $0x1c1] sm:$0xff]
  %v107 = vld [vmem:[%s0 + $0x1d1] sm:$0xff]
  %v108 = vld [vmem:[%s0 + $0x1e1] sm:$0xff]
  %v109 = vld [vmem:[%s0 + $0x1f1] sm:$0xff]
  %v110 = vld [vmem:[%s0 + $0x201] sm:$0xff]
  %v111 = vld [vmem:[%s0 + $0x211] sm:$0xff]
  %v112 = vld [vmem:[%s0 + $0x221] sm:$0xff]
  %v113 = vmax.f32 %v11, %v45
  %v114 = vmax.f32 %v12, %v46
  %v115 = vmax.f32 %v13, %v47
  %v116 = vmax.f32 %v14, %v48
  %v117 = vmax.f32 %v15, %v49
  %v118 = vmax.f32 %v16, %v50
  %v119 = vmax.f32 %v17, %v51
  %v120 = vmax.f32 %v18, %v52
  %v121 = vmax.f32 %v19, %v53
  %v122 = vmax.f32 %v20, %v54
  %v123 = vmax.f32 %v21, %v55
  %v124 = vmax.f32 %v22, %v56
  %v125 = vmax.f32 %v23, %v57
  %v126 = vmax.f32 %v24, %v58
  %v127 = vmax.f32 %v25, %v59
  %v128 = vmax.f32 %v26, %v60
  %v129 = vmax.f32 %v27, %v61
  %v130 = vmax.f32 %v28, %v62
  %v131 = vmax.f32 %v29, %v63
  %v132 = vmax.f32 %v30, %v64
  %v133 = vmax.f32 %v31, %v65
  %v134 = vmax.f32 %v32, %v66
  %v135 = vmax.f32 %v33, %v67
  %v136 = vmax.f32 %v34, %v68
  %v137 = vmax.f32 %v35, %v69
  %v138 = vmax.f32 %v36, %v70
  %v139 = vmax.f32 %v37, %v71
  %v140 = vmax.f32 %v38, %v72
  %v141 = vmax.f32 %v39, %v73
  %v142 = vmax.f32 %v40, %v74
  %v143 = vmax.f32 %v41, %v75
  %v144 = vmax.f32 %v42, %v76
  %v145 = vmax.f32 %v43, %v77
  %v146 = vmax.f32 %v44, %v78
  %v147 = vmax.f32 %v113, %v79
  %v148 = vmax.f32 %v114, %v80
  %v149 = vmax.f32 %v115, %v81
  %v150 = vmax.f32 %v116, %v82
  %v151 = vmax.f32 %v117, %v83
  %v152 = vmax.f32 %v118, %v84
  %v153 = vmax.f32 %v119, %v85
  %v154 = vmax.f32 %v120, %v86
  %v155 = vmax.f32 %v121, %v87
  %v156 = vmax.f32 %v122, %v88
  %v157 = vmax.f32 %v123, %v89
  %v158 = vmax.f32 %v124, %v90
  %v159 = vmax.f32 %v125, %v91
  %v160 = vmax.f32 %v126, %v92
  %v161 = vmax.f32 %v127, %v93
  %v162 = vmax.f32 %v128, %v94
  %v163 = vmax.f32 %v129, %v95
  %v164 = vmax.f32 %v130, %v96
  %v165 = vmax.f32 %v131, %v97
  %v166 = vmax.f32 %v132, %v98
  %v167 = vmax.f32 %v133, %v99
  %v168 = vmax.f32 %v134, %v100
  %v169 = vmax.f32 %v135, %v101
  %v170 = vmax.f32 %v136, %v102
  %v171 = vmax.f32 %v137, %v103
  %v172 = vmax.f32 %v138, %v104
  %v173 = vmax.f32 %v139, %v105
  %v174 = vmax.f32 %v140, %v106
  %v175 = vmax.f32 %v141, %v107
  %v176 = vmax.f32 %v142, %v108
  %v177 = vmax.f32 %v143, %v109
  %v178 = vmax.f32 %v144, %v110
  %v179 = vmax.f32 %v145, %v111
  %v180 = vmax.f32 %v146, %v112
  %vm181 = vcmask 64512
  %v182 = vsel %vm181, %v147, -inf
  %v183 = vsel %vm181, %v148, -inf
  %v184 = vsel %vm181, %v149, -inf
  %v185 = vmax.f32 %v182, %v184
  %v186 = vmax.f32 %v185, %v183
  %v187 = vsel %vm181, %v164, -inf
  %v188 = vsel %vm181, %v165, -inf
  %v189 = vsel %vm181, %v166, -inf
  %v190 = vmax.f32 %v187, %v189
  %v191 = vmax.f32 %v190, %v188
  %192 = vst.msk [vmem:[%s2] sm:$0xff] %vm181, %v186
  %193 = vst.msk [vmem:[%s2 + $0x40] sm:$0xff] %vm181, %v191
  %v194 = vsel %vm181, %v150, -inf
  %v195 = vsel %vm181, %v151, -inf
  %v196 = vmax.f32 %v184, %v195
  %v197 = vmax.f32 %v196, %v194
  %v198 = vsel %vm181, %v167, -inf
  %v199 = vsel %vm181, %v168, -inf
  %v200 = vmax.f32 %v189, %v199
  %v201 = vmax.f32 %v200, %v198
  %s202 = scalar_lea.vmem %s2, 8
  %203 = vst.msk [vmem:[%s202] sm:$0xff] %vm181, %v197
  %204 = vst.msk [vmem:[%s202 + $0x40] sm:$0xff] %vm181, %v201
  %v205 = vsel %vm181, %v152, -inf
  %v206 = vsel %vm181, %v153, -inf
  %v207 = vmax.f32 %v195, %v206
  %v208 = vmax.f32 %v207, %v205
  %v209 = vsel %vm181, %v169, -inf
  %v210 = vsel %vm181, %v170, -inf
  %v211 = vmax.f32 %v199, %v210
  %v212 = vmax.f32 %v211, %v209
  %s213 = scalar_lea.vmem %s2, 16
  %214 = vst.msk [vmem:[%s213] sm:$0xff] %vm181, %v208
  %215 = vst.msk [vmem:[%s213 + $0x40] sm:$0xff] %vm181, %v212
  %v216 = vsel %vm181, %v154, -inf
  %v217 = vsel %vm181, %v155, -inf
  %v218 = vmax.f32 %v206, %v217
  %v219 = vmax.f32 %v218, %v216
  %v220 = vsel %vm181, %v171, -inf
  %v221 = vsel %vm181, %v172, -inf
  %v222 = vmax.f32 %v210, %v221
  %v223 = vmax.f32 %v222, %v220
  %s224 = scalar_lea.vmem %s2, 24
  %225 = vst.msk [vmem:[%s224] sm:$0xff] %vm181, %v219
  %226 = vst.msk [vmem:[%s224 + $0x40] sm:$0xff] %vm181, %v223
  %v227 = vsel %vm181, %v156, -inf
  %v228 = vsel %vm181, %v157, -inf
  %v229 = vmax.f32 %v217, %v228
  %v230 = vmax.f32 %v229, %v227
  %v231 = vsel %vm181, %v173, -inf
  %v232 = vsel %vm181, %v174, -inf
  %v233 = vmax.f32 %v221, %v232
  %v234 = vmax.f32 %v233, %v231
  %s235 = scalar_lea.vmem %s2, 32
  %236 = vst.msk [vmem:[%s235] sm:$0xff] %vm181, %v230
  %237 = vst.msk [vmem:[%s235 + $0x40] sm:$0xff] %vm181, %v234
  %v238 = vsel %vm181, %v158, -inf
  %v239 = vsel %vm181, %v159, -inf
  %v240 = vmax.f32 %v228, %v239
  %v241 = vmax.f32 %v240, %v238
  %v242 = vsel %vm181, %v175, -inf
  %v243 = vsel %vm181, %v176, -inf
  %v244 = vmax.f32 %v232, %v243
  %v245 = vmax.f32 %v244, %v242
  %s246 = scalar_lea.vmem %s2, 40
  %247 = vst.msk [vmem:[%s246] sm:$0xff] %vm181, %v241
  %248 = vst.msk [vmem:[%s246 + $0x40] sm:$0xff] %vm181, %v245
  %v249 = vsel %vm181, %v160, -inf
  %v250 = vsel %vm181, %v161, -inf
  %v251 = vmax.f32 %v239, %v250
  %v252 = vmax.f32 %v251, %v249
  %v253 = vsel %vm181, %v177, -inf
  %v254 = vsel %vm181, %v178, -inf
  %v255 = vmax.f32 %v243, %v254
  %v256 = vmax.f32 %v255, %v253
  %s257 = scalar_lea.vmem %s2, 48
  %258 = vst.msk [vmem:[%s257] sm:$0xff] %vm181, %v252
  %259 = vst.msk [vmem:[%s257 + $0x40] sm:$0xff] %vm181, %v256
  %v260 = vsel %vm181, %v162, -inf
  %v261 = vsel %vm181, %v163, -inf
  %v262 = vmax.f32 %v250, %v261
  %v263 = vmax.f32 %v262, %v260
  %v264 = vsel %vm181, %v179, -inf
  %v265 = vsel %vm181, %v180, -inf
  %v266 = vmax.f32 %v254, %v265
  %v267 = vmax.f32 %v266, %v264
  %s268 = scalar_lea.vmem %s2, 56
  %269 = vst.msk [vmem:[%s268] sm:$0xff] %vm181, %v263
  %270 = vst.msk [vmem:[%s268 + $0x40] sm:$0xff] %vm181, %v267
  // Predicated region
  $region10: #{prefil_forward.13} parent=0 // pred_check
    _
  $region11: #{prefil_forward.13} parent=0 // pred_check_branch
    %272 = sbr.rel (0) target = $region13
  $region12: #{prefil_forward.13} parent=0 // pred_region
    _
  $region13: #{prefil_forward.13} parent=0 // pred_fallthru
    _
  // Predicated region
  $region14: #{prefil_forward.13} parent=0 // pred_check
    _
  $region15: #{prefil_forward.13} parent=0 // pred_check_branch
    %274 = sbr.rel (0) target = $region17
  $region16: #{prefil_forward.13} parent=0 // pred_region
    _
  $region17: #{prefil_forward.13} parent=0 // pred_fallthru
    _

// kernel: prefil_forward.15
$region0: #{prefil_forward.15}
  #allocation0 [shape = 'u32[]', space=smem, size = 0x4, offset = 0x4, fixed_abs, tag = 'smem constant byte address 0x4 - core index']
  #allocation1 [shape = 'u32[72,128]{1,0:T(1,128)}', space=vmem, size = 0x9000, scoped, tag = 'internal scratch']
  %s0 = inlined_call_operand.vmem [shape: f32[2,32], index: 0, kind: input, shape index: {}]
  %s1 = inlined_call_operand.vmem [shape: f32[1,32], index: 1, kind: input, shape index: {}]
  %s2 = inlined_call_operand.vmem [shape: f32[1,32], index: 2, kind: input, shape index: {}]
  %s3 = inlined_call_operand.vmem [shape: bf16[32,32], index: 3, kind: input, shape index: {}]
  %s4 = inlined_call_operand.vmem [shape: f32[1,32], index: 4, kind: input, shape index: {}]
  %s5 = inlined_call_operand.vmem [shape: f32[2,32], index: 5, kind: output, shape index: {}]
  %s6 = sld [smem:[#allocation0]]
  $region30: #{prefil_forward.15} parent=0
    _
  %s8 = ssub.s32 1, %s6
  %s9 = scalar_select 0, %s8, %s6
  // Predicated region
  $region2: #{prefil_forward.15} parent=0 // pred_check
    _
  $region3: #{prefil_forward.15} parent=0 // pred_check_branch
    %11 = sbr.rel (0) target = $region5
  $region4: #{prefil_forward.15} parent=0 // pred_region
    _
  $region5: #{prefil_forward.15} parent=0 // pred_fallthru
    _
  // Predicated region
  $region6: #{prefil_forward.15} parent=0 // pred_check
    _
  $region7: #{prefil_forward.15} parent=0 // pred_check_branch
    %13 = sbr.rel (0) target = $region9
  $region8: #{prefil_forward.15} parent=0 // pred_region
    _
  $region9: #{prefil_forward.15} parent=0 // pred_fallthru
    _
  // Predicated region
  $region10: #{prefil_forward.15} parent=0 // pred_check
    _
  $region11: #{prefil_forward.15} parent=0 // pred_check_branch
    %15 = sbr.rel (0) target = $region13
  $region12: #{prefil_forward.15} parent=0 // pred_region
    _
  $region13: #{prefil_forward.15} parent=0 // pred_fallthru
    _
  // Predicated region
  $region14: #{prefil_forward.15} parent=0 // pred_check
    _
  $region15: #{prefil_forward.15} parent=0 // pred_check_branch
    %17 = sbr.rel (0) target = $region17
  $region16: #{prefil_forward.15} parent=0 // pred_region
    _
  $region17: #{prefil_forward.15} parent=0 // pred_fallthru
    _
  // Predicated region
  $region18: #{prefil_forward.15} parent=0 // pred_check
    _
  $region19: #{prefil_forward.15} parent=0 // pred_check_branch
    %19 = sbr.rel (0) target = $region21
  $region20: #{prefil_forward.15} parent=0 // pred_region
    _
  $region21: #{prefil_forward.15} parent=0 // pred_fallthru
    _
  %v21 = vld [vmem:[%s0] sm:$0x3]
  %vm22 = vcmask 254976
  %v23 = vsel %vm22, %v21, 0.0
  %v24 = vrot.slane %v23, 4
  %v25 = vadd.f32 %v23, %v24
  %v26 = vrot.slane %v25, 2
  %v27 = vadd.f32 %v25, %v26
  %v28 = vrot.slane %v27, 1
  %v29 = vadd.f32 %v27, %v28
  %v30 = vrcp.pop 2.0
  %v31 = vmul.f32 2.0, %v30
  %v32 = vsub.f32 1.0, %v31
  %v33 = vmul.f32 %v30, %v32
  %v34 = vadd.f32 %v30, %v33
  %vm35 = vweird.f32 %v30
  %v36 = vsel %vm35, %v30, %v34
  %v37 = vmul.f32 %v29, %v36
  %v38 = vsub.f32 %v21, %v37
  %v39 = vmul.f32 %v38, %v38
  %v40 = vsel %vm22, %v39, 0.0
  %v41 = vrot.slane %v40, 4
  %v42 = vadd.f32 %v40, %v41
  %v43 = vrot.slane %v42, 2
  %v44 = vadd.f32 %v42, %v43
  %v45 = vrot.slane %v44, 1
  %v46 = vadd.f32 %v44, %v45
  %v47 = vmul.f32 %v46, %v36
  %v48 = vadd.f32 %v47, 1e-05
  %v49 = vrsqrt.pop %v48
  %v50 = vmul.f32 %v49, %v48
  %v51 = vmul.f32 %v50, %v49
  %v52 = vmul.f32 0.5, %v51
  %v53 = vsub.f32 1.5, %v52
  %v54 = vmul.f32 %v49, %v53
  %vm55 = vweird.f32 %v48
  %vm56 = vweird.f32 %v49
  %vm57 = vmor %vm55, %vm56
  %v58 = vsel %vm57, %v49, %v54
  %v59 = vmul.f32 %v38, %v58
  %v60 = vld [vmem:[%s1] sm:$0x1]
  %v62 = vperm.slane %v60, 0
  %v64 = vmul.f32 %v59, %v62
  %v65 = vld [vmem:[%s2] sm:$0x1]
  %v67 = vperm.slane %v65, 0
  %v69 = vadd.f32 %v64, %v67
  %v70 = vpack.c.bf16 %v69, %v69
  %v71 = vld [vmem:[%s3] sm:$0xf]
  %v72 = vld [vmem:[%s3 + $0x4] sm:$0xf]
  %v73 = vld [vmem:[%s3 + $0x8] sm:$0xf]
  %v74 = vld [vmem:[%s3 + $0xc] sm:$0xf]
  %v75 = vld [vmem:[%s4] sm:$0x1]
  %v77 = vperm.slane %v75, 0
  %v83 = vunpack.c.l.b16 %v71
  %v84 = vunpack.c.l.b16 %v72
  %v85 = vunpack.c.l.b16 %v73
  %v86 = vunpack.c.l.b16 %v74
  %v87 = vpack.c.b16 %v84, %v83
  %v88 = vpack.c.b16 %v86, %v85
  %vm91 = vcmask 261120
  %v93 = vsel %vm91, %v70, 0
  %95 = vmatpush.bf16.msra.mxu0 0
  %96 = vmatpush.bf16.msra.mxu0 0
  %97 = vmatpush.bf16.msra.mxu0 0
  %98 = vmatpush.bf16.msra.mxu0 0
  %99 = vmatpush.bf16.msra.mxu0 0
  %100 = vmatpush.bf16.msra.mxu0 0
  %101 = vmatpush.bf16.msra.mxu0 %v88
  %102 = vmatpush.bf16.msra.mxu0 %v87
  %103 = vmatmul.bf16.gmra.mxu0 %v93
  %v104 = vpop.f32.mrf.mxu0
  %v105 = vadd.f32 %v77, %v104
  %v106 = vpop.f32.mrf.mxu0
  %107 = vdwg.mxu0
  %108 = vst.msk [vmem:[%s5] sm:$0x3] %vm22, %v105
  // Predicated region
  $region22: #{prefil_forward.15} parent=0 // pred_check
    _
  $region23: #{prefil_forward.15} parent=0 // pred_check_branch
    %110 = sbr.rel (0) target = $region25
  $region24: #{prefil_forward.15} parent=0 // pred_region
    _
  $region25: #{prefil_forward.15} parent=0 // pred_fallthru
    _
  // Predicated region
  $region26: #{prefil_forward.15} parent=0 // pred_check
    _
  $region27: #{prefil_forward.15} parent=0 // pred_check_branch
    %112 = sbr.rel (0) target = $region29
  $region28: #{prefil_forward.15} parent=0 // pred_region
    _
  $region29: #{prefil_forward.15} parent=0 // pred_fallthru
    _

// kernel: prefil_forward.10
$region0: #{prefil_forward.10}
  #allocation0 [shape = 'u32[]', space=smem, size = 0x4, offset = 0x4, fixed_abs, tag = 'smem constant byte address 0x4 - core index']
  #allocation1 [shape = 'u32[72,128]{1,0:T(1,128)}', space=vmem, size = 0x9000, scoped, tag = 'internal scratch']
  #allocation2 [shape = 'f32[16,128]{1,0:T(8,128)}', space=vmem, size = 0x2000, scoped, tag = 'scratch operand']
  %s0 = inlined_call_operand.vmem [shape: f32[16,16], index: 0, kind: input, shape index: {}]
  %s1 = inlined_call_operand.vmem [shape: s32[2,1], index: 1, kind: input, shape index: {}]
  %s2 = inlined_call_operand.vmem [shape: f32[16,128], index: 2, kind: input, shape index: {}]
  %s3 = inlined_call_operand.vmem [shape: f32[32,128], index: 3, kind: input, shape index: {}]
  %s4 = inlined_call_operand.vmem [shape: f32[1,128], index: 4, kind: input, shape index: {}]
  %s5 = inlined_call_operand.vmem [shape: f32[2,32], index: 5, kind: output, shape index: {}]
  %s6 = sld [smem:[#allocation0]]
  $region30: #{prefil_forward.10} parent=0
    _
  %s8 = ssub.s32 1, %s6
  %s9 = scalar_select 0, %s8, %s6
  // Predicated region
  $region2: #{prefil_forward.10} parent=0 // pred_check
    _
  $region3: #{prefil_forward.10} parent=0 // pred_check_branch
    %11 = sbr.rel (0) target = $region5
  $region4: #{prefil_forward.10} parent=0 // pred_region
    _
  $region5: #{prefil_forward.10} parent=0 // pred_fallthru
    _
  // Predicated region
  $region6: #{prefil_forward.10} parent=0 // pred_check
    _
  $region7: #{prefil_forward.10} parent=0 // pred_check_branch
    %13 = sbr.rel (0) target = $region9
  $region8: #{prefil_forward.10} parent=0 // pred_region
    _
  $region9: #{prefil_forward.10} parent=0 // pred_fallthru
    _
  // Predicated region
  $region10: #{prefil_forward.10} parent=0 // pred_check
    _
  $region11: #{prefil_forward.10} parent=0 // pred_check_branch
    %15 = sbr.rel (0) target = $region13
  $region12: #{prefil_forward.10} parent=0 // pred_region
    _
  $region13: #{prefil_forward.10} parent=0 // pred_fallthru
    _
  // Predicated region
  $region14: #{prefil_forward.10} parent=0 // pred_check
    _
  $region15: #{prefil_forward.10} parent=0 // pred_check_branch
    %17 = sbr.rel (0) target = $region17
  $region16: #{prefil_forward.10} parent=0 // pred_region
    _
  $region17: #{prefil_forward.10} parent=0 // pred_fallthru
    _
  // Predicated region
  $region18: #{prefil_forward.10} parent=0 // pred_check
    _
  $region19: #{prefil_forward.10} parent=0 // pred_check_branch
    %19 = sbr.rel (0) target = $region21
  $region20: #{prefil_forward.10} parent=0 // pred_region
    _
  $region21: #{prefil_forward.10} parent=0 // pred_fallthru
    _
  %v20 = vld [vmem:[%s0] sm:$0xff]
  %v21 = vld [vmem:[%s0 + $0x8] sm:$0xff]
  %v22 = vld [vmem:[%s2] sm:$0xff]
  %v23 = vld [vmem:[%s2 + $0x8] sm:$0xff]
  %v24 = vld [vmem:[%s4] sm:$0x1]
  %v26 = vperm.slane %v24, 0
  %vm28 = vcmask 130048
  %v30 = vsel %vm28, %v20, 0
  %v33 = vsel %vm28, %v21, 0
  %35 = vmatpush.msra.mxu0 0.0
  %36 = vmatpush.msra.mxu0 0.0
  %37 = vmatpush.msra.mxu0 0.0
  %38 = vmatpush.msra.mxu0 0.0
  %39 = vmatpush.msra.mxu0 0.0
  %40 = vmatpush.msra.mxu0 0.0
  %41 = vmatpush.msra.mxu0 0.0
  %42 = vmatpush.msra.mxu0 0.0
  %43 = vmatpush.msra.mxu0 0.0
  %44 = vmatpush.msra.mxu0 0.0
  %45 = vmatpush.msra.mxu0 0.0
  %46 = vmatpush.msra.mxu0 0.0
  %47 = vmatpush.msra.mxu0 0.0
  %48 = vmatpush.msra.mxu0 0.0
  %49 = vmatpush.msra.mxu0 %v23
  %50 = vmatpush.msra.mxu0 %v22
  %51 = vmatmul.f32.gmra.mxu0 %v30
  %v52 = vpop.f32.mrf.mxu0
  %v53 = vadd.f32 %v26, %v52
  %54 = vmatmul.f32.gmra.mxu0 %v33
  %v55 = vpop.f32.mrf.mxu0
  %v56 = vadd.f32 %v26, %v55
  %57 = vdwg.mxu0
  %58 = vst [vmem:[#allocation2] sm:$0xff] %v53
  %59 = vst [vmem:[#allocation2 + $0x8] sm:$0xff] %v56
  %v60 = vld [vmem:[%s3] sm:$0xff]
  %v61 = vld [vmem:[%s3 + $0x8] sm:$0xff]
  %v62 = vld [vmem:[%s3 + $0x10] sm:$0xff]
  %v63 = vld [vmem:[%s3 + $0x18] sm:$0xff]
  %v64 = vld [vmem:[%s1] sm:$0x3]
  %v65 = vlaneseq
  %v66 = vand.u32 %v65, 127
  %vm67 = vcmp.ge.s32.totalorder %v66, 64
  %vm68 = vcmp.lt.s32.totalorder %v66, 96
  %vm69 = vmand %vm67, %vm68
  %v70 = vld [vmem:[#allocation2] sm:$0x3]
  %vm71 = vcmask 261120
  %v73 = vsel %vm71, 0.0, 0
  %75 = vmatpush.msra.mxu0 0.0
  %76 = vmatpush.msra.mxu0 0.0
  %77 = vmatpush.msra.mxu0 0.0
  %78 = vmatpush.msra.mxu0 0.0
  %79 = vmatpush.msra.mxu0 0.0
  %80 = vmatpush.msra.mxu0 0.0
  %81 = vmatpush.msra.mxu0 0.0
  %82 = vmatpush.msra.mxu0 0.0
  %83 = vmatpush.msra.mxu0 0.0
  %84 = vmatpush.msra.mxu0 0.0
  %85 = vmatpush.msra.mxu0 0.0
  %86 = vmatpush.msra.mxu0 0.0
  %87 = vmatpush.msra.mxu0 %v63
  %88 = vmatpush.msra.mxu0 %v62
  %89 = vmatpush.msra.mxu0 %v61
  %90 = vmatpush.msra.mxu0 %v60
  %91 = vmatmul.f32.gmra.mxu0 %v73
  %v92 = vpop.f32.mrf.mxu0
  %v93 = vadd.f32 0.0, %v92
  %94 = vdwg.mxu0
  %v95 = vadd.f32 %v70, %v93
  %v96 = vtanh.pop %v95
  %v97 = vxor.u32 %v95, 2147483648
  %v98 = vmul.f32 %v97, 1.442695
  %v99 = vpow.pop %v98
  %v100 = vadd.f32 %v99, 1.0
  %v101 = vrcp.pop %v100
  %v102 = vmul.f32 %v100, %v101
  %v103 = vsub.f32 1.0, %v102
  %v104 = vmul.f32 %v101, %v103
  %v105 = vadd.f32 %v101, %v104
  %vm106 = vweird.f32 %v100
  %vm107 = vweird.f32 %v101
  %vm108 = vmor %vm106, %vm107
  %v109 = vsel %vm108, %v101, %v105
  %v110 = vand.u32 2147483647, %v100
  %vm111 = vcmp.eq.f32.partialorder %v110, 8.507059e+37
  %v112 = vand.u32 %v100, 2147483648
  %v113 = vor.u32 1.1754944e-38, %v112
  %v114 = vsel %vm111, %v113, %v109
  %v115 = vmul.f32 1.0, %v114
  %v116 = vsel %vm69, %v96, %v115
  %v117 = vmul.f32 %v116, 0.0
  %119 = vrot.lane.b32.xlu0 %v116, 64
  %v120 = vpop.permute.xlu0 %119
  %v122 = vmul.f32 %v116, %v120
  %124 = vrot.lane.b32.xlu0 %v122, 32
  %v125 = vpop.permute.xlu0 %124
  %v127 = vadd.f32 %v117, %v125
  %v128 = vtanh.pop %v127
  %130 = vrot.lane.b32.xlu0 %v128, 64
  %v131 = vpop.permute.xlu0 %130
  %v133 = vmul.f32 %v116, %v131
  %vm134 = vcmp.gt.s32.totalorder %v64, 0
  %v135 = vsel %vm134, 1, 0
  %136 = vset.pattern.permute.xlu0 0
  %137 = vperm.xlu0 %136, %v135
  %v138 = vpop.permute.xlu0 %137
  %vm139 = vcmp.eq.s32.totalorder %v138, 1
  %v140 = vsel %vm139, %v133, 0.0
  %v141 = vsel %vm139, %v127, 0.0
  %v142 = vld [vmem:[#allocation2 + $0x2] sm:$0x3]
  %144 = vrot.lane.b32.xlu0 %v140, 32
  %v145 = vpop.permute.xlu0 %144
  %v146 = vsel %vm71, %v145, 0
  %148 = vmatpush.msra.mxu0 0.0
  %149 = vmatpush.msra.mxu0 0.0
  %150 = vmatpush.msra.mxu0 0.0
  %151 = vmatpush.msra.mxu0 0.0
  %152 = vmatpush.msra.mxu0 0.0
  %153 = vmatpush.msra.mxu0 0.0
  %154 = vmatpush.msra.mxu0 0.0
  %155 = vmatpush.msra.mxu0 0.0
  %156 = vmatpush.msra.mxu0 0.0
  %157 = vmatpush.msra.mxu0 0.0
  %158 = vmatpush.msra.mxu0 0.0
  %159 = vmatpush.msra.mxu0 0.0
  %160 = vmatpush.msra.mxu0 %v63
  %161 = vmatpush.msra.mxu0 %v62
  %162 = vmatpush.msra.mxu0 %v61
  %163 = vmatpush.msra.mxu0 %v60
  %164 = vmatmul.f32.gmra.mxu0 %v146
  %v165 = vpop.f32.mrf.mxu0
  %v166 = vadd.f32 0.0, %v165
  %167 = vdwg.mxu0
  %v168 = vadd.f32 %v142, %v166
  %v169 = vtanh.pop %v168
  %v170 = vxor.u32 %v168, 2147483648
  %v171 = vmul.f32 %v170, 1.442695
  %v172 = vpow.pop %v171
  %v173 = vadd.f32 %v172, 1.0
  %v174 = vrcp.pop %v173
  %v175 = vmul.f32 %v173, %v174
  %v176 = vsub.f32 1.0, %v175
  %v177 = vmul.f32 %v174, %v176
  %v178 = vadd.f32 %v174, %v177
  %vm179 = vweird.f32 %v173
  %vm180 = vweird.f32 %v174
  %vm181 = vmor %vm179, %vm180
  %v182 = vsel %vm181, %v174, %v178
  %v183 = vand.u32 2147483647, %v173
  %vm184 = vcmp.eq.f32.partialorder %v183, 8.507059e+37
  %v185 = vand.u32 %v173, 2147483648
  %v186 = vor.u32 1.1754944e-38, %v185
  %v187 = vsel %vm184, %v186, %v182
  %v188 = vmul.f32 1.0, %v187
  %v189 = vsel %vm69, %v169, %v188
  %v190 = vmul.f32 %v189, %v141
  %192 = vrot.lane.b32.xlu0 %v189, 64
  %v193 = vpop.permute.xlu0 %192
  %v195 = vmul.f32 %v189, %v193
  %197 = vrot.lane.b32.xlu0 %v195, 32
  %v198 = vpop.permute.xlu0 %197
  %v200 = vadd.f32 %v190, %v198
  %v201 = vtanh.pop %v200
  %203 = vrot.lane.b32.xlu0 %v201, 64
  %v204 = vpop.permute.xlu0 %203
  %v206 = vmul.f32 %v189, %v204
  %vm207 = vcmp.gt.s32.totalorder %v64, 1
  %v208 = vsel %vm207, 1, 0
  %209 = vset.pattern.permute.xlu0 0
  %210 = vperm.xlu0 %209, %v208
  %v211 = vpop.permute.xlu0 %210
  %vm212 = vcmp.eq.s32.totalorder %v211, 1
  %v213 = vsel %vm212, %v206, %v140
  %v214 = vsel %vm212, %v200, %v141
  %v215 = vld [vmem:[#allocation2 + $0x4] sm:$0x3]
  %217 = vrot.lane.b32.xlu0 %v213, 32
  %v218 = vpop.permute.xlu0 %217
  %v219 = vsel %vm71, %v218, 0
  %221 = vmatpush.msra.mxu0 0.0
  %222 = vmatpush.msra.mxu0 0.0
  %223 = vmatpush.msra.mxu0 0.0
  %224 = vmatpush.msra.mxu0 0.0
  %225 = vmatpush.msra.mxu0 0.0
  %226 = vmatpush.msra.mxu0 0.0
  %227 = vmatpush.msra.mxu0 0.0
  %228 = vmatpush.msra.mxu0 0.0
  %229 = vmatpush.msra.mxu0 0.0
  %230 = vmatpush.msra.mxu0 0.0
  %231 = vmatpush.msra.mxu0 0.0
  %232 = vmatpush.msra.mxu0 0.0
  %233 = vmatpush.msra.mxu0 %v63
  %234 = vmatpush.msra.mxu0 %v62
  %235 = vmatpush.msra.mxu0 %v61
  %236 = vmatpush.msra.mxu0 %v60
  %237 = vmatmul.f32.gmra.mxu0 %v219
  %v238 = vpop.f32.mrf.mxu0
  %v239 = vadd.f32 0.0, %v238
  %240 = vdwg.mxu0
  %v241 = vadd.f32 %v215, %v239
  %v242 = vtanh.pop %v241
  %v243 = vxor.u32 %v241, 2147483648
  %v244 = vmul.f32 %v243, 1.442695
  %v245 = vpow.pop %v244
  %v246 = vadd.f32 %v245, 1.0
  %v247 = vrcp.pop %v246
  %v248 = vmul.f32 %v246, %v247
  %v249 = vsub.f32 1.0, %v248
  %v250 = vmul.f32 %v247, %v249
  %v251 = vadd.f32 %v247, %v250
  %vm252 = vweird.f32 %v246
  %vm253 = vweird.f32 %v247
  %vm254 = vmor %vm252, %vm253
  %v255 = vsel %vm254, %v247, %v251
  %v256 = vand.u32 2147483647, %v246
  %vm257 = vcmp.eq.f32.partialorder %v256, 8.507059e+37
  %v258 = vand.u32 %v246, 2147483648
  %v259 = vor.u32 1.1754944e-38, %v258
  %v260 = vsel %vm257, %v259, %v255
  %v261 = vmul.f32 1.0, %v260
  %v262 = vsel %vm69, %v242, %v261
  %v263 = vmul.f32 %v262, %v214
  %265 = vrot.lane.b32.xlu0 %v262, 64
  %v266 = vpop.permute.xlu0 %265
  %v268 = vmul.f32 %v262, %v266
  %270 = vrot.lane.b32.xlu0 %v268, 32
  %v271 = vpop.permute.xlu0 %270
  %v273 = vadd.f32 %v263, %v271
  %v274 = vtanh.pop %v273
  %276 = vrot.lane.b32.xlu0 %v274, 64
  %v277 = vpop.permute.xlu0 %276
  %v279 = vmul.f32 %v262, %v277
  %vm280 = vcmp.gt.s32.totalorder %v64, 2
  %v281 = vsel %vm280, 1, 0
  %282 = vset.pattern.permute.xlu0 0
  %283 = vperm.xlu0 %282, %v281
  %v284 = vpop.permute.xlu0 %283
  %vm285 = vcmp.eq.s32.totalorder %v284, 1
  %v286 = vsel %vm285, %v279, %v213
  %v287 = vsel %vm285, %v273, %v214
  %v288 = vld [vmem:[#allocation2 + $0x6] sm:$0x3]
  %290 = vrot.lane.b32.xlu0 %v286, 32
  %v291 = vpop.permute.xlu0 %290
  %v292 = vsel %vm71, %v291, 0
  %294 = vmatpush.msra.mxu0 0.0
  %295 = vmatpush.msra.mxu0 0.0
  %296 = vmatpush.msra.mxu0 0.0
  %297 = vmatpush.msra.mxu0 0.0
  %298 = vmatpush.msra.mxu0 0.0
  %299 = vmatpush.msra.mxu0 0.0
  %300 = vmatpush.msra.mxu0 0.0
  %301 = vmatpush.msra.mxu0 0.0
  %302 = vmatpush.msra.mxu0 0.0
  %303 = vmatpush.msra.mxu0 0.0
  %304 = vmatpush.msra.mxu0 0.0
  %305 = vmatpush.msra.mxu0 0.0
  %306 = vmatpush.msra.mxu0 %v63
  %307 = vmatpush.msra.mxu0 %v62
  %308 = vmatpush.msra.mxu0 %v61
  %309 = vmatpush.msra.mxu0 %v60
  %310 = vmatmul.f32.gmra.mxu0 %v292
  %v311 = vpop.f32.mrf.mxu0
  %v312 = vadd.f32 0.0, %v311
  %313 = vdwg.mxu0
  %v314 = vadd.f32 %v288, %v312
  %v315 = vtanh.pop %v314
  %v316 = vxor.u32 %v314, 2147483648
  %v317 = vmul.f32 %v316, 1.442695
  %v318 = vpow.pop %v317
  %v319 = vadd.f32 %v318, 1.0
  %v320 = vrcp.pop %v319
  %v321 = vmul.f32 %v319, %v320
  %v322 = vsub.f32 1.0, %v321
  %v323 = vmul.f32 %v320, %v322
  %v324 = vadd.f32 %v320, %v323
  %vm325 = vweird.f32 %v319
  %vm326 = vweird.f32 %v320
  %vm327 = vmor %vm325, %vm326
  %v328 = vsel %vm327, %v320, %v324
  %v329 = vand.u32 2147483647, %v319
  %vm330 = vcmp.eq.f32.partialorder %v329, 8.507059e+37
  %v331 = vand.u32 %v319, 2147483648
  %v332 = vor.u32 1.1754944e-38, %v331
  %v333 = vsel %vm330, %v332, %v328
  %v334 = vmul.f32 1.0, %v333
  %v335 = vsel %vm69, %v315, %v334
  %v336 = vmul.f32 %v335, %v287
  %338 = vrot.lane.b32.xlu0 %v335, 64
  %v339 = vpop.permute.xlu0 %338
  %v341 = vmul.f32 %v335, %v339
  %343 = vrot.lane.b32.xlu0 %v341, 32
  %v344 = vpop.permute.xlu0 %343
  %v346 = vadd.f32 %v336, %v344
  %v347 = vtanh.pop %v346
  %349 = vrot.lane.b32.xlu0 %v347, 64
  %v350 = vpop.permute.xlu0 %349
  %v352 = vmul.f32 %v335, %v350
  %vm353 = vcmp.gt.s32.totalorder %v64, 3
  %v354 = vsel %vm353, 1, 0
  %355 = vset.pattern.permute.xlu0 0
  %356 = vperm.xlu0 %355, %v354
  %v357 = vpop.permute.xlu0 %356
  %vm358 = vcmp.eq.s32.totalorder %v357, 1
  %v359 = vsel %vm358, %v352, %v286
  %v360 = vsel %vm358, %v346, %v287
  %v361 = vld [vmem:[#allocation2 + $0x8] sm:$0x3]
  %363 = vrot.lane.b32.xlu0 %v359, 32
  %v364 = vpop.permute.xlu0 %363
  %v365 = vsel %vm71, %v364, 0
  %367 = vmatpush.msra.mxu0 0.0
  %368 = vmatpush.msra.mxu0 0.0
  %369 = vmatpush.msra.mxu0 0.0
  %370 = vmatpush.msra.mxu0 0.0
  %371 = vmatpush.msra.mxu0 0.0
  %372 = vmatpush.msra.mxu0 0.0
  %373 = vmatpush.msra.mxu0 0.0
  %374 = vmatpush.msra.mxu0 0.0
  %375 = vmatpush.msra.mxu0 0.0
  %376 = vmatpush.msra.mxu0 0.0
  %377 = vmatpush.msra.mxu0 0.0
  %378 = vmatpush.msra.mxu0 0.0
  %379 = vmatpush.msra.mxu0 %v63
  %380 = vmatpush.msra.mxu0 %v62
  %381 = vmatpush.msra.mxu0 %v61
  %382 = vmatpush.msra.mxu0 %v60
  %383 = vmatmul.f32.gmra.mxu0 %v365
  %v384 = vpop.f32.mrf.mxu0
  %v385 = vadd.f32 0.0, %v384
  %386 = vdwg.mxu0
  %v387 = vadd.f32 %v361, %v385
  %v388 = vtanh.pop %v387
  %v389 = vxor.u32 %v387, 2147483648
  %v390 = vmul.f32 %v389, 1.442695
  %v391 = vpow.pop %v390
  %v392 = vadd.f32 %v391, 1.0
  %v393 = vrcp.pop %v392
  %v394 = vmul.f32 %v392, %v393
  %v395 = vsub.f32 1.0, %v394
  %v396 = vmul.f32 %v393, %v395
  %v397 = vadd.f32 %v393, %v396
  %vm398 = vweird.f32 %v392
  %vm399 = vweird.f32 %v393
  %vm400 = vmor %vm398, %vm399
  %v401 = vsel %vm400, %v393, %v397
  %v402 = vand.u32 2147483647, %v392
  %vm403 = vcmp.eq.f32.partialorder %v402, 8.507059e+37
  %v404 = vand.u32 %v392, 2147483648
  %v405 = vor.u32 1.1754944e-38, %v404
  %v406 = vsel %vm403, %v405, %v401
  %v407 = vmul.f32 1.0, %v406
  %v408 = vsel %vm69, %v388, %v407
  %v409 = vmul.f32 %v408, %v360
  %411 = vrot.lane.b32.xlu0 %v408, 64
  %v412 = vpop.permute.xlu0 %411
  %v414 = vmul.f32 %v408, %v412
  %416 = vrot.lane.b32.xlu0 %v414, 32
  %v417 = vpop.permute.xlu0 %416
  %v419 = vadd.f32 %v409, %v417
  %v420 = vtanh.pop %v419
  %422 = vrot.lane.b32.xlu0 %v420, 64
  %v423 = vpop.permute.xlu0 %422
  %v425 = vmul.f32 %v408, %v423
  %vm426 = vcmp.gt.s32.totalorder %v64, 4
  %v427 = vsel %vm426, 1, 0
  %428 = vset.pattern.permute.xlu0 0
  %429 = vperm.xlu0 %428, %v427
  %v430 = vpop.permute.xlu0 %429
  %vm431 = vcmp.eq.s32.totalorder %v430, 1
  %v432 = vsel %vm431, %v425, %v359
  %v433 = vsel %vm431, %v419, %v360
  %v434 = vld [vmem:[#allocation2 + $0xa] sm:$0x3]
  %436 = vrot.lane.b32.xlu0 %v432, 32
  %v437 = vpop.permute.xlu0 %436
  %v438 = vsel %vm71, %v437, 0
  %440 = vmatpush.msra.mxu0 0.0
  %441 = vmatpush.msra.mxu0 0.0
  %442 = vmatpush.msra.mxu0 0.0
  %443 = vmatpush.msra.mxu0 0.0
  %444 = vmatpush.msra.mxu0 0.0
  %445 = vmatpush.msra.mxu0 0.0
  %446 = vmatpush.msra.mxu0 0.0
  %447 = vmatpush.msra.mxu0 0.0
  %448 = vmatpush.msra.mxu0 0.0
  %449 = vmatpush.msra.mxu0 0.0
  %450 = vmatpush.msra.mxu0 0.0
  %451 = vmatpush.msra.mxu0 0.0
  %452 = vmatpush.msra.mxu0 %v63
  %453 = vmatpush.msra.mxu0 %v62
  %454 = vmatpush.msra.mxu0 %v61
  %455 = vmatpush.msra.mxu0 %v60
  %456 = vmatmul.f32.gmra.mxu0 %v438
  %v457 = vpop.f32.mrf.mxu0
  %v458 = vadd.f32 0.0, %v457
  %459 = vdwg.mxu0
  %v460 = vadd.f32 %v434, %v458
  %v461 = vtanh.pop %v460
  %v462 = vxor.u32 %v460, 2147483648
  %v463 = vmul.f32 %v462, 1.442695
  %v464 = vpow.pop %v463
  %v465 = vadd.f32 %v464, 1.0
  %v466 = vrcp.pop %v465
  %v467 = vmul.f32 %v465, %v466
  %v468 = vsub.f32 1.0, %v467
  %v469 = vmul.f32 %v466, %v468
  %v470 = vadd.f32 %v466, %v469
  %vm471 = vweird.f32 %v465
  %vm472 = vweird.f32 %v466
  %vm473 = vmor %vm471, %vm472
  %v474 = vsel %vm473, %v466, %v470
  %v475 = vand.u32 2147483647, %v465
  %vm476 = vcmp.eq.f32.partialorder %v475, 8.507059e+37
  %v477 = vand.u32 %v465, 2147483648
  %v478 = vor.u32 1.1754944e-38, %v477
  %v479 = vsel %vm476, %v478, %v474
  %v480 = vmul.f32 1.0, %v479
  %v481 = vsel %vm69, %v461, %v480
  %v482 = vmul.f32 %v481, %v433
  %484 = vrot.lane.b32.xlu0 %v481, 64
  %v485 = vpop.permute.xlu0 %484
  %v487 = vmul.f32 %v481, %v485
  %489 = vrot.lane.b32.xlu0 %v487, 32
  %v490 = vpop.permute.xlu0 %489
  %v492 = vadd.f32 %v482, %v490
  %v493 = vtanh.pop %v492
  %495 = vrot.lane.b32.xlu0 %v493, 64
  %v496 = vpop.permute.xlu0 %495
  %v498 = vmul.f32 %v481, %v496
  %vm499 = vcmp.gt.s32.totalorder %v64, 5
  %v500 = vsel %vm499, 1, 0
  %501 = vset.pattern.permute.xlu0 0
  %502 = vperm.xlu0 %501, %v500
  %v503 = vpop.permute.xlu0 %502
  %vm504 = vcmp.eq.s32.totalorder %v503, 1
  %v505 = vsel %vm504, %v498, %v432
  %v506 = vsel %vm504, %v492, %v433
  %v507 = vld [vmem:[#allocation2 + $0xc] sm:$0x3]
  %509 = vrot.lane.b32.xlu0 %v505, 32
  %v510 = vpop.permute.xlu0 %509
  %v511 = vsel %vm71, %v510, 0
  %513 = vmatpush.msra.mxu0 0.0
  %514 = vmatpush.msra.mxu0 0.0
  %515 = vmatpush.msra.mxu0 0.0
  %516 = vmatpush.msra.mxu0 0.0
  %517 = vmatpush.msra.mxu0 0.0
  %518 = vmatpush.msra.mxu0 0.0
  %519 = vmatpush.msra.mxu0 0.0
  %520 = vmatpush.msra.mxu0 0.0
  %521 = vmatpush.msra.mxu0 0.0
  %522 = vmatpush.msra.mxu0 0.0
  %523 = vmatpush.msra.mxu0 0.0
  %524 = vmatpush.msra.mxu0 0.0
  %525 = vmatpush.msra.mxu0 %v63
  %526 = vmatpush.msra.mxu0 %v62
  %527 = vmatpush.msra.mxu0 %v61
  %528 = vmatpush.msra.mxu0 %v60
  %529 = vmatmul.f32.gmra.mxu0 %v511
  %v530 = vpop.f32.mrf.mxu0
  %v531 = vadd.f32 0.0, %v530
  %532 = vdwg.mxu0
  %v533 = vadd.f32 %v507, %v531
  %v534 = vtanh.pop %v533
  %v535 = vxor.u32 %v533, 2147483648
  %v536 = vmul.f32 %v535, 1.442695
  %v537 = vpow.pop %v536
  %v538 = vadd.f32 %v537, 1.0
  %v539 = vrcp.pop %v538
  %v540 = vmul.f32 %v538, %v539
  %v541 = vsub.f32 1.0, %v540
  %v542 = vmul.f32 %v539, %v541
  %v543 = vadd.f32 %v539, %v542
  %vm544 = vweird.f32 %v538
  %vm545 = vweird.f32 %v539
  %vm546 = vmor %vm544, %vm545
  %v547 = vsel %vm546, %v539, %v543
  %v548 = vand.u32 2147483647, %v538
  %vm549 = vcmp.eq.f32.partialorder %v548, 8.507059e+37
  %v550 = vand.u32 %v538, 2147483648
  %v551 = vor.u32 1.1754944e-38, %v550
  %v552 = vsel %vm549, %v551, %v547
  %v553 = vmul.f32 1.0, %v552
  %v554 = vsel %vm69, %v534, %v553
  %v555 = vmul.f32 %v554, %v506
  %557 = vrot.lane.b32.xlu0 %v554, 64
  %v558 = vpop.permute.xlu0 %557
  %v560 = vmul.f32 %v554, %v558
  %562 = vrot.lane.b32.xlu0 %v560, 32
  %v563 = vpop.permute.xlu0 %562
  %v565 = vadd.f32 %v555, %v563
  %v566 = vtanh.pop %v565
  %568 = vrot.lane.b32.xlu0 %v566, 64
  %v569 = vpop.permute.xlu0 %568
  %v571 = vmul.f32 %v554, %v569
  %vm572 = vcmp.gt.s32.totalorder %v64, 6
  %v573 = vsel %vm572, 1, 0
  %574 = vset.pattern.permute.xlu0 0
  %575 = vperm.xlu0 %574, %v573
  %v576 = vpop.permute.xlu0 %575
  %vm577 = vcmp.eq.s32.totalorder %v576, 1
  %v578 = vsel %vm577, %v571, %v505
  %v579 = vsel %vm577, %v565, %v506
  %v580 = vld [vmem:[#allocation2 + $0xe] sm:$0x3]
  %582 = vrot.lane.b32.xlu0 %v578, 32
  %v583 = vpop.permute.xlu0 %582
  %v584 = vsel %vm71, %v583, 0
  %586 = vmatpush.msra.mxu0 0.0
  %587 = vmatpush.msra.mxu0 0.0
  %588 = vmatpush.msra.mxu0 0.0
  %589 = vmatpush.msra.mxu0 0.0
  %590 = vmatpush.msra.mxu0 0.0
  %591 = vmatpush.msra.mxu0 0.0
  %592 = vmatpush.msra.mxu0 0.0
  %593 = vmatpush.msra.mxu0 0.0
  %594 = vmatpush.msra.mxu0 0.0
  %595 = vmatpush.msra.mxu0 0.0
  %596 = vmatpush.msra.mxu0 0.0
  %597 = vmatpush.msra.mxu0 0.0
  %598 = vmatpush.msra.mxu0 %v63
  %599 = vmatpush.msra.mxu0 %v62
  %600 = vmatpush.msra.mxu0 %v61
  %601 = vmatpush.msra.mxu0 %v60
  %602 = vmatmul.f32.gmra.mxu0 %v584
  %v603 = vpop.f32.mrf.mxu0
  %v604 = vadd.f32 0.0, %v603
  %605 = vdwg.mxu0
  %v606 = vadd.f32 %v580, %v604
  %v607 = vtanh.pop %v606
  %v608 = vxor.u32 %v606, 2147483648
  %v609 = vmul.f32 %v608, 1.442695
  %v610 = vpow.pop %v609
  %v611 = vadd.f32 %v610, 1.0
  %v612 = vrcp.pop %v611
  %v613 = vmul.f32 %v611, %v612
  %v614 = vsub.f32 1.0, %v613
  %v615 = vmul.f32 %v612, %v614
  %v616 = vadd.f32 %v612, %v615
  %vm617 = vweird.f32 %v611
  %vm618 = vweird.f32 %v612
  %vm619 = vmor %vm617, %vm618
  %v620 = vsel %vm619, %v612, %v616
  %v621 = vand.u32 2147483647, %v611
  %vm622 = vcmp.eq.f32.partialorder %v621, 8.507059e+37
  %v623 = vand.u32 %v611, 2147483648
  %v624 = vor.u32 1.1754944e-38, %v623
  %v625 = vsel %vm622, %v624, %v620
  %v626 = vmul.f32 1.0, %v625
  %v627 = vsel %vm69, %v607, %v626
  %v628 = vmul.f32 %v627, %v579
  %630 = vrot.lane.b32.xlu0 %v627, 64
  %v631 = vpop.permute.xlu0 %630
  %v633 = vmul.f32 %v627, %v631
  %635 = vrot.lane.b32.xlu0 %v633, 32
  %v636 = vpop.permute.xlu0 %635
  %v638 = vadd.f32 %v628, %v636
  %vm639 = vcmp.gt.s32.totalorder %v64, 7
  %v640 = vsel %vm639, 1, 0
  %641 = vset.pattern.permute.xlu0 0
  %642 = vperm.xlu0 %641, %v640
  %v643 = vpop.permute.xlu0 %642
  %vm644 = vcmp.eq.s32.totalorder %v643, 1
  %v645 = vsel %vm644, %v638, %v579
  %647 = vrot.lane.b32.xlu0 %v645, 96
  %v648 = vpop.permute.xlu0 %647
  %vm650 = vcmask 254976
  %651 = vst.msk [vmem:[%s5] sm:$0x3] %vm650, %v648
  // Predicated region
  $region22: #{prefil_forward.10} parent=0 // pred_check
    _
  $region23: #{prefil_forward.10} parent=0 // pred_check_branch
    %653 = sbr.rel (0) target = $region25
  $region24: #{prefil_forward.10} parent=0 // pred_region
    _
  $region25: #{prefil_forward.10} parent=0 // pred_fallthru
    _
  // Predicated region
  $region26: #{prefil_forward.10} parent=0 // pred_check
    _
  $region27: #{prefil_forward.10} parent=0 // pred_check_branch
    %655 = sbr.rel (0) target = $region29
  $region28: #{prefil_forward.10} parent=0 // pred_region
    _
  $region29: #{prefil_forward.10} parent=0 // pred_fallthru
    _

// kernel: tile.78
$region0: #{tile.78}
  #allocation0 [shape = 's32[1]{0}', space=sflag, size = 0x4, scoped, tag = 'scoped memory for tile.78']
  %s0 = inlined_call_operand.vmem [shape: f32[32], index: 0, kind: input, shape index: {}]
  %s1 = inlined_call_operand.vmem [shape: f32[4,32], index: 1, kind: output, shape index: {}]
  // Predicated region
  $region2: #{tile.78} parent=0 // pred_check
    _
  $region3: #{tile.78} parent=0 // pred_check_branch
    %3 = sbr.rel (0) target = $region5
  $region4: #{tile.78} parent=0 // pred_region
    _
  $region5: #{tile.78} parent=0 // pred_fallthru
    _
  %v4 = vld [vmem:[%s0] ss:$0 sm:$0xff]
  %5 = vst [vmem:[%s1] sm:$0xf] %v4

// kernel: tile.79
$region0: #{tile.79}
  %s0 = inlined_call_operand.vmem [shape: f32[4,32], index: 0, kind: input, shape index: {}]
  %s1 = inlined_call_operand.vmem [shape: f32[1,128], index: 1, kind: output, shape index: {}]
  $region1: #{tile.79} parent=0
    #allocation0 [shape = 'u8[4096]{0}', space=vmem, size = 0x1000, scoped, tag = 'scoped mem for output reshape']
    #allocation1 [shape = 'u8[4096]{0}', space=vmem, size = 0x1000, scoped, tag = 'scoped mem for input reshape']
    %s3 = ssub.s32 16, 1
    %v4 = vld [vmem:[%s0] sm:%s3]
    %5 = vst [vmem:[#allocation1] sm:%s3] %v4
    %v6 = vld [vmem:[#allocation1] sm:$0x1]
    %vm7 = vcmask 261120
    %8 = vst.msk [vmem:[#allocation0] sm:$0x1] %vm7, %v6
    %s9 = scalar_lea.vmem [#allocation1], 3
    %v10 = vld [vmem:[%s9] sm:$0x1]
    %11 = vrot.lane.b32.xlu0 %v10, 96
    %v12 = vpop.permute.xlu0 %11
    %vm13 = vcmask 1048320
    %14 = vst.msk [vmem:[#allocation0] sm:$0x1] %vm13, %v12
    %s15 = scalar_lea.vmem [#allocation1], 2
    %v16 = vld [vmem:[%s15] sm:$0x1]
    %17 = vrot.lane.b32.xlu0 %v16, 64
    %v18 = vpop.permute.xlu0 %17
    %vm19 = vcmask 785920
    %20 = vst.msk [vmem:[#allocation0] sm:$0x1] %vm19, %v18
    %s21 = scalar_lea.vmem [#allocation1], 1
    %v22 = vld [vmem:[%s21] sm:$0x1]
    %23 = vrot.lane.b32.xlu0 %v22, 32
    %v24 = vpop.permute.xlu0 %23
    %vm25 = vcmask 523520
    %26 = vst.msk [vmem:[#allocation0] sm:$0x1] %vm25, %v24
    %s28 = ssub.s32 2, 1
    %v29 = vld [vmem:[#allocation0] sm:%s28]
    %s31 = ssub.s32 2, 1
    %32 = vst [vmem:[%s1] sm:%s31] %v29

// kernel: prefil_forward.16
$region0: #{prefil_forward.16}
  #allocation0 [shape = 'u32[]', space=smem, size = 0x4, offset = 0x4, fixed_abs, tag = 'smem constant byte address 0x4 - core index']
  #allocation1 [shape = 'u32[72,128]{1,0:T(1,128)}', space=vmem, size = 0x9000, scoped, tag = 'internal scratch']
  %s0 = inlined_call_operand.vmem [shape: f32[2,16,32], index: 0, kind: input, shape index: {}]
  %s1 = inlined_call_operand.vmem [shape: f32[1,32], index: 1, kind: input, shape index: {}]
  %s2 = inlined_call_operand.vmem [shape: f32[1,32], index: 2, kind: input, shape index: {}]
  %s3 = inlined_call_operand.vmem [shape: f32[2,1,128], index: 3, kind: input, shape index: {}]
  %s4 = inlined_call_operand.vmem [shape: bf16[32,128], index: 4, kind: input, shape index: {}]
  %s5 = inlined_call_operand.vmem [shape: bf16[128,128], index: 5, kind: input, shape index: {}]
  %s6 = inlined_call_operand.vmem [shape: f32[1,128], index: 6, kind: input, shape index: {}]
  %s7 = inlined_call_operand.vmem [shape: bf16[128,128], index: 7, kind: input, shape index: {}]
  %s8 = inlined_call_operand.vmem [shape: f32[1,128], index: 8, kind: input, shape index: {}]
  %s9 = inlined_call_operand.vmem [shape: bf16[128,128], index: 9, kind: input, shape index: {}]
  %s10 = inlined_call_operand.vmem [shape: f32[1,128], index: 10, kind: input, shape index: {}]
  %s11 = inlined_call_operand.vmem [shape: f32[2,16,128], index: 11, kind: output, shape index: {}]
  %s12 = sld [smem:[#allocation0]]
  $region77: #{prefil_forward.16} parent=0
    _
  %s14 = ssub.s32 1, %s12
  %s15 = scalar_select 0, %s14, %s12
  loop: start=0, step=1, limit=4
  $region2: #{prefil_forward.16} parent=0 // loop_pre_header
    _
  $region3: #{prefil_forward.16} parent=0 // loop_header
    %s17 = sphi 0, %s21
    %p18 = scmp.ge.s32.totalorder %s17, 4
    %s24 = sphi 0, %s36
    %s25 = sphi 0, %s32
    %s26 = sphi 0, %s24
    %s27 = sphi 0, %s25
    %s28 = sphi 0, %s26
    %s29 = sphi 0, %s27
    %s41 = sphi 0, %s43
    %s44 = sphi 0, %s41
    %s45 = sphi 0, %s44
    %s61 = sphi 0, %s45
    %s65 = sphi 0, %s65
    %s67 = sphi 0, %s65
    %s68 = sphi 0, %s67
    %s82 = sphi 0, %s68
    %s86 = sphi 0, %s86
    %s88 = sphi 0, %s86
    %s89 = sphi 0, %s88
    %s103 = sphi 0, %s89
    %s109 = sphi 0, %s111
    %s112 = sphi 0, %s109
    %s113 = sphi 0, %s112
    %s129 = sphi 0, %s113
    %s133 = sphi 0, %s133
    %s135 = sphi 0, %s133
    %s136 = sphi 0, %s135
    %s150 = sphi 0, %s136
    %s154 = sphi 0, %s154
    %s156 = sphi 0, %s154
    %s157 = sphi 0, %s156
    %s171 = sphi 0, %s157
    %s175 = sphi 0, %s175
    %s177 = sphi 0, %s175
    %s178 = sphi 0, %s177
    %s192 = sphi 0, %s178
    %s196 = sphi 0, %s196
    %s198 = sphi 0, %s196
    %s199 = sphi 0, %s198
    %s213 = sphi 0, %s199
    %s217 = sphi 0, %s217
    %s219 = sphi 0, %s217
    %s220 = sphi 0, %s219
    %s234 = sphi 0, %s220
    %s238 = sphi 0, %s238
    %s240 = sphi 0, %s238
    %s241 = sphi 0, %s240
    %s255 = sphi 0, %s241
    %s259 = sphi 0, %s259
    %s261 = sphi 0, %s259
    %s262 = sphi 0, %s261
    %s276 = sphi 0, %s262
    %s284 = sphi 0, %s286
    %s287 = sphi 0, %s284
    %s288 = sphi 0, %s287
    %s304 = sphi 0, %s288
  $region4: #{prefil_forward.16} parent=0 // loop_header_branch
    %20 = sbr.rel (%p18) target = $region8
  $region5: #{prefil_forward.16} parent=0 // loop_body
    %s22 = ssub.s32 %s17, 1
    %s23 = ssub.s32 %s17, 2
    %s30 = sadd.s32 1, %s25
    %p31 = scmp.ge.s32.totalorder %s30, 1
    %s32 = scalar_select %p31, 0, %s30
    %s33 = sadd.s32 1, %s24
    %s34 = scalar_select %p31, %s33, %s24
    %p35 = scmp.ge.s32.totalorder %s34, 2
    %s36 = scalar_select %p35, 0, %s34
    %s37 = ssub.s32 %s24, %s36
    %s38 = ssub.s32 %s25, %s32
    %s39 = sor.u32 %s37, %s38
    %p40 = scmp.eq.s32.totalorder %s39, 0
    %s42 = sadd.s32 %s41, 1
    %s43 = scalar_select %p40, %s41, %s42
    %p46 = pneg %p40
    %p47 = scmp.eq.s32.totalorder %s17, 1
    %p48 = por %p46, %p47
    %p49 = scmp.ne.s32.totalorder %s41, %s44
    %p50 = scmp.eq.s32.totalorder %s17, 0
    %p51 = por %p49, %p50
    %p52 = scmp.ne.s32.totalorder %s41, %s44
    %p53 = scmp.eq.s32.totalorder %s22, 1
    %p54 = por %p52, %p53
    %p55 = scmp.ne.s32.totalorder %s44, %s45
    %p56 = scmp.eq.s32.totalorder %s22, 0
    %p57 = por %p55, %p56
    %p58 = scmp.ne.s32.totalorder %s44, %s45
    %p59 = scmp.eq.s32.totalorder %s23, 1
    %p60 = por %p58, %p59
    %p62 = scmp.ne.s32.totalorder %s45, %s61
    %p63 = scmp.eq.s32.totalorder %s23, 0
    %p64 = por %p62, %p63
    %s66 = sadd.s32 %s65, 1
    %p69 = scmp.eq.s32.totalorder %s17, 1
    %p70 = scmp.ne.s32.totalorder %s65, %s67
    %p71 = scmp.eq.s32.totalorder %s17, 0
    %p72 = por %p70, %p71
    %p73 = scmp.ne.s32.totalorder %s65, %s67
    %p74 = scmp.eq.s32.totalorder %s22, 1
    %p75 = por %p73, %p74
    %p76 = scmp.ne.s32.totalorder %s67, %s68
    %p77 = scmp.eq.s32.totalorder %s22, 0
    %p78 = por %p76, %p77
    %p79 = scmp.ne.s32.totalorder %s67, %s68
    %p80 = scmp.eq.s32.totalorder %s23, 1
    %p81 = por %p79, %p80
    %p83 = scmp.ne.s32.totalorder %s68, %s82
    %p84 = scmp.eq.s32.totalorder %s23, 0
    %p85 = por %p83, %p84
    %s87 = sadd.s32 %s86, 1
    %p90 = scmp.eq.s32.totalorder %s17, 1
    %p91 = scmp.ne.s32.totalorder %s86, %s88
    %p92 = scmp.eq.s32.totalorder %s17, 0
    %p93 = por %p91, %p92
    %p94 = scmp.ne.s32.totalorder %s86, %s88
    %p95 = scmp.eq.s32.totalorder %s22, 1
    %p96 = por %p94, %p95
    %p97 = scmp.ne.s32.totalorder %s88, %s89
    %p98 = scmp.eq.s32.totalorder %s22, 0
    %p99 = por %p97, %p98
    %p100 = scmp.ne.s32.totalorder %s88, %s89
    %p101 = scmp.eq.s32.totalorder %s23, 1
    %p102 = por %p100, %p101
    %p104 = scmp.ne.s32.totalorder %s89, %s103
    %p105 = scmp.eq.s32.totalorder %s23, 0
    %p106 = por %p104, %p105
    %s107 = ssub.s32 %s24, %s36
    %p108 = scmp.eq.s32.totalorder %s107, 0
    %s110 = sadd.s32 %s109, 1
    %s111 = scalar_select %p108, %s109, %s110
    %p114 = pneg %p108
    %p115 = scmp.eq.s32.totalorder %s17, 1
    %p116 = por %p114, %p115
    %p117 = scmp.ne.s32.totalorder %s109, %s112
    %p118 = scmp.eq.s32.totalorder %s17, 0
    %p119 = por %p117, %p118
    %p120 = scmp.ne.s32.totalorder %s109, %s112
    %p121 = scmp.eq.s32.totalorder %s22, 1
    %p122 = por %p120, %p121
    %p123 = scmp.ne.s32.totalorder %s112, %s113
    %p124 = scmp.eq.s32.totalorder %s22, 0
    %p125 = por %p123, %p124
    %p126 = scmp.ne.s32.totalorder %s112, %s113
    %p127 = scmp.eq.s32.totalorder %s23, 1
    %p128 = por %p126, %p127
    %p130 = scmp.ne.s32.totalorder %s113, %s129
    %p131 = scmp.eq.s32.totalorder %s23, 0
    %p132 = por %p130, %p131
    %s134 = sadd.s32 %s133, 1
    %p137 = scmp.eq.s32.totalorder %s17, 1
    %p138 = scmp.ne.s32.totalorder %s133, %s135
    %p139 = scmp.eq.s32.totalorder %s17, 0
    %p140 = por %p138, %p139
    %p141 = scmp.ne.s32.totalorder %s133, %s135
    %p142 = scmp.eq.s32.totalorder %s22, 1
    %p143 = por %p141, %p142
    %p144 = scmp.ne.s32.totalorder %s135, %s136
    %p145 = scmp.eq.s32.totalorder %s22, 0
    %p146 = por %p144, %p145
    %p147 = scmp.ne.s32.totalorder %s135, %s136
    %p148 = scmp.eq.s32.totalorder %s23, 1
    %p149 = por %p147, %p148
    %p151 = scmp.ne.s32.totalorder %s136, %s150
    %p152 = scmp.eq.s32.totalorder %s23, 0
    %p153 = por %p151, %p152
    %s155 = sadd.s32 %s154, 1
    %p158 = scmp.eq.s32.totalorder %s17, 1
    %p159 = scmp.ne.s32.totalorder %s154, %s156
    %p160 = scmp.eq.s32.totalorder %s17, 0
    %p161 = por %p159, %p160
    %p162 = scmp.ne.s32.totalorder %s154, %s156
    %p163 = scmp.eq.s32.totalorder %s22, 1
    %p164 = por %p162, %p163
    %p165 = scmp.ne.s32.totalorder %s156, %s157
    %p166 = scmp.eq.s32.totalorder %s22, 0
    %p167 = por %p165, %p166
    %p168 = scmp.ne.s32.totalorder %s156, %s157
    %p169 = scmp.eq.s32.totalorder %s23, 1
    %p170 = por %p168, %p169
    %p172 = scmp.ne.s32.totalorder %s157, %s171
    %p173 = scmp.eq.s32.totalorder %s23, 0
    %p174 = por %p172, %p173
    %s176 = sadd.s32 %s175, 1
    %p179 = scmp.eq.s32.totalorder %s17, 1
    %p180 = scmp.ne.s32.totalorder %s175, %s177
    %p181 = scmp.eq.s32.totalorder %s17, 0
    %p182 = por %p180, %p181
    %p183 = scmp.ne.s32.totalorder %s175, %s177
    %p184 = scmp.eq.s32.totalorder %s22, 1
    %p185 = por %p183, %p184
    %p186 = scmp.ne.s32.totalorder %s177, %s178
    %p187 = scmp.eq.s32.totalorder %s22, 0
    %p188 = por %p186, %p187
    %p189 = scmp.ne.s32.totalorder %s177, %s178
    %p190 = scmp.eq.s32.totalorder %s23, 1
    %p191 = por %p189, %p190
    %p193 = scmp.ne.s32.totalorder %s178, %s192
    %p194 = scmp.eq.s32.totalorder %s23, 0
    %p195 = por %p193, %p194
    %s197 = sadd.s32 %s196, 1
    %p200 = scmp.eq.s32.totalorder %s17, 1
    %p201 = scmp.ne.s32.totalorder %s196, %s198
    %p202 = scmp.eq.s32.totalorder %s17, 0
    %p203 = por %p201, %p202
    %p204 = scmp.ne.s32.totalorder %s196, %s198
    %p205 = scmp.eq.s32.totalorder %s22, 1
    %p206 = por %p204, %p205
    %p207 = scmp.ne.s32.totalorder %s198, %s199
    %p208 = scmp.eq.s32.totalorder %s22, 0
    %p209 = por %p207, %p208
    %p210 = scmp.ne.s32.totalorder %s198, %s199
    %p211 = scmp.eq.s32.totalorder %s23, 1
    %p212 = por %p210, %p211
    %p214 = scmp.ne.s32.totalorder %s199, %s213
    %p215 = scmp.eq.s32.totalorder %s23, 0
    %p216 = por %p214, %p215
    %s218 = sadd.s32 %s217, 1
    %p221 = scmp.eq.s32.totalorder %s17, 1
    %p222 = scmp.ne.s32.totalorder %s217, %s219
    %p223 = scmp.eq.s32.totalorder %s17, 0
    %p224 = por %p222, %p223
    %p225 = scmp.ne.s32.totalorder %s217, %s219
    %p226 = scmp.eq.s32.totalorder %s22, 1
    %p227 = por %p225, %p226
    %p228 = scmp.ne.s32.totalorder %s219, %s220
    %p229 = scmp.eq.s32.totalorder %s22, 0
    %p230 = por %p228, %p229
    %p231 = scmp.ne.s32.totalorder %s219, %s220
    %p232 = scmp.eq.s32.totalorder %s23, 1
    %p233 = por %p231, %p232
    %p235 = scmp.ne.s32.totalorder %s220, %s234
    %p236 = scmp.eq.s32.totalorder %s23, 0
    %p237 = por %p235, %p236
    %s239 = sadd.s32 %s238, 1
    %p242 = scmp.eq.s32.totalorder %s17, 1
    %p243 = scmp.ne.s32.totalorder %s238, %s240
    %p244 = scmp.eq.s32.totalorder %s17, 0
    %p245 = por %p243, %p244
    %p246 = scmp.ne.s32.totalorder %s238, %s240
    %p247 = scmp.eq.s32.totalorder %s22, 1
    %p248 = por %p246, %p247
    %p249 = scmp.ne.s32.totalorder %s240, %s241
    %p250 = scmp.eq.s32.totalorder %s22, 0
    %p251 = por %p249, %p250
    %p252 = scmp.ne.s32.totalorder %s240, %s241
    %p253 = scmp.eq.s32.totalorder %s23, 1
    %p254 = por %p252, %p253
    %p256 = scmp.ne.s32.totalorder %s241, %s255
    %p257 = scmp.eq.s32.totalorder %s23, 0
    %p258 = por %p256, %p257
    %s260 = sadd.s32 %s259, 1
    %p263 = scmp.eq.s32.totalorder %s17, 1
    %p264 = scmp.ne.s32.totalorder %s259, %s261
    %p265 = scmp.eq.s32.totalorder %s17, 0
    %p266 = por %p264, %p265
    %p267 = scmp.ne.s32.totalorder %s259, %s261
    %p268 = scmp.eq.s32.totalorder %s22, 1
    %p269 = por %p267, %p268
    %p270 = scmp.ne.s32.totalorder %s261, %s262
    %p271 = scmp.eq.s32.totalorder %s22, 0
    %p272 = por %p270, %p271
    %p273 = scmp.ne.s32.totalorder %s261, %s262
    %p274 = scmp.eq.s32.totalorder %s23, 1
    %p275 = por %p273, %p274
    %p277 = scmp.ne.s32.totalorder %s262, %s276
    %p278 = scmp.eq.s32.totalorder %s23, 0
    %p279 = por %p277, %p278
    %s280 = ssub.s32 %s24, %s36
    %s281 = ssub.s32 %s25, %s32
    %s282 = sor.u32 %s280, %s281
    %p283 = scmp.eq.s32.totalorder %s282, 0
    %s285 = sadd.s32 %s284, 1
    %s286 = scalar_select %p283, %s284, %s285
    %p289 = pneg %p283
    %p290 = scmp.eq.s32.totalorder %s17, 1
    %p291 = por %p289, %p290
    %p292 = scmp.ne.s32.totalorder %s284, %s287
    %p293 = scmp.eq.s32.totalorder %s17, 0
    %p294 = por %p292, %p293
    %p295 = scmp.ne.s32.totalorder %s284, %s287
    %p296 = scmp.eq.s32.totalorder %s22, 1
    %p297 = por %p295, %p296
    %p298 = scmp.ne.s32.totalorder %s287, %s288
    %p299 = scmp.eq.s32.totalorder %s22, 0
    %p300 = por %p298, %p299
    %p301 = scmp.ne.s32.totalorder %s287, %s288
    %p302 = scmp.eq.s32.totalorder %s23, 1
    %p303 = por %p301, %p302
    %p305 = scmp.ne.s32.totalorder %s288, %s304
    %p306 = scmp.eq.s32.totalorder %s23, 0
    %p307 = por %p305, %p306
    %p308 = scmp.le.s32.totalorder 1, %s17
    %p309 = scmp.lt.s32.totalorder %s17, 3
    %p310 = pnand %p308, %p309
    %p311 = pneg %p310
    // Predicated region
    $region9: #{prefil_forward.16} parent=5 // pred_check
      _
    $region10: #{prefil_forward.16} parent=5 // pred_check_branch
      %313 = sbr.rel (%p310) target = $region12
    $region11: #{prefil_forward.16} parent=5 // pred_region
      %s314 = ssub.s32 %s17, 1
      // Predicated region
      $region13: #{prefil_forward.16} parent=11 // pred_check
        %p315 = pneg %p78
      $region14: #{prefil_forward.16} parent=11 // pred_check_branch
        %317 = sbr.rel (%p315) target = $region16
      $region15: #{prefil_forward.16} parent=11 // pred_region
        _
      $region16: #{prefil_forward.16} parent=11 // pred_fallthru
        _
      // Predicated region
      $region17: #{prefil_forward.16} parent=11 // pred_check
        %p318 = pneg %p99
      $region18: #{prefil_forward.16} parent=11 // pred_check_branch
        %320 = sbr.rel (%p318) target = $region20
      $region19: #{prefil_forward.16} parent=11 // pred_region
        _
      $region20: #{prefil_forward.16} parent=11 // pred_fallthru
        _
      // Predicated region
      $region21: #{prefil_forward.16} parent=11 // pred_check
        %p321 = pneg %p146
      $region22: #{prefil_forward.16} parent=11 // pred_check_branch
        %323 = sbr.rel (%p321) target = $region24
      $region23: #{prefil_forward.16} parent=11 // pred_region
        _
      $region24: #{prefil_forward.16} parent=11 // pred_fallthru
        _
      // Predicated region
      $region25: #{prefil_forward.16} parent=11 // pred_check
        %p324 = pneg %p167
      $region26: #{prefil_forward.16} parent=11 // pred_check_branch
        %326 = sbr.rel (%p324) target = $region28
      $region27: #{prefil_forward.16} parent=11 // pred_region
        _
      $region28: #{prefil_forward.16} parent=11 // pred_fallthru
        _
      // Predicated region
      $region29: #{prefil_forward.16} parent=11 // pred_check
        %p327 = pneg %p188
      $region30: #{prefil_forward.16} parent=11 // pred_check_branch
        %329 = sbr.rel (%p327) target = $region32
      $region31: #{prefil_forward.16} parent=11 // pred_region
        _
      $region32: #{prefil_forward.16} parent=11 // pred_fallthru
        _
      // Predicated region
      $region33: #{prefil_forward.16} parent=11 // pred_check
        %p330 = pneg %p209
      $region34: #{prefil_forward.16} parent=11 // pred_check_branch
        %332 = sbr.rel (%p330) target = $region36
      $region35: #{prefil_forward.16} parent=11 // pred_region
        _
      $region36: #{prefil_forward.16} parent=11 // pred_fallthru
        _
      // Predicated region
      $region37: #{prefil_forward.16} parent=11 // pred_check
        %p333 = pneg %p230
      $region38: #{prefil_forward.16} parent=11 // pred_check_branch
        %335 = sbr.rel (%p333) target = $region40
      $region39: #{prefil_forward.16} parent=11 // pred_region
        _
      $region40: #{prefil_forward.16} parent=11 // pred_fallthru
        _
      // Predicated region
      $region41: #{prefil_forward.16} parent=11 // pred_check
        %p336 = pneg %p251
      $region42: #{prefil_forward.16} parent=11 // pred_check_branch
        %338 = sbr.rel (%p336) target = $region44
      $region43: #{prefil_forward.16} parent=11 // pred_region
        _
      $region44: #{prefil_forward.16} parent=11 // pred_fallthru
        _
      // Predicated region
      $region45: #{prefil_forward.16} parent=11 // pred_check
        %p339 = pneg %p272
      $region46: #{prefil_forward.16} parent=11 // pred_check_branch
        %341 = sbr.rel (%p339) target = $region48
      $region47: #{prefil_forward.16} parent=11 // pred_region
        _
      $region48: #{prefil_forward.16} parent=11 // pred_fallthru
        _
    $region12: #{prefil_forward.16} parent=5 // pred_fallthru
      _
    %p342 = scmp.lt.s32.totalorder %s17, 2
    // Predicated region
    $region49: #{prefil_forward.16} parent=5 // pred_check
      %p343 = pneg %p342
    $region50: #{prefil_forward.16} parent=5 // pred_check_branch
      %345 = sbr.rel (%p343) target = $region52
    $region51: #{prefil_forward.16} parent=5 // pred_region
      // Predicated region
      $region53: #{prefil_forward.16} parent=51 // pred_check
        %p346 = pneg %p51
      $region54: #{prefil_forward.16} parent=51 // pred_check_branch
        %348 = sbr.rel (%p346) target = $region56
      $region55: #{prefil_forward.16} parent=51 // pred_region
        %s349 = smul.u32 2, %s25
        %p350 = scmp.lt.s32.totalorder %s24, 1
        %s351 = scalar_select %p350, %s24, 1
        %p352 = scmp.lt.s32.totalorder %s349, 1
        %s353 = scalar_select %p352, %s349, 1
        %s354 = smul.addr %s351, 2
        %s355 = sadd.s32 %s353, %s354
        %s356 = smul.addr %s355, 8
        %s357 = scalar_lea.vmem %s0, %s356
        %s358 = smul.u32 2, %s25
      $region56: #{prefil_forward.16} parent=51 // pred_fallthru
        _
      // Predicated region
      $region57: #{prefil_forward.16} parent=51 // pred_check
        %p359 = pneg %p119
      $region58: #{prefil_forward.16} parent=51 // pred_check_branch
        %361 = sbr.rel (%p359) target = $region60
      $region59: #{prefil_forward.16} parent=51 // pred_region
        %p362 = scmp.lt.s32.totalorder %s24, 1
        %s363 = scalar_select %p362, %s24, 1
        %s364 = scalar_lea.vmem %s3, %s363
      $region60: #{prefil_forward.16} parent=51 // pred_fallthru
        _
    $region52: #{prefil_forward.16} parent=5 // pred_fallthru
      _
    %p365 = scmp.le.s32.totalorder 1, %s17
    %p366 = scmp.lt.s32.totalorder %s17, 3
    %p367 = pnand %p365, %p366
    %p368 = pneg %p367
    // Predicated region
    $region61: #{prefil_forward.16} parent=5 // pred_check
      _
    $region62: #{prefil_forward.16} parent=5 // pred_check_branch
      %370 = sbr.rel (%p367) target = $region64
    $region63: #{prefil_forward.16} parent=5 // pred_region
      %s371 = ssub.s32 %s17, 1
      %s372 = smul.u32 2, %s27
      %p373 = scmp.lt.s32.totalorder %s26, 1
      %s374 = scalar_select %p373, %s26, 1
      %p375 = scmp.lt.s32.totalorder %s372, 1
      %s376 = scalar_select %p375, %s372, 1
      %s377 = smul.addr %s374, 2
      %s378 = sadd.s32 %s376, %s377
      %s379 = smul.addr %s378, 8
      %s380 = scalar_lea.vmem %s0, %s379
      %p381 = pneg %p57
      %p382 = pneg %p54
      %p383 = pneg %p78
      %p384 = pneg %p75
      %p385 = pneg %p99
      %p386 = pneg %p96
      %p387 = scmp.lt.s32.totalorder %s26, 1
      %s388 = scalar_select %p387, %s26, 1
      %s389 = scalar_lea.vmem %s3, %s388
      %p390 = pneg %p125
      %p391 = pneg %p122
      %p392 = pneg %p146
      %p393 = pneg %p143
      %p394 = pneg %p167
      %p395 = pneg %p164
      %p396 = pneg %p188
      %p397 = pneg %p185
      %p398 = pneg %p209
      %p399 = pneg %p206
      %p400 = pneg %p230
      %p401 = pneg %p227
      %p402 = pneg %p251
      %p403 = pneg %p248
      %p404 = pneg %p272
      %p405 = pneg %p269
      %p406 = pneg %p300
      %p407 = pneg %p297
      %s408 = smul.u32 2, %s27
      %p409 = scmp.lt.s32.totalorder %s26, 1
      %s410 = scalar_select %p409, %s26, 1
      %p411 = scmp.lt.s32.totalorder %s408, 1
      %s412 = scalar_select %p411, %s408, 1
      %s413 = smul.addr %s410, 2
      %s414 = sadd.s32 %s412, %s413
      %s415 = smul.addr %s414, 8
      %s416 = scalar_lea.vmem %s11, %s415
      %s417 = smul.u32 2, %s27
      %p418 = scmp.lt.s32.totalorder %s26, 1
      %s419 = scalar_select %p418, %s26, 1
      %p420 = scmp.lt.s32.totalorder %s417, 1
      %s421 = scalar_select %p420, %s417, 1
      %s422 = smul.addr %s419, 2
      %s423 = sadd.s32 %s421, %s422
      %s424 = smul.addr %s423, 8
      %s425 = scalar_lea.vmem %s0, %s424
      %s426 = smul.u32 2, %s27
      %p427 = scmp.lt.s32.totalorder %s26, 1
      %s428 = scalar_select %p427, %s26, 1
      %s429 = scalar_lea.vmem %s3, %s428
      %s430 = smul.u32 2, %s27
      %p431 = scmp.lt.s32.totalorder %s26, 1
      %s432 = scalar_select %p431, %s26, 1
      %p433 = scmp.lt.s32.totalorder %s430, 1
      %s434 = scalar_select %p433, %s430, 1
      %s435 = smul.addr %s432, 2
      %s436 = sadd.s32 %s434, %s435
      %s437 = smul.addr %s436, 8
      %s438 = scalar_lea.vmem %s11, %s437
      %s439 = smul.u32 2, %s27
      %v441 = vld [vmem:[%s425] sm:$0xff]
      %v442 = vld [vmem:[%s425 + $0x8] sm:$0xff]
      %v443 = vld [vmem:[%s1] sm:$0x1]
      %v445 = vperm.slane %v443, 0
      %v447 = vmul.f32 %v441, %v445
      %v448 = vmul.f32 %v442, %v445
      %v449 = vld [vmem:[%s2] sm:$0x1]
      %v451 = vperm.slane %v449, 0
      %v453 = vadd.f32 %v447, %v451
      %v454 = vadd.f32 %v448, %v451
      %v455 = vpack.c.bf16 %v454, %v453
      %v456 = vld [vmem:[%s4] sm:$0xf]
      %v457 = vld [vmem:[%s4 + $0x4] sm:$0xf]
      %v458 = vld [vmem:[%s4 + $0x8] sm:$0xf]
      %v459 = vld [vmem:[%s4 + $0xc] sm:$0xf]
      %v460 = vld [vmem:[%s429] sm:$0x1]
      %v462 = vperm.slane %v460, 0
      %v468 = vunpack.c.l.b16 %v456
      %v469 = vunpack.c.l.b16 %v457
      %v470 = vunpack.c.l.b16 %v458
      %v471 = vunpack.c.l.b16 %v459
      %v472 = vpack.c.b16 %v469, %v468
      %v473 = vpack.c.b16 %v471, %v470
      %vm476 = vcmask 261120
      %v478 = vsel %vm476, %v455, 0
      %480 = vmatpush.bf16.msra.mxu0 0
      %481 = vmatpush.bf16.msra.mxu0 0
      %482 = vmatpush.bf16.msra.mxu0 0
      %483 = vmatpush.bf16.msra.mxu0 0
      %484 = vmatpush.bf16.msra.mxu0 0
      %485 = vmatpush.bf16.msra.mxu0 0
      %486 = vmatpush.bf16.msra.mxu0 %v473
      %487 = vmatpush.bf16.msra.mxu0 %v472
      %488 = vmatmul.bf16.gmra.mxu0 %v478
      %v489 = vpop.f32.mrf.mxu0
      %v490 = vadd.f32 %v462, %v489
      %v491 = vpop.f32.mrf.mxu0
      %v492 = vadd.f32 %v462, %v491
      %493 = vdwg.mxu0
      %v494 = vmax.f32 %v490, 0.0
      %v495 = vmax.f32 %v492, 0.0
      %v496 = vpack.c.bf16 %v495, %v494
      %v497 = vld [vmem:[%s5] sm:$0xf]
      %v498 = vld [vmem:[%s5 + $0x4] sm:$0xf]
      %v499 = vld [vmem:[%s5 + $0x8] sm:$0xf]
      %v500 = vld [vmem:[%s5 + $0xc] sm:$0xf]
      %v501 = vld [vmem:[%s5 + $0x10] sm:$0xf]
      %v502 = vld [vmem:[%s5 + $0x14] sm:$0xf]
      %v503 = vld [vmem:[%s5 + $0x18] sm:$0xf]
      %v504 = vld [vmem:[%s5 + $0x1c] sm:$0xf]
      %v505 = vld [vmem:[%s5 + $0x20] sm:$0xf]
      %v506 = vld [vmem:[%s5 + $0x24] sm:$0xf]
      %v507 = vld [vmem:[%s5 + $0x28] sm:$0xf]
      %v508 = vld [vmem:[%s5 + $0x2c] sm:$0xf]
      %v509 = vld [vmem:[%s5 + $0x30] sm:$0xf]
      %v510 = vld [vmem:[%s5 + $0x34] sm:$0xf]
      %v511 = vld [vmem:[%s5 + $0x38] sm:$0xf]
      %v512 = vld [vmem:[%s5 + $0x3c] sm:$0xf]
      %v513 = vld [vmem:[%s6] sm:$0x1]
      %v515 = vperm.slane %v513, 0
      %v533 = vunpack.c.l.b16 %v497
      %v534 = vunpack.c.l.b16 %v498
      %v535 = vunpack.c.l.b16 %v499
      %v536 = vunpack.c.l.b16 %v500
      %v537 = vunpack.c.l.b16 %v501
      %v538 = vunpack.c.l.b16 %v502
      %v539 = vunpack.c.l.b16 %v503
      %v540 = vunpack.c.l.b16 %v504
      %v541 = vunpack.c.l.b16 %v505
      %v542 = vunpack.c.l.b16 %v506
      %v543 = vunpack.c.l.b16 %v507
      %v544 = vunpack.c.l.b16 %v508
      %v545 = vunpack.c.l.b16 %v509
      %v546 = vunpack.c.l.b16 %v510
      %v547 = vunpack.c.l.b16 %v511
      %v548 = vunpack.c.l.b16 %v512
      %v549 = vpack.c.b16 %v534, %v533
      %v550 = vpack.c.b16 %v536, %v535
      %v551 = vpack.c.b16 %v538, %v537
      %v552 = vpack.c.b16 %v540, %v539
      %v553 = vpack.c.b16 %v542, %v541
      %v554 = vpack.c.b16 %v544, %v543
      %v555 = vpack.c.b16 %v546, %v545
      %v556 = vpack.c.b16 %v548, %v547
      %565 = vmatpush.bf16.msra.mxu0 %v556
      %566 = vmatpush.bf16.msra.mxu0 %v555
      %567 = vmatpush.bf16.msra.mxu0 %v554
      %568 = vmatpush.bf16.msra.mxu0 %v553
      %569 = vmatpush.bf16.msra.mxu0 %v552
      %570 = vmatpush.bf16.msra.mxu0 %v551
      %571 = vmatpush.bf16.msra.mxu0 %v550
      %572 = vmatpush.bf16.msra.mxu0 %v549
      %573 = vmatmul.bf16.gmra.mxu0 %v496
      %v574 = vpop.f32.mrf.mxu0
      %v575 = vadd.f32 %v515, %v574
      %v576 = vpop.f32.mrf.mxu0
      %v577 = vadd.f32 %v515, %v576
      %578 = vdwg.mxu0
      %v579 = vmax.f32 %v575, 0.0
      %v580 = vmax.f32 %v577, 0.0
      %v581 = vpack.c.bf16 %v580, %v579
      %v582 = vld [vmem:[%s7] sm:$0xf]
      %v583 = vld [vmem:[%s7 + $0x4] sm:$0xf]
      %v584 = vld [vmem:[%s7 + $0x8] sm:$0xf]
      %v585 = vld [vmem:[%s7 + $0xc] sm:$0xf]
      %v586 = vld [vmem:[%s7 + $0x10] sm:$0xf]
      %v587 = vld [vmem:[%s7 + $0x14] sm:$0xf]
      %v588 = vld [vmem:[%s7 + $0x18] sm:$0xf]
      %v589 = vld [vmem:[%s7 + $0x1c] sm:$0xf]
      %v590 = vld [vmem:[%s7 + $0x20] sm:$0xf]
      %v591 = vld [vmem:[%s7 + $0x24] sm:$0xf]
      %v592 = vld [vmem:[%s7 + $0x28] sm:$0xf]
      %v593 = vld [vmem:[%s7 + $0x2c] sm:$0xf]
      %v594 = vld [vmem:[%s7 + $0x30] sm:$0xf]
      %v595 = vld [vmem:[%s7 + $0x34] sm:$0xf]
      %v596 = vld [vmem:[%s7 + $0x38] sm:$0xf]
      %v597 = vld [vmem:[%s7 + $0x3c] sm:$0xf]
      %v598 = vld [vmem:[%s8] sm:$0x1]
      %v600 = vperm.slane %v598, 0
      %v618 = vunpack.c.l.b16 %v582
      %v619 = vunpack.c.l.b16 %v583
      %v620 = vunpack.c.l.b16 %v584
      %v621 = vunpack.c.l.b16 %v585
      %v622 = vunpack.c.l.b16 %v586
      %v623 = vunpack.c.l.b16 %v587
      %v624 = vunpack.c.l.b16 %v588
      %v625 = vunpack.c.l.b16 %v589
      %v626 = vunpack.c.l.b16 %v590
      %v627 = vunpack.c.l.b16 %v591
      %v628 = vunpack.c.l.b16 %v592
      %v629 = vunpack.c.l.b16 %v593
      %v630 = vunpack.c.l.b16 %v594
      %v631 = vunpack.c.l.b16 %v595
      %v632 = vunpack.c.l.b16 %v596
      %v633 = vunpack.c.l.b16 %v597
      %v634 = vpack.c.b16 %v619, %v618
      %v635 = vpack.c.b16 %v621, %v620
      %v636 = vpack.c.b16 %v623, %v622
      %v637 = vpack.c.b16 %v625, %v624
      %v638 = vpack.c.b16 %v627, %v626
      %v639 = vpack.c.b16 %v629, %v628
      %v640 = vpack.c.b16 %v631, %v630
      %v641 = vpack.c.b16 %v633, %v632
      %650 = vmatpush.bf16.msra.mxu0 %v641
      %651 = vmatpush.bf16.msra.mxu0 %v640
      %652 = vmatpush.bf16.msra.mxu0 %v639
      %653 = vmatpush.bf16.msra.mxu0 %v638
      %654 = vmatpush.bf16.msra.mxu0 %v637
      %655 = vmatpush.bf16.msra.mxu0 %v636
      %656 = vmatpush.bf16.msra.mxu0 %v635
      %657 = vmatpush.bf16.msra.mxu0 %v634
      %658 = vmatmul.bf16.gmra.mxu0 %v581
      %v659 = vpop.f32.mrf.mxu0
      %v660 = vadd.f32 %v600, %v659
      %v661 = vpop.f32.mrf.mxu0
      %v662 = vadd.f32 %v600, %v661
      %663 = vdwg.mxu0
      %v664 = vmax.f32 %v660, 0.0
      %v665 = vmax.f32 %v662, 0.0
      %v666 = vpack.c.bf16 %v665, %v664
      %v667 = vld [vmem:[%s9] sm:$0xf]
      %v668 = vld [vmem:[%s9 + $0x4] sm:$0xf]
      %v669 = vld [vmem:[%s9 + $0x8] sm:$0xf]
      %v670 = vld [vmem:[%s9 + $0xc] sm:$0xf]
      %v671 = vld [vmem:[%s9 + $0x10] sm:$0xf]
      %v672 = vld [vmem:[%s9 + $0x14] sm:$0xf]
      %v673 = vld [vmem:[%s9 + $0x18] sm:$0xf]
      %v674 = vld [vmem:[%s9 + $0x1c] sm:$0xf]
      %v675 = vld [vmem:[%s9 + $0x20] sm:$0xf]
      %v676 = vld [vmem:[%s9 + $0x24] sm:$0xf]
      %v677 = vld [vmem:[%s9 + $0x28] sm:$0xf]
      %v678 = vld [vmem:[%s9 + $0x2c] sm:$0xf]
      %v679 = vld [vmem:[%s9 + $0x30] sm:$0xf]
      %v680 = vld [vmem:[%s9 + $0x34] sm:$0xf]
      %v681 = vld [vmem:[%s9 + $0x38] sm:$0xf]
      %v682 = vld [vmem:[%s9 + $0x3c] sm:$0xf]
      %v683 = vld [vmem:[%s10] sm:$0x1]
      %v685 = vperm.slane %v683, 0
      %v703 = vunpack.c.l.b16 %v667
      %v704 = vunpack.c.l.b16 %v668
      %v705 = vunpack.c.l.b16 %v669
      %v706 = vunpack.c.l.b16 %v670
      %v707 = vunpack.c.l.b16 %v671
      %v708 = vunpack.c.l.b16 %v672
      %v709 = vunpack.c.l.b16 %v673
      %v710 = vunpack.c.l.b16 %v674
      %v711 = vunpack.c.l.b16 %v675
      %v712 = vunpack.c.l.b16 %v676
      %v713 = vunpack.c.l.b16 %v677
      %v714 = vunpack.c.l.b16 %v678
      %v715 = vunpack.c.l.b16 %v679
      %v716 = vunpack.c.l.b16 %v680
      %v717 = vunpack.c.l.b16 %v681
      %v718 = vunpack.c.l.b16 %v682
      %v719 = vpack.c.b16 %v704, %v703
      %v720 = vpack.c.b16 %v706, %v705
      %v721 = vpack.c.b16 %v708, %v707
      %v722 = vpack.c.b16 %v710, %v709
      %v723 = vpack.c.b16 %v712, %v711
      %v724 = vpack.c.b16 %v714, %v713
      %v725 = vpack.c.b16 %v716, %v715
      %v726 = vpack.c.b16 %v718, %v717
      %735 = vmatpush.bf16.msra.mxu0 %v726
      %736 = vmatpush.bf16.msra.mxu0 %v725
      %737 = vmatpush.bf16.msra.mxu0 %v724
      %738 = vmatpush.bf16.msra.mxu0 %v723
      %739 = vmatpush.bf16.msra.mxu0 %v722
      %740 = vmatpush.bf16.msra.mxu0 %v721
      %741 = vmatpush.bf16.msra.mxu0 %v720
      %742 = vmatpush.bf16.msra.mxu0 %v719
      %743 = vmatmul.bf16.gmra.mxu0 %v666
      %v744 = vpop.f32.mrf.mxu0
      %v745 = vadd.f32 %v685, %v744
      %v746 = vpop.f32.mrf.mxu0
      %v747 = vadd.f32 %v685, %v746
      %748 = vdwg.mxu0
      %v749 = vmax.f32 %v745, 0.0
      %v750 = vmax.f32 %v747, 0.0
      %751 = vst [vmem:[%s438] sm:$0xff] %v749
      %752 = vst [vmem:[%s438 + $0x8] sm:$0xff] %v750
      %s753 = smul.u32 2, %s27
      %p754 = scmp.lt.s32.totalorder %s26, 1
      %s755 = scalar_select %p754, %s26, 1
      %p756 = scmp.lt.s32.totalorder %s753, 1
      %s757 = scalar_select %p756, %s753, 1
      %s758 = smul.addr %s755, 2
      %s759 = sadd.s32 %s757, %s758
      %s760 = smul.addr %s759, 8
      %s761 = scalar_lea.vmem %s11, %s760
      // Predicated region
      $region65: #{prefil_forward.16} parent=63 // pred_check
        %p762 = pneg %p297
      $region66: #{prefil_forward.16} parent=63 // pred_check_branch
        %764 = sbr.rel (%p762) target = $region68
      $region67: #{prefil_forward.16} parent=63 // pred_region
        %s765 = smul.u32 2, %s27
      $region68: #{prefil_forward.16} parent=63 // pred_fallthru
        _
    $region64: #{prefil_forward.16} parent=5 // pred_fallthru
      _
    %p766 = scmp.le.s32.totalorder 2, %s17
    // Predicated region
    $region69: #{prefil_forward.16} parent=5 // pred_check
      %p767 = pneg %p766
    $region70: #{prefil_forward.16} parent=5 // pred_check_branch
      %769 = sbr.rel (%p767) target = $region72
    $region71: #{prefil_forward.16} parent=5 // pred_region
      %s770 = ssub.s32 %s17, 2
      // Predicated region
      $region73: #{prefil_forward.16} parent=71 // pred_check
        %p771 = pneg %p303
      $region74: #{prefil_forward.16} parent=71 // pred_check_branch
        %773 = sbr.rel (%p771) target = $region76
      $region75: #{prefil_forward.16} parent=71 // pred_region
        %s774 = smul.u32 2, %s29
        %p775 = scmp.lt.s32.totalorder %s28, 1
        %s776 = scalar_select %p775, %s28, 1
        %p777 = scmp.lt.s32.totalorder %s774, 1
        %s778 = scalar_select %p777, %s774, 1
        %s779 = smul.addr %s776, 2
        %s780 = sadd.s32 %s778, %s779
        %s781 = smul.addr %s780, 8
        %s782 = scalar_lea.vmem %s11, %s781
      $region76: #{prefil_forward.16} parent=71 // pred_fallthru
        _
    $region72: #{prefil_forward.16} parent=5 // pred_fallthru
      _
  $region6: #{prefil_forward.16} parent=0 // loop_footer
    %s21 = sadd.s32 1, %s17
  $region7: #{prefil_forward.16} parent=0 // loop_footer_branch
    %16 = sbr.rel target = $region3
  $region8: #{prefil_forward.16} parent=0 // loop_exit
    _

// kernel: tile.93
$region0: #{tile.93}
  #allocation0 [shape = 's32[1]{0}', space=sflag, size = 0x4, scoped, tag = 'scoped memory for tile.93']
  %s0 = inlined_call_operand.vmem [shape: f32[24], index: 0, kind: input, shape index: {}]
  %s1 = inlined_call_operand.vmem [shape: f32[4,24], index: 1, kind: output, shape index: {}]
  // Predicated region
  $region2: #{tile.93} parent=0 // pred_check
    _
  $region3: #{tile.93} parent=0 // pred_check_branch
    %3 = sbr.rel (0) target = $region5
  $region4: #{tile.93} parent=0 // pred_region
    _
  $region5: #{tile.93} parent=0 // pred_fallthru
    _
  %v4 = vld [vmem:[%s0] ss:$0 sm:$0xff]
  %5 = vst [vmem:[%s1] sm:$0xf] %v4

// kernel: tile.94
$region0: #{tile.94}
  %s0 = inlined_call_operand.vmem [shape: f32[4,24], index: 0, kind: input, shape index: {}]
  %s1 = inlined_call_operand.vmem [shape: f32[1,96], index: 1, kind: output, shape index: {}]
  $region1: #{tile.94} parent=0
    #allocation0 [shape = 'u8[4096]{0}', space=vmem, size = 0x1000, scoped, tag = 'scoped mem for output reshape']
    #allocation1 [shape = 'u8[4096]{0}', space=vmem, size = 0x1000, scoped, tag = 'scoped mem for input reshape']
    %s3 = ssub.s32 16, 1
    %v4 = vld [vmem:[%s0] sm:%s3]
    %5 = vst [vmem:[#allocation1] sm:%s3] %v4
    %v6 = vld [vmem:[#allocation1] sm:$0x1]
    %vm7 = vcmask 195584
    %8 = vst.msk [vmem:[#allocation0] sm:$0x1] %vm7, %v6
    %s9 = scalar_lea.vmem [#allocation1], 3
    %v10 = vld [vmem:[%s9] sm:$0x1]
    %11 = vrot.lane.b32.xlu0 %v10, 72
    %v12 = vpop.permute.xlu0 %11
    %vm13 = vcmask 785984
    %14 = vst.msk [vmem:[#allocation0] sm:$0x1] %vm13, %v12
    %s15 = scalar_lea.vmem [#allocation1], 2
    %v16 = vld [vmem:[%s15] sm:$0x1]
    %17 = vrot.lane.b32.xlu0 %v16, 48
    %v18 = vpop.permute.xlu0 %17
    %vm19 = vcmask 589184
    %20 = vst.msk [vmem:[#allocation0] sm:$0x1] %vm19, %v18
    %s21 = scalar_lea.vmem [#allocation1], 1
    %v22 = vld [vmem:[%s21] sm:$0x1]
    %23 = vrot.lane.b32.xlu0 %v22, 24
    %v24 = vpop.permute.xlu0 %23
    %vm25 = vcmask 392384
    %26 = vst.msk [vmem:[#allocation0] sm:$0x1] %vm25, %v24
    %s28 = ssub.s32 2, 1
    %v29 = vld [vmem:[#allocation0] sm:%s28]
    %s31 = ssub.s32 2, 1
    %32 = vst [vmem:[%s1] sm:%s31] %v29

// kernel: prefil_forward.12
$region0: #{prefil_forward.12}
  #allocation0 [shape = 'u32[]', space=smem, size = 0x4, offset = 0x4, fixed_abs, tag = 'smem constant byte address 0x4 - core index']
  #allocation1 [shape = 'u32[72,128]{1,0:T(1,128)}', space=vmem, size = 0x9000, scoped, tag = 'internal scratch']
  %s0 = inlined_call_operand.vmem [shape: f32[128,3], index: 0, kind: input, shape index: {}]
  %s1 = inlined_call_operand.vmem [shape: bf16[3,24], index: 1, kind: input, shape index: {}]
  %s2 = inlined_call_operand.vmem [shape: f32[1,24], index: 2, kind: input, shape index: {}]
  %s3 = inlined_call_operand.vmem [shape: f32[128,24], index: 3, kind: output, shape index: {}]
  %s4 = sld [smem:[#allocation0]]
  $region22: #{prefil_forward.12} parent=0
    _
  %s6 = ssub.s32 1, %s4
  %s7 = scalar_select 0, %s6, %s4
  // Predicated region
  $region2: #{prefil_forward.12} parent=0 // pred_check
    _
  $region3: #{prefil_forward.12} parent=0 // pred_check_branch
    %9 = sbr.rel (0) target = $region5
  $region4: #{prefil_forward.12} parent=0 // pred_region
    _
  $region5: #{prefil_forward.12} parent=0 // pred_fallthru
    _
  // Predicated region
  $region6: #{prefil_forward.12} parent=0 // pred_check
    _
  $region7: #{prefil_forward.12} parent=0 // pred_check_branch
    %11 = sbr.rel (0) target = $region9
  $region8: #{prefil_forward.12} parent=0 // pred_region
    _
  $region9: #{prefil_forward.12} parent=0 // pred_fallthru
    _
  // Predicated region
  $region10: #{prefil_forward.12} parent=0 // pred_check
    _
  $region11: #{prefil_forward.12} parent=0 // pred_check_branch
    %13 = sbr.rel (0) target = $region13
  $region12: #{prefil_forward.12} parent=0 // pred_region
    _
  $region13: #{prefil_forward.12} parent=0 // pred_fallthru
    _
  %v15 = vld [vmem:[%s0] sm:$0xff]
  %v16 = vld [vmem:[%s0 + $0x8] sm:$0xff]
  %v17 = vld [vmem:[%s0 + $0x10] sm:$0xff]
  %v18 = vld [vmem:[%s0 + $0x18] sm:$0xff]
  %v19 = vld [vmem:[%s0 + $0x20] sm:$0xff]
  %v20 = vld [vmem:[%s0 + $0x28] sm:$0xff]
  %v21 = vld [vmem:[%s0 + $0x30] sm:$0xff]
  %v22 = vld [vmem:[%s0 + $0x38] sm:$0xff]
  %v23 = vld [vmem:[%s0 + $0x40] sm:$0xff]
  %v24 = vld [vmem:[%s0 + $0x48] sm:$0xff]
  %v25 = vld [vmem:[%s0 + $0x50] sm:$0xff]
  %v26 = vld [vmem:[%s0 + $0x58] sm:$0xff]
  %v27 = vld [vmem:[%s0 + $0x60] sm:$0xff]
  %v28 = vld [vmem:[%s0 + $0x68] sm:$0xff]
  %v29 = vld [vmem:[%s0 + $0x70] sm:$0xff]
  %v30 = vld [vmem:[%s0 + $0x78] sm:$0xff]
  %v31 = vpack.c.bf16 %v16, %v15
  %v32 = vpack.c.bf16 %v18, %v17
  %v33 = vpack.c.bf16 %v20, %v19
  %v34 = vpack.c.bf16 %v22, %v21
  %v35 = vpack.c.bf16 %v24, %v23
  %v36 = vpack.c.bf16 %v26, %v25
  %v37 = vpack.c.bf16 %v28, %v27
  %v38 = vpack.c.bf16 %v30, %v29
  %v39 = vld [vmem:[%s1] sm:$0x3]
  %v40 = vld [vmem:[%s2] sm:$0x1]
  %v42 = vperm.slane %v40, 0
  %vm44 = vcmask 23552
  %v46 = vsel %vm44, %v31, 0
  %v49 = vsel %vm44, %v32, 0
  %v52 = vsel %vm44, %v33, 0
  %v55 = vsel %vm44, %v34, 0
  %v58 = vsel %vm44, %v35, 0
  %v61 = vsel %vm44, %v36, 0
  %v64 = vsel %vm44, %v37, 0
  %v67 = vsel %vm44, %v38, 0
  %vm69 = vcmask 1040384
  %vm70 = vcmask 1041408
  %v71 = vsel %vm69, 4294967295, 65535
  %v72 = vsel %vm70, %v71, 0
  %v74 = vand.u32 %v39, %v72
  %76 = vmatpush.bf16.msra.mxu0 0
  %77 = vmatpush.bf16.msra.mxu0 0
  %78 = vmatpush.bf16.msra.mxu0 0
  %79 = vmatpush.bf16.msra.mxu0 0
  %80 = vmatpush.bf16.msra.mxu0 0
  %81 = vmatpush.bf16.msra.mxu0 0
  %82 = vmatpush.bf16.msra.mxu0 0
  %83 = vmatpush.bf16.msra.mxu0 %v74
  %84 = vmatmul.bf16.gmra.mxu0 %v46
  %v85 = vpop.f32.mrf.mxu0
  %v86 = vadd.f32 %v42, %v85
  %v87 = vpop.f32.mrf.mxu0
  %v88 = vadd.f32 %v42, %v87
  %89 = vmatmul.bf16.gmra.mxu0 %v49
  %v90 = vpop.f32.mrf.mxu0
  %v91 = vadd.f32 %v42, %v90
  %v92 = vpop.f32.mrf.mxu0
  %v93 = vadd.f32 %v42, %v92
  %94 = vmatmul.bf16.gmra.mxu0 %v52
  %v95 = vpop.f32.mrf.mxu0
  %v96 = vadd.f32 %v42, %v95
  %v97 = vpop.f32.mrf.mxu0
  %v98 = vadd.f32 %v42, %v97
  %99 = vmatmul.bf16.gmra.mxu0 %v55
  %v100 = vpop.f32.mrf.mxu0
  %v101 = vadd.f32 %v42, %v100
  %v102 = vpop.f32.mrf.mxu0
  %v103 = vadd.f32 %v42, %v102
  %104 = vmatmul.bf16.gmra.mxu0 %v58
  %v105 = vpop.f32.mrf.mxu0
  %v106 = vadd.f32 %v42, %v105
  %v107 = vpop.f32.mrf.mxu0
  %v108 = vadd.f32 %v42, %v107
  %109 = vmatmul.bf16.gmra.mxu0 %v61
  %v110 = vpop.f32.mrf.mxu0
  %v111 = vadd.f32 %v42, %v110
  %v112 = vpop.f32.mrf.mxu0
  %v113 = vadd.f32 %v42, %v112
  %114 = vmatmul.bf16.gmra.mxu0 %v64
  %v115 = vpop.f32.mrf.mxu0
  %v116 = vadd.f32 %v42, %v115
  %v117 = vpop.f32.mrf.mxu0
  %v118 = vadd.f32 %v42, %v117
  %119 = vmatmul.bf16.gmra.mxu0 %v67
  %v120 = vpop.f32.mrf.mxu0
  %v121 = vadd.f32 %v42, %v120
  %v122 = vpop.f32.mrf.mxu0
  %v123 = vadd.f32 %v42, %v122
  %124 = vdwg.mxu0
  %v125 = vmax.f32 %v86, 0.0
  %v126 = vmax.f32 %v88, 0.0
  %v127 = vmax.f32 %v91, 0.0
  %v128 = vmax.f32 %v93, 0.0
  %v129 = vmax.f32 %v96, 0.0
  %v130 = vmax.f32 %v98, 0.0
  %v131 = vmax.f32 %v101, 0.0
  %v132 = vmax.f32 %v103, 0.0
  %v133 = vmax.f32 %v106, 0.0
  %v134 = vmax.f32 %v108, 0.0
  %v135 = vmax.f32 %v111, 0.0
  %v136 = vmax.f32 %v113, 0.0
  %v137 = vmax.f32 %v116, 0.0
  %v138 = vmax.f32 %v118, 0.0
  %v139 = vmax.f32 %v121, 0.0
  %v140 = vmax.f32 %v123, 0.0
  %vm141 = vcmask 195584
  %142 = vst.msk [vmem:[%s3] sm:$0xff] %vm141, %v125
  %143 = vst.msk [vmem:[%s3 + $0x8] sm:$0xff] %vm141, %v126
  %144 = vst.msk [vmem:[%s3 + $0x10] sm:$0xff] %vm141, %v127
  %145 = vst.msk [vmem:[%s3 + $0x18] sm:$0xff] %vm141, %v128
  %146 = vst.msk [vmem:[%s3 + $0x20] sm:$0xff] %vm141, %v129
  %147 = vst.msk [vmem:[%s3 + $0x28] sm:$0xff] %vm141, %v130
  %148 = vst.msk [vmem:[%s3 + $0x30] sm:$0xff] %vm141, %v131
  %149 = vst.msk [vmem:[%s3 + $0x38] sm:$0xff] %vm141, %v132
  %150 = vst.msk [vmem:[%s3 + $0x40] sm:$0xff] %vm141, %v133
  %151 = vst.msk [vmem:[%s3 + $0x48] sm:$0xff] %vm141, %v134
  %152 = vst.msk [vmem:[%s3 + $0x50] sm:$0xff] %vm141, %v135
  %153 = vst.msk [vmem:[%s3 + $0x58] sm:$0xff] %vm141, %v136
  %154 = vst.msk [vmem:[%s3 + $0x60] sm:$0xff] %vm141, %v137
  %155 = vst.msk [vmem:[%s3 + $0x68] sm:$0xff] %vm141, %v138
  %156 = vst.msk [vmem:[%s3 + $0x70] sm:$0xff] %vm141, %v139
  %157 = vst.msk [vmem:[%s3 + $0x78] sm:$0xff] %vm141, %v140
  // Predicated region
  $region14: #{prefil_forward.12} parent=0 // pred_check
    _
  $region15: #{prefil_forward.12} parent=0 // pred_check_branch
    %159 = sbr.rel (0) target = $region17
  $region16: #{prefil_forward.12} parent=0 // pred_region
    _
  $region17: #{prefil_forward.12} parent=0 // pred_fallthru
    _
  // Predicated region
  $region18: #{prefil_forward.12} parent=0 // pred_check
    _
  $region19: #{prefil_forward.12} parent=0 // pred_check_branch
    %161 = sbr.rel (0) target = $region21
  $region20: #{prefil_forward.12} parent=0 // pred_region
    _
  $region21: #{prefil_forward.12} parent=0 // pred_fallthru
    _

// kernel: prefil_forward.17
$region0: #{prefil_forward.17}
  #allocation0 [shape = 'u32[]', space=smem, size = 0x4, offset = 0x4, fixed_abs, tag = 'smem constant byte address 0x4 - core index']
  #allocation1 [shape = 'u32[72,128]{1,0:T(1,128)}', space=vmem, size = 0x9000, scoped, tag = 'internal scratch']
  %s0 = inlined_call_operand.vmem [shape: f32[32,96], index: 0, kind: input, shape index: {}]
  %s1 = inlined_call_operand.vmem [shape: f32[1,96], index: 1, kind: output, shape index: {0}]
  %s2 = inlined_call_operand.vmem [shape: f32[1,96], index: 2, kind: output, shape index: {1}]
  %3 = xla_tuple %s1, %s2
  %s4 = sld [smem:[#allocation0]]
  $region26: #{prefil_forward.17} parent=0
    _
  %s6 = ssub.s32 1, %s4
  %s7 = scalar_select 0, %s6, %s4
  // Predicated region
  $region2: #{prefil_forward.17} parent=0 // pred_check
    _
  $region3: #{prefil_forward.17} parent=0 // pred_check_branch
    %9 = sbr.rel (0) target = $region5
  $region4: #{prefil_forward.17} parent=0 // pred_region
    _
  $region5: #{prefil_forward.17} parent=0 // pred_fallthru
    _
  %p10 = scmp.eq.s32.totalorder 0, 0
  // Predicated region
  $region6: #{prefil_forward.17} parent=0 // pred_check
    %p11 = pneg %p10
  $region7: #{prefil_forward.17} parent=0 // pred_check_branch
    %13 = sbr.rel (%p11) target = $region9
  $region8: #{prefil_forward.17} parent=0 // pred_region
    %vm14 = vcmask 778240
    %15 = vst.msk [vmem:[%s1] sm:$0x1] %vm14, 0.0
    %16 = vst.msk [vmem:[%s2] sm:$0x1] %vm14, 0.0
  $region9: #{prefil_forward.17} parent=0 // pred_fallthru
    _
  %v17 = vld [vmem:[%s0] sm:$0xff]
  %v18 = vld [vmem:[%s0 + $0x8] sm:$0xff]
  %v19 = vld [vmem:[%s0 + $0x10] sm:$0xff]
  %v20 = vld [vmem:[%s0 + $0x18] sm:$0xff]
  %v21 = vld [vmem:[%s1] sm:$0x1]
  %vm22 = vcmask 785408
  %v23 = vsel %vm22, %v17, 0.0
  %v24 = vsel %vm22, %v18, 0.0
  %v25 = vadd.f32 %v23, %v24
  %v26 = vsel %vm22, %v19, 0.0
  %v27 = vadd.f32 %v25, %v26
  %v28 = vsel %vm22, %v20, 0.0
  %v29 = vadd.f32 %v27, %v28
  %v30 = vrot.slane %v29, 4
  %v31 = vadd.f32 %v29, %v30
  %v32 = vrot.slane %v31, 2
  %v33 = vadd.f32 %v31, %v32
  %v34 = vrot.slane %v33, 1
  %v35 = vadd.f32 %v33, %v34
  %v36 = vadd.f32 %v21, %v35
  %vm37 = vcmask 778240
  %38 = vst.msk [vmem:[%s1] sm:$0x1] %vm37, %v36
  %v39 = vld [vmem:[%s2] sm:$0x1]
  %v40 = vmul.f32 %v17, %v17
  %v41 = vmul.f32 %v18, %v18
  %v42 = vmul.f32 %v19, %v19
  %v43 = vmul.f32 %v20, %v20
  %v44 = vsel %vm22, %v40, 0.0
  %v45 = vsel %vm22, %v41, 0.0
  %v46 = vadd.f32 %v44, %v45
  %v47 = vsel %vm22, %v42, 0.0
  %v48 = vadd.f32 %v46, %v47
  %v49 = vsel %vm22, %v43, 0.0
  %v50 = vadd.f32 %v48, %v49
  %v51 = vrot.slane %v50, 4
  %v52 = vadd.f32 %v50, %v51
  %v53 = vrot.slane %v52, 2
  %v54 = vadd.f32 %v52, %v53
  %v55 = vrot.slane %v54, 1
  %v56 = vadd.f32 %v54, %v55
  %v57 = vadd.f32 %v39, %v56
  %58 = vst.msk [vmem:[%s2] sm:$0x1] %vm37, %v57
  // Predicated region
  $region10: #{prefil_forward.17} parent=0 // pred_check
    _
  $region11: #{prefil_forward.17} parent=0 // pred_check_branch
    %60 = sbr.rel (0) target = $region13
  $region12: #{prefil_forward.17} parent=0 // pred_region
    _
  $region13: #{prefil_forward.17} parent=0 // pred_fallthru
    _
  // Predicated region
  $region14: #{prefil_forward.17} parent=0 // pred_check
    _
  $region15: #{prefil_forward.17} parent=0 // pred_check_branch
    %62 = sbr.rel (0) target = $region17
  $region16: #{prefil_forward.17} parent=0 // pred_region
    _
  $region17: #{prefil_forward.17} parent=0 // pred_fallthru
    _
  // Predicated region
  $region18: #{prefil_forward.17} parent=0 // pred_check
    _
  $region19: #{prefil_forward.17} parent=0 // pred_check_branch
    %64 = sbr.rel (0) target = $region21
  $region20: #{prefil_forward.17} parent=0 // pred_region
    _
  $region21: #{prefil_forward.17} parent=0 // pred_fallthru
    _
  // Predicated region
  $region22: #{prefil_forward.17} parent=0 // pred_check
    _
  $region23: #{prefil_forward.17} parent=0 // pred_check_branch
    %66 = sbr.rel (0) target = $region25
  $region24: #{prefil_forward.17} parent=0 // pred_region
    _
  $region25: #{prefil_forward.17} parent=0 // pred_fallthru
    _

// kernel: prefil_forward.19
$region0: #{prefil_forward.19}
  #allocation0 [shape = 'u32[]', space=smem, size = 0x4, offset = 0x4, fixed_abs, tag = 'smem constant byte address 0x4 - core index']
  #allocation1 [shape = 'u32[72,128]{1,0:T(1,128)}', space=vmem, size = 0x9000, scoped, tag = 'internal scratch']
  %s0 = inlined_call_operand.vmem [shape: f32[2,16,96], index: 0, kind: input, shape index: {}]
  %s1 = inlined_call_operand.vmem [shape: f32[1,96], index: 1, kind: input, shape index: {}]
  %s2 = inlined_call_operand.vmem [shape: f32[1,96], index: 2, kind: input, shape index: {}]
  %s3 = inlined_call_operand.vmem [shape: f32[2,1,128], index: 3, kind: input, shape index: {}]
  %s4 = inlined_call_operand.vmem [shape: bf16[96,128], index: 4, kind: input, shape index: {}]
  %s5 = inlined_call_operand.vmem [shape: bf16[128,128], index: 5, kind: input, shape index: {}]
  %s6 = inlined_call_operand.vmem [shape: f32[1,128], index: 6, kind: input, shape index: {}]
  %s7 = inlined_call_operand.vmem [shape: bf16[128,128], index: 7, kind: input, shape index: {}]
  %s8 = inlined_call_operand.vmem [shape: f32[1,128], index: 8, kind: input, shape index: {}]
  %s9 = inlined_call_operand.vmem [shape: bf16[128,128], index: 9, kind: input, shape index: {}]
  %s10 = inlined_call_operand.vmem [shape: f32[1,128], index: 10, kind: input, shape index: {}]
  %s11 = inlined_call_operand.vmem [shape: f32[2,16,128], index: 11, kind: output, shape index: {}]
  %s12 = sld [smem:[#allocation0]]
  $region77: #{prefil_forward.19} parent=0
    _
  %s14 = ssub.s32 1, %s12
  %s15 = scalar_select 0, %s14, %s12
  loop: start=0, step=1, limit=4
  $region2: #{prefil_forward.19} parent=0 // loop_pre_header
    _
  $region3: #{prefil_forward.19} parent=0 // loop_header
    %s17 = sphi 0, %s21
    %p18 = scmp.ge.s32.totalorder %s17, 4
    %s24 = sphi 0, %s36
    %s25 = sphi 0, %s32
    %s26 = sphi 0, %s24
    %s27 = sphi 0, %s25
    %s28 = sphi 0, %s26
    %s29 = sphi 0, %s27
    %s41 = sphi 0, %s43
    %s44 = sphi 0, %s41
    %s45 = sphi 0, %s44
    %s61 = sphi 0, %s45
    %s65 = sphi 0, %s65
    %s67 = sphi 0, %s65
    %s68 = sphi 0, %s67
    %s82 = sphi 0, %s68
    %s86 = sphi 0, %s86
    %s88 = sphi 0, %s86
    %s89 = sphi 0, %s88
    %s103 = sphi 0, %s89
    %s109 = sphi 0, %s111
    %s112 = sphi 0, %s109
    %s113 = sphi 0, %s112
    %s129 = sphi 0, %s113
    %s133 = sphi 0, %s133
    %s135 = sphi 0, %s133
    %s136 = sphi 0, %s135
    %s150 = sphi 0, %s136
    %s154 = sphi 0, %s154
    %s156 = sphi 0, %s154
    %s157 = sphi 0, %s156
    %s171 = sphi 0, %s157
    %s175 = sphi 0, %s175
    %s177 = sphi 0, %s175
    %s178 = sphi 0, %s177
    %s192 = sphi 0, %s178
    %s196 = sphi 0, %s196
    %s198 = sphi 0, %s196
    %s199 = sphi 0, %s198
    %s213 = sphi 0, %s199
    %s217 = sphi 0, %s217
    %s219 = sphi 0, %s217
    %s220 = sphi 0, %s219
    %s234 = sphi 0, %s220
    %s238 = sphi 0, %s238
    %s240 = sphi 0, %s238
    %s241 = sphi 0, %s240
    %s255 = sphi 0, %s241
    %s259 = sphi 0, %s259
    %s261 = sphi 0, %s259
    %s262 = sphi 0, %s261
    %s276 = sphi 0, %s262
    %s284 = sphi 0, %s286
    %s287 = sphi 0, %s284
    %s288 = sphi 0, %s287
    %s304 = sphi 0, %s288
  $region4: #{prefil_forward.19} parent=0 // loop_header_branch
    %20 = sbr.rel (%p18) target = $region8
  $region5: #{prefil_forward.19} parent=0 // loop_body
    %s22 = ssub.s32 %s17, 1
    %s23 = ssub.s32 %s17, 2
    %s30 = sadd.s32 1, %s25
    %p31 = scmp.ge.s32.totalorder %s30, 1
    %s32 = scalar_select %p31, 0, %s30
    %s33 = sadd.s32 1, %s24
    %s34 = scalar_select %p31, %s33, %s24
    %p35 = scmp.ge.s32.totalorder %s34, 2
    %s36 = scalar_select %p35, 0, %s34
    %s37 = ssub.s32 %s24, %s36
    %s38 = ssub.s32 %s25, %s32
    %s39 = sor.u32 %s37, %s38
    %p40 = scmp.eq.s32.totalorder %s39, 0
    %s42 = sadd.s32 %s41, 1
    %s43 = scalar_select %p40, %s41, %s42
    %p46 = pneg %p40
    %p47 = scmp.eq.s32.totalorder %s17, 1
    %p48 = por %p46, %p47
    %p49 = scmp.ne.s32.totalorder %s41, %s44
    %p50 = scmp.eq.s32.totalorder %s17, 0
    %p51 = por %p49, %p50
    %p52 = scmp.ne.s32.totalorder %s41, %s44
    %p53 = scmp.eq.s32.totalorder %s22, 1
    %p54 = por %p52, %p53
    %p55 = scmp.ne.s32.totalorder %s44, %s45
    %p56 = scmp.eq.s32.totalorder %s22, 0
    %p57 = por %p55, %p56
    %p58 = scmp.ne.s32.totalorder %s44, %s45
    %p59 = scmp.eq.s32.totalorder %s23, 1
    %p60 = por %p58, %p59
    %p62 = scmp.ne.s32.totalorder %s45, %s61
    %p63 = scmp.eq.s32.totalorder %s23, 0
    %p64 = por %p62, %p63
    %s66 = sadd.s32 %s65, 1
    %p69 = scmp.eq.s32.totalorder %s17, 1
    %p70 = scmp.ne.s32.totalorder %s65, %s67
    %p71 = scmp.eq.s32.totalorder %s17, 0
    %p72 = por %p70, %p71
    %p73 = scmp.ne.s32.totalorder %s65, %s67
    %p74 = scmp.eq.s32.totalorder %s22, 1
    %p75 = por %p73, %p74
    %p76 = scmp.ne.s32.totalorder %s67, %s68
    %p77 = scmp.eq.s32.totalorder %s22, 0
    %p78 = por %p76, %p77
    %p79 = scmp.ne.s32.totalorder %s67, %s68
    %p80 = scmp.eq.s32.totalorder %s23, 1
    %p81 = por %p79, %p80
    %p83 = scmp.ne.s32.totalorder %s68, %s82
    %p84 = scmp.eq.s32.totalorder %s23, 0
    %p85 = por %p83, %p84
    %s87 = sadd.s32 %s86, 1
    %p90 = scmp.eq.s32.totalorder %s17, 1
    %p91 = scmp.ne.s32.totalorder %s86, %s88
    %p92 = scmp.eq.s32.totalorder %s17, 0
    %p93 = por %p91, %p92
    %p94 = scmp.ne.s32.totalorder %s86, %s88
    %p95 = scmp.eq.s32.totalorder %s22, 1
    %p96 = por %p94, %p95
    %p97 = scmp.ne.s32.totalorder %s88, %s89
    %p98 = scmp.eq.s32.totalorder %s22, 0
    %p99 = por %p97, %p98
    %p100 = scmp.ne.s32.totalorder %s88, %s89
    %p101 = scmp.eq.s32.totalorder %s23, 1
    %p102 = por %p100, %p101
    %p104 = scmp.ne.s32.totalorder %s89, %s103
    %p105 = scmp.eq.s32.totalorder %s23, 0
    %p106 = por %p104, %p105
    %s107 = ssub.s32 %s24, %s36
    %p108 = scmp.eq.s32.totalorder %s107, 0
    %s110 = sadd.s32 %s109, 1
    %s111 = scalar_select %p108, %s109, %s110
    %p114 = pneg %p108
    %p115 = scmp.eq.s32.totalorder %s17, 1
    %p116 = por %p114, %p115
    %p117 = scmp.ne.s32.totalorder %s109, %s112
    %p118 = scmp.eq.s32.totalorder %s17, 0
    %p119 = por %p117, %p118
    %p120 = scmp.ne.s32.totalorder %s109, %s112
    %p121 = scmp.eq.s32.totalorder %s22, 1
    %p122 = por %p120, %p121
    %p123 = scmp.ne.s32.totalorder %s112, %s113
    %p124 = scmp.eq.s32.totalorder %s22, 0
    %p125 = por %p123, %p124
    %p126 = scmp.ne.s32.totalorder %s112, %s113
    %p127 = scmp.eq.s32.totalorder %s23, 1
    %p128 = por %p126, %p127
    %p130 = scmp.ne.s32.totalorder %s113, %s129
    %p131 = scmp.eq.s32.totalorder %s23, 0
    %p132 = por %p130, %p131
    %s134 = sadd.s32 %s133, 1
    %p137 = scmp.eq.s32.totalorder %s17, 1
    %p138 = scmp.ne.s32.totalorder %s133, %s135
    %p139 = scmp.eq.s32.totalorder %s17, 0
    %p140 = por %p138, %p139
    %p141 = scmp.ne.s32.totalorder %s133, %s135
    %p142 = scmp.eq.s32.totalorder %s22, 1
    %p143 = por %p141, %p142
    %p144 = scmp.ne.s32.totalorder %s135, %s136
    %p145 = scmp.eq.s32.totalorder %s22, 0
    %p146 = por %p144, %p145
    %p147 = scmp.ne.s32.totalorder %s135, %s136
    %p148 = scmp.eq.s32.totalorder %s23, 1
    %p149 = por %p147, %p148
    %p151 = scmp.ne.s32.totalorder %s136, %s150
    %p152 = scmp.eq.s32.totalorder %s23, 0
    %p153 = por %p151, %p152
    %s155 = sadd.s32 %s154, 1
    %p158 = scmp.eq.s32.totalorder %s17, 1
    %p159 = scmp.ne.s32.totalorder %s154, %s156
    %p160 = scmp.eq.s32.totalorder %s17, 0
    %p161 = por %p159, %p160
    %p162 = scmp.ne.s32.totalorder %s154, %s156
    %p163 = scmp.eq.s32.totalorder %s22, 1
    %p164 = por %p162, %p163
    %p165 = scmp.ne.s32.totalorder %s156, %s157
    %p166 = scmp.eq.s32.totalorder %s22, 0
    %p167 = por %p165, %p166
    %p168 = scmp.ne.s32.totalorder %s156, %s157
    %p169 = scmp.eq.s32.totalorder %s23, 1
    %p170 = por %p168, %p169
    %p172 = scmp.ne.s32.totalorder %s157, %s171
    %p173 = scmp.eq.s32.totalorder %s23, 0
    %p174 = por %p172, %p173
    %s176 = sadd.s32 %s175, 1
    %p179 = scmp.eq.s32.totalorder %s17, 1
    %p180 = scmp.ne.s32.totalorder %s175, %s177
    %p181 = scmp.eq.s32.totalorder %s17, 0
    %p182 = por %p180, %p181
    %p183 = scmp.ne.s32.totalorder %s175, %s177
    %p184 = scmp.eq.s32.totalorder %s22, 1
    %p185 = por %p183, %p184
    %p186 = scmp.ne.s32.totalorder %s177, %s178
    %p187 = scmp.eq.s32.totalorder %s22, 0
    %p188 = por %p186, %p187
    %p189 = scmp.ne.s32.totalorder %s177, %s178
    %p190 = scmp.eq.s32.totalorder %s23, 1
    %p191 = por %p189, %p190
    %p193 = scmp.ne.s32.totalorder %s178, %s192
    %p194 = scmp.eq.s32.totalorder %s23, 0
    %p195 = por %p193, %p194
    %s197 = sadd.s32 %s196, 1
    %p200 = scmp.eq.s32.totalorder %s17, 1
    %p201 = scmp.ne.s32.totalorder %s196, %s198
    %p202 = scmp.eq.s32.totalorder %s17, 0
    %p203 = por %p201, %p202
    %p204 = scmp.ne.s32.totalorder %s196, %s198
    %p205 = scmp.eq.s32.totalorder %s22, 1
    %p206 = por %p204, %p205
    %p207 = scmp.ne.s32.totalorder %s198, %s199
    %p208 = scmp.eq.s32.totalorder %s22, 0
    %p209 = por %p207, %p208
    %p210 = scmp.ne.s32.totalorder %s198, %s199
    %p211 = scmp.eq.s32.totalorder %s23, 1
    %p212 = por %p210, %p211
    %p214 = scmp.ne.s32.totalorder %s199, %s213
    %p215 = scmp.eq.s32.totalorder %s23, 0
    %p216 = por %p214, %p215
    %s218 = sadd.s32 %s217, 1
    %p221 = scmp.eq.s32.totalorder %s17, 1
    %p222 = scmp.ne.s32.totalorder %s217, %s219
    %p223 = scmp.eq.s32.totalorder %s17, 0
    %p224 = por %p222, %p223
    %p225 = scmp.ne.s32.totalorder %s217, %s219
    %p226 = scmp.eq.s32.totalorder %s22, 1
    %p227 = por %p225, %p226
    %p228 = scmp.ne.s32.totalorder %s219, %s220
    %p229 = scmp.eq.s32.totalorder %s22, 0
    %p230 = por %p228, %p229
    %p231 = scmp.ne.s32.totalorder %s219, %s220
    %p232 = scmp.eq.s32.totalorder %s23, 1
    %p233 = por %p231, %p232
    %p235 = scmp.ne.s32.totalorder %s220, %s234
    %p236 = scmp.eq.s32.totalorder %s23, 0
    %p237 = por %p235, %p236
    %s239 = sadd.s32 %s238, 1
    %p242 = scmp.eq.s32.totalorder %s17, 1
    %p243 = scmp.ne.s32.totalorder %s238, %s240
    %p244 = scmp.eq.s32.totalorder %s17, 0
    %p245 = por %p243, %p244
    %p246 = scmp.ne.s32.totalorder %s238, %s240
    %p247 = scmp.eq.s32.totalorder %s22, 1
    %p248 = por %p246, %p247
    %p249 = scmp.ne.s32.totalorder %s240, %s241
    %p250 = scmp.eq.s32.totalorder %s22, 0
    %p251 = por %p249, %p250
    %p252 = scmp.ne.s32.totalorder %s240, %s241
    %p253 = scmp.eq.s32.totalorder %s23, 1
    %p254 = por %p252, %p253
    %p256 = scmp.ne.s32.totalorder %s241, %s255
    %p257 = scmp.eq.s32.totalorder %s23, 0
    %p258 = por %p256, %p257
    %s260 = sadd.s32 %s259, 1
    %p263 = scmp.eq.s32.totalorder %s17, 1
    %p264 = scmp.ne.s32.totalorder %s259, %s261
    %p265 = scmp.eq.s32.totalorder %s17, 0
    %p266 = por %p264, %p265
    %p267 = scmp.ne.s32.totalorder %s259, %s261
    %p268 = scmp.eq.s32.totalorder %s22, 1
    %p269 = por %p267, %p268
    %p270 = scmp.ne.s32.totalorder %s261, %s262
    %p271 = scmp.eq.s32.totalorder %s22, 0
    %p272 = por %p270, %p271
    %p273 = scmp.ne.s32.totalorder %s261, %s262
    %p274 = scmp.eq.s32.totalorder %s23, 1
    %p275 = por %p273, %p274
    %p277 = scmp.ne.s32.totalorder %s262, %s276
    %p278 = scmp.eq.s32.totalorder %s23, 0
    %p279 = por %p277, %p278
    %s280 = ssub.s32 %s24, %s36
    %s281 = ssub.s32 %s25, %s32
    %s282 = sor.u32 %s280, %s281
    %p283 = scmp.eq.s32.totalorder %s282, 0
    %s285 = sadd.s32 %s284, 1
    %s286 = scalar_select %p283, %s284, %s285
    %p289 = pneg %p283
    %p290 = scmp.eq.s32.totalorder %s17, 1
    %p291 = por %p289, %p290
    %p292 = scmp.ne.s32.totalorder %s284, %s287
    %p293 = scmp.eq.s32.totalorder %s17, 0
    %p294 = por %p292, %p293
    %p295 = scmp.ne.s32.totalorder %s284, %s287
    %p296 = scmp.eq.s32.totalorder %s22, 1
    %p297 = por %p295, %p296
    %p298 = scmp.ne.s32.totalorder %s287, %s288
    %p299 = scmp.eq.s32.totalorder %s22, 0
    %p300 = por %p298, %p299
    %p301 = scmp.ne.s32.totalorder %s287, %s288
    %p302 = scmp.eq.s32.totalorder %s23, 1
    %p303 = por %p301, %p302
    %p305 = scmp.ne.s32.totalorder %s288, %s304
    %p306 = scmp.eq.s32.totalorder %s23, 0
    %p307 = por %p305, %p306
    %p308 = scmp.le.s32.totalorder 1, %s17
    %p309 = scmp.lt.s32.totalorder %s17, 3
    %p310 = pnand %p308, %p309
    %p311 = pneg %p310
    // Predicated region
    $region9: #{prefil_forward.19} parent=5 // pred_check
      _
    $region10: #{prefil_forward.19} parent=5 // pred_check_branch
      %313 = sbr.rel (%p310) target = $region12
    $region11: #{prefil_forward.19} parent=5 // pred_region
      %s314 = ssub.s32 %s17, 1
      // Predicated region
      $region13: #{prefil_forward.19} parent=11 // pred_check
        %p315 = pneg %p78
      $region14: #{prefil_forward.19} parent=11 // pred_check_branch
        %317 = sbr.rel (%p315) target = $region16
      $region15: #{prefil_forward.19} parent=11 // pred_region
        _
      $region16: #{prefil_forward.19} parent=11 // pred_fallthru
        _
      // Predicated region
      $region17: #{prefil_forward.19} parent=11 // pred_check
        %p318 = pneg %p99
      $region18: #{prefil_forward.19} parent=11 // pred_check_branch
        %320 = sbr.rel (%p318) target = $region20
      $region19: #{prefil_forward.19} parent=11 // pred_region
        _
      $region20: #{prefil_forward.19} parent=11 // pred_fallthru
        _
      // Predicated region
      $region21: #{prefil_forward.19} parent=11 // pred_check
        %p321 = pneg %p146
      $region22: #{prefil_forward.19} parent=11 // pred_check_branch
        %323 = sbr.rel (%p321) target = $region24
      $region23: #{prefil_forward.19} parent=11 // pred_region
        _
      $region24: #{prefil_forward.19} parent=11 // pred_fallthru
        _
      // Predicated region
      $region25: #{prefil_forward.19} parent=11 // pred_check
        %p324 = pneg %p167
      $region26: #{prefil_forward.19} parent=11 // pred_check_branch
        %326 = sbr.rel (%p324) target = $region28
      $region27: #{prefil_forward.19} parent=11 // pred_region
        _
      $region28: #{prefil_forward.19} parent=11 // pred_fallthru
        _
      // Predicated region
      $region29: #{prefil_forward.19} parent=11 // pred_check
        %p327 = pneg %p188
      $region30: #{prefil_forward.19} parent=11 // pred_check_branch
        %329 = sbr.rel (%p327) target = $region32
      $region31: #{prefil_forward.19} parent=11 // pred_region
        _
      $region32: #{prefil_forward.19} parent=11 // pred_fallthru
        _
      // Predicated region
      $region33: #{prefil_forward.19} parent=11 // pred_check
        %p330 = pneg %p209
      $region34: #{prefil_forward.19} parent=11 // pred_check_branch
        %332 = sbr.rel (%p330) target = $region36
      $region35: #{prefil_forward.19} parent=11 // pred_region
        _
      $region36: #{prefil_forward.19} parent=11 // pred_fallthru
        _
      // Predicated region
      $region37: #{prefil_forward.19} parent=11 // pred_check
        %p333 = pneg %p230
      $region38: #{prefil_forward.19} parent=11 // pred_check_branch
        %335 = sbr.rel (%p333) target = $region40
      $region39: #{prefil_forward.19} parent=11 // pred_region
        _
      $region40: #{prefil_forward.19} parent=11 // pred_fallthru
        _
      // Predicated region
      $region41: #{prefil_forward.19} parent=11 // pred_check
        %p336 = pneg %p251
      $region42: #{prefil_forward.19} parent=11 // pred_check_branch
        %338 = sbr.rel (%p336) target = $region44
      $region43: #{prefil_forward.19} parent=11 // pred_region
        _
      $region44: #{prefil_forward.19} parent=11 // pred_fallthru
        _
      // Predicated region
      $region45: #{prefil_forward.19} parent=11 // pred_check
        %p339 = pneg %p272
      $region46: #{prefil_forward.19} parent=11 // pred_check_branch
        %341 = sbr.rel (%p339) target = $region48
      $region47: #{prefil_forward.19} parent=11 // pred_region
        _
      $region48: #{prefil_forward.19} parent=11 // pred_fallthru
        _
    $region12: #{prefil_forward.19} parent=5 // pred_fallthru
      _
    %p342 = scmp.lt.s32.totalorder %s17, 2
    // Predicated region
    $region49: #{prefil_forward.19} parent=5 // pred_check
      %p343 = pneg %p342
    $region50: #{prefil_forward.19} parent=5 // pred_check_branch
      %345 = sbr.rel (%p343) target = $region52
    $region51: #{prefil_forward.19} parent=5 // pred_region
      // Predicated region
      $region53: #{prefil_forward.19} parent=51 // pred_check
        %p346 = pneg %p51
      $region54: #{prefil_forward.19} parent=51 // pred_check_branch
        %348 = sbr.rel (%p346) target = $region56
      $region55: #{prefil_forward.19} parent=51 // pred_region
        %s349 = smul.u32 2, %s25
        %p350 = scmp.lt.s32.totalorder %s24, 1
        %s351 = scalar_select %p350, %s24, 1
        %p352 = scmp.lt.s32.totalorder %s349, 1
        %s353 = scalar_select %p352, %s349, 1
        %s354 = smul.addr %s351, 2
        %s355 = sadd.s32 %s353, %s354
        %s356 = smul.addr %s355, 8
        %s357 = scalar_lea.vmem %s0, %s356
        %s358 = smul.u32 2, %s25
      $region56: #{prefil_forward.19} parent=51 // pred_fallthru
        _
      // Predicated region
      $region57: #{prefil_forward.19} parent=51 // pred_check
        %p359 = pneg %p119
      $region58: #{prefil_forward.19} parent=51 // pred_check_branch
        %361 = sbr.rel (%p359) target = $region60
      $region59: #{prefil_forward.19} parent=51 // pred_region
        %p362 = scmp.lt.s32.totalorder %s24, 1
        %s363 = scalar_select %p362, %s24, 1
        %s364 = scalar_lea.vmem %s3, %s363
      $region60: #{prefil_forward.19} parent=51 // pred_fallthru
        _
    $region52: #{prefil_forward.19} parent=5 // pred_fallthru
      _
    %p365 = scmp.le.s32.totalorder 1, %s17
    %p366 = scmp.lt.s32.totalorder %s17, 3
    %p367 = pnand %p365, %p366
    %p368 = pneg %p367
    // Predicated region
    $region61: #{prefil_forward.19} parent=5 // pred_check
      _
    $region62: #{prefil_forward.19} parent=5 // pred_check_branch
      %370 = sbr.rel (%p367) target = $region64
    $region63: #{prefil_forward.19} parent=5 // pred_region
      %s371 = ssub.s32 %s17, 1
      %s372 = smul.u32 2, %s27
      %p373 = scmp.lt.s32.totalorder %s26, 1
      %s374 = scalar_select %p373, %s26, 1
      %p375 = scmp.lt.s32.totalorder %s372, 1
      %s376 = scalar_select %p375, %s372, 1
      %s377 = smul.addr %s374, 2
      %s378 = sadd.s32 %s376, %s377
      %s379 = smul.addr %s378, 8
      %s380 = scalar_lea.vmem %s0, %s379
      %p381 = pneg %p57
      %p382 = pneg %p54
      %p383 = pneg %p78
      %p384 = pneg %p75
      %p385 = pneg %p99
      %p386 = pneg %p96
      %p387 = scmp.lt.s32.totalorder %s26, 1
      %s388 = scalar_select %p387, %s26, 1
      %s389 = scalar_lea.vmem %s3, %s388
      %p390 = pneg %p125
      %p391 = pneg %p122
      %p392 = pneg %p146
      %p393 = pneg %p143
      %p394 = pneg %p167
      %p395 = pneg %p164
      %p396 = pneg %p188
      %p397 = pneg %p185
      %p398 = pneg %p209
      %p399 = pneg %p206
      %p400 = pneg %p230
      %p401 = pneg %p227
      %p402 = pneg %p251
      %p403 = pneg %p248
      %p404 = pneg %p272
      %p405 = pneg %p269
      %p406 = pneg %p300
      %p407 = pneg %p297
      %s408 = smul.u32 2, %s27
      %p409 = scmp.lt.s32.totalorder %s26, 1
      %s410 = scalar_select %p409, %s26, 1
      %p411 = scmp.lt.s32.totalorder %s408, 1
      %s412 = scalar_select %p411, %s408, 1
      %s413 = smul.addr %s410, 2
      %s414 = sadd.s32 %s412, %s413
      %s415 = smul.addr %s414, 8
      %s416 = scalar_lea.vmem %s11, %s415
      %s417 = smul.u32 2, %s27
      %p418 = scmp.lt.s32.totalorder %s26, 1
      %s419 = scalar_select %p418, %s26, 1
      %p420 = scmp.lt.s32.totalorder %s417, 1
      %s421 = scalar_select %p420, %s417, 1
      %s422 = smul.addr %s419, 2
      %s423 = sadd.s32 %s421, %s422
      %s424 = smul.addr %s423, 8
      %s425 = scalar_lea.vmem %s0, %s424
      %s426 = smul.u32 2, %s27
      %p427 = scmp.lt.s32.totalorder %s26, 1
      %s428 = scalar_select %p427, %s26, 1
      %s429 = scalar_lea.vmem %s3, %s428
      %s430 = smul.u32 2, %s27
      %p431 = scmp.lt.s32.totalorder %s26, 1
      %s432 = scalar_select %p431, %s26, 1
      %p433 = scmp.lt.s32.totalorder %s430, 1
      %s434 = scalar_select %p433, %s430, 1
      %s435 = smul.addr %s432, 2
      %s436 = sadd.s32 %s434, %s435
      %s437 = smul.addr %s436, 8
      %s438 = scalar_lea.vmem %s11, %s437
      %s439 = smul.u32 2, %s27
      %v441 = vld [vmem:[%s425] sm:$0xff]
      %v442 = vld [vmem:[%s425 + $0x8] sm:$0xff]
      %v443 = vld [vmem:[%s1] sm:$0x1]
      %v445 = vperm.slane %v443, 0
      %v447 = vmul.f32 %v441, %v445
      %v448 = vmul.f32 %v442, %v445
      %v449 = vld [vmem:[%s2] sm:$0x1]
      %v451 = vperm.slane %v449, 0
      %v453 = vadd.f32 %v447, %v451
      %v454 = vadd.f32 %v448, %v451
      %v455 = vpack.c.bf16 %v454, %v453
      %v456 = vld [vmem:[%s4] sm:$0xf]
      %v457 = vld [vmem:[%s4 + $0x4] sm:$0xf]
      %v458 = vld [vmem:[%s4 + $0x8] sm:$0xf]
      %v459 = vld [vmem:[%s4 + $0xc] sm:$0xf]
      %v460 = vld [vmem:[%s4 + $0x10] sm:$0xf]
      %v461 = vld [vmem:[%s4 + $0x14] sm:$0xf]
      %v462 = vld [vmem:[%s4 + $0x18] sm:$0xf]
      %v463 = vld [vmem:[%s4 + $0x1c] sm:$0xf]
      %v464 = vld [vmem:[%s4 + $0x20] sm:$0xf]
      %v465 = vld [vmem:[%s4 + $0x24] sm:$0xf]
      %v466 = vld [vmem:[%s4 + $0x28] sm:$0xf]
      %v467 = vld [vmem:[%s4 + $0x2c] sm:$0xf]
      %v468 = vld [vmem:[%s429] sm:$0x1]
      %v470 = vperm.slane %v468, 0
      %v484 = vunpack.c.l.b16 %v456
      %v485 = vunpack.c.l.b16 %v457
      %v486 = vunpack.c.l.b16 %v458
      %v487 = vunpack.c.l.b16 %v459
      %v488 = vunpack.c.l.b16 %v460
      %v489 = vunpack.c.l.b16 %v461
      %v490 = vunpack.c.l.b16 %v462
      %v491 = vunpack.c.l.b16 %v463
      %v492 = vunpack.c.l.b16 %v464
      %v493 = vunpack.c.l.b16 %v465
      %v494 = vunpack.c.l.b16 %v466
      %v495 = vunpack.c.l.b16 %v467
      %v496 = vpack.c.b16 %v485, %v484
      %v497 = vpack.c.b16 %v487, %v486
      %v498 = vpack.c.b16 %v489, %v488
      %v499 = vpack.c.b16 %v491, %v490
      %v500 = vpack.c.b16 %v493, %v492
      %v501 = vpack.c.b16 %v495, %v494
      %vm508 = vcmask 785408
      %v510 = vsel %vm508, %v455, 0
      %512 = vmatpush.bf16.msra.mxu0 0
      %513 = vmatpush.bf16.msra.mxu0 0
      %514 = vmatpush.bf16.msra.mxu0 %v501
      %515 = vmatpush.bf16.msra.mxu0 %v500
      %516 = vmatpush.bf16.msra.mxu0 %v499
      %517 = vmatpush.bf16.msra.mxu0 %v498
      %518 = vmatpush.bf16.msra.mxu0 %v497
      %519 = vmatpush.bf16.msra.mxu0 %v496
      %520 = vmatmul.bf16.gmra.mxu0 %v510
      %v521 = vpop.f32.mrf.mxu0
      %v522 = vadd.f32 %v470, %v521
      %v523 = vpop.f32.mrf.mxu0
      %v524 = vadd.f32 %v470, %v523
      %525 = vdwg.mxu0
      %v526 = vmax.f32 %v522, 0.0
      %v527 = vmax.f32 %v524, 0.0
      %v528 = vpack.c.bf16 %v527, %v526
      %v529 = vld [vmem:[%s5] sm:$0xf]
      %v530 = vld [vmem:[%s5 + $0x4] sm:$0xf]
      %v531 = vld [vmem:[%s5 + $0x8] sm:$0xf]
      %v532 = vld [vmem:[%s5 + $0xc] sm:$0xf]
      %v533 = vld [vmem:[%s5 + $0x10] sm:$0xf]
      %v534 = vld [vmem:[%s5 + $0x14] sm:$0xf]
      %v535 = vld [vmem:[%s5 + $0x18] sm:$0xf]
      %v536 = vld [vmem:[%s5 + $0x1c] sm:$0xf]
      %v537 = vld [vmem:[%s5 + $0x20] sm:$0xf]
      %v538 = vld [vmem:[%s5 + $0x24] sm:$0xf]
      %v539 = vld [vmem:[%s5 + $0x28] sm:$0xf]
      %v540 = vld [vmem:[%s5 + $0x2c] sm:$0xf]
      %v541 = vld [vmem:[%s5 + $0x30] sm:$0xf]
      %v542 = vld [vmem:[%s5 + $0x34] sm:$0xf]
      %v543 = vld [vmem:[%s5 + $0x38] sm:$0xf]
      %v544 = vld [vmem:[%s5 + $0x3c] sm:$0xf]
      %v545 = vld [vmem:[%s6] sm:$0x1]
      %v547 = vperm.slane %v545, 0
      %v565 = vunpack.c.l.b16 %v529
      %v566 = vunpack.c.l.b16 %v530
      %v567 = vunpack.c.l.b16 %v531
      %v568 = vunpack.c.l.b16 %v532
      %v569 = vunpack.c.l.b16 %v533
      %v570 = vunpack.c.l.b16 %v534
      %v571 = vunpack.c.l.b16 %v535
      %v572 = vunpack.c.l.b16 %v536
      %v573 = vunpack.c.l.b16 %v537
      %v574 = vunpack.c.l.b16 %v538
      %v575 = vunpack.c.l.b16 %v539
      %v576 = vunpack.c.l.b16 %v540
      %v577 = vunpack.c.l.b16 %v541
      %v578 = vunpack.c.l.b16 %v542
      %v579 = vunpack.c.l.b16 %v543
      %v580 = vunpack.c.l.b16 %v544
      %v581 = vpack.c.b16 %v566, %v565
      %v582 = vpack.c.b16 %v568, %v567
      %v583 = vpack.c.b16 %v570, %v569
      %v584 = vpack.c.b16 %v572, %v571
      %v585 = vpack.c.b16 %v574, %v573
      %v586 = vpack.c.b16 %v576, %v575
      %v587 = vpack.c.b16 %v578, %v577
      %v588 = vpack.c.b16 %v580, %v579
      %597 = vmatpush.bf16.msra.mxu0 %v588
      %598 = vmatpush.bf16.msra.mxu0 %v587
      %599 = vmatpush.bf16.msra.mxu0 %v586
      %600 = vmatpush.bf16.msra.mxu0 %v585
      %601 = vmatpush.bf16.msra.mxu0 %v584
      %602 = vmatpush.bf16.msra.mxu0 %v583
      %603 = vmatpush.bf16.msra.mxu0 %v582
      %604 = vmatpush.bf16.msra.mxu0 %v581
      %605 = vmatmul.bf16.gmra.mxu0 %v528
      %v606 = vpop.f32.mrf.mxu0
      %v607 = vadd.f32 %v547, %v606
      %v608 = vpop.f32.mrf.mxu0
      %v609 = vadd.f32 %v547, %v608
      %610 = vdwg.mxu0
      %v611 = vmax.f32 %v607, 0.0
      %v612 = vmax.f32 %v609, 0.0
      %v613 = vpack.c.bf16 %v612, %v611
      %v614 = vld [vmem:[%s7] sm:$0xf]
      %v615 = vld [vmem:[%s7 + $0x4] sm:$0xf]
      %v616 = vld [vmem:[%s7 + $0x8] sm:$0xf]
      %v617 = vld [vmem:[%s7 + $0xc] sm:$0xf]
      %v618 = vld [vmem:[%s7 + $0x10] sm:$0xf]
      %v619 = vld [vmem:[%s7 + $0x14] sm:$0xf]
      %v620 = vld [vmem:[%s7 + $0x18] sm:$0xf]
      %v621 = vld [vmem:[%s7 + $0x1c] sm:$0xf]
      %v622 = vld [vmem:[%s7 + $0x20] sm:$0xf]
      %v623 = vld [vmem:[%s7 + $0x24] sm:$0xf]
      %v624 = vld [vmem:[%s7 + $0x28] sm:$0xf]
      %v625 = vld [vmem:[%s7 + $0x2c] sm:$0xf]
      %v626 = vld [vmem:[%s7 + $0x30] sm:$0xf]
      %v627 = vld [vmem:[%s7 + $0x34] sm:$0xf]
      %v628 = vld [vmem:[%s7 + $0x38] sm:$0xf]
      %v629 = vld [vmem:[%s7 + $0x3c] sm:$0xf]
      %v630 = vld [vmem:[%s8] sm:$0x1]
      %v632 = vperm.slane %v630, 0
      %v650 = vunpack.c.l.b16 %v614
      %v651 = vunpack.c.l.b16 %v615
      %v652 = vunpack.c.l.b16 %v616
      %v653 = vunpack.c.l.b16 %v617
      %v654 = vunpack.c.l.b16 %v618
      %v655 = vunpack.c.l.b16 %v619
      %v656 = vunpack.c.l.b16 %v620
      %v657 = vunpack.c.l.b16 %v621
      %v658 = vunpack.c.l.b16 %v622
      %v659 = vunpack.c.l.b16 %v623
      %v660 = vunpack.c.l.b16 %v624
      %v661 = vunpack.c.l.b16 %v625
      %v662 = vunpack.c.l.b16 %v626
      %v663 = vunpack.c.l.b16 %v627
      %v664 = vunpack.c.l.b16 %v628
      %v665 = vunpack.c.l.b16 %v629
      %v666 = vpack.c.b16 %v651, %v650
      %v667 = vpack.c.b16 %v653, %v652
      %v668 = vpack.c.b16 %v655, %v654
      %v669 = vpack.c.b16 %v657, %v656
      %v670 = vpack.c.b16 %v659, %v658
      %v671 = vpack.c.b16 %v661, %v660
      %v672 = vpack.c.b16 %v663, %v662
      %v673 = vpack.c.b16 %v665, %v664
      %682 = vmatpush.bf16.msra.mxu0 %v673
      %683 = vmatpush.bf16.msra.mxu0 %v672
      %684 = vmatpush.bf16.msra.mxu0 %v671
      %685 = vmatpush.bf16.msra.mxu0 %v670
      %686 = vmatpush.bf16.msra.mxu0 %v669
      %687 = vmatpush.bf16.msra.mxu0 %v668
      %688 = vmatpush.bf16.msra.mxu0 %v667
      %689 = vmatpush.bf16.msra.mxu0 %v666
      %690 = vmatmul.bf16.gmra.mxu0 %v613
      %v691 = vpop.f32.mrf.mxu0
      %v692 = vadd.f32 %v632, %v691
      %v693 = vpop.f32.mrf.mxu0
      %v694 = vadd.f32 %v632, %v693
      %695 = vdwg.mxu0
      %v696 = vmax.f32 %v692, 0.0
      %v697 = vmax.f32 %v694, 0.0
      %v698 = vpack.c.bf16 %v697, %v696
      %v699 = vld [vmem:[%s9] sm:$0xf]
      %v700 = vld [vmem:[%s9 + $0x4] sm:$0xf]
      %v701 = vld [vmem:[%s9 + $0x8] sm:$0xf]
      %v702 = vld [vmem:[%s9 + $0xc] sm:$0xf]
      %v703 = vld [vmem:[%s9 + $0x10] sm:$0xf]
      %v704 = vld [vmem:[%s9 + $0x14] sm:$0xf]
      %v705 = vld [vmem:[%s9 + $0x18] sm:$0xf]
      %v706 = vld [vmem:[%s9 + $0x1c] sm:$0xf]
      %v707 = vld [vmem:[%s9 + $0x20] sm:$0xf]
      %v708 = vld [vmem:[%s9 + $0x24] sm:$0xf]
      %v709 = vld [vmem:[%s9 + $0x28] sm:$0xf]
      %v710 = vld [vmem:[%s9 + $0x2c] sm:$0xf]
      %v711 = vld [vmem:[%s9 + $0x30] sm:$0xf]
      %v712 = vld [vmem:[%s9 + $0x34] sm:$0xf]
      %v713 = vld [vmem:[%s9 + $0x38] sm:$0xf]
      %v714 = vld [vmem:[%s9 + $0x3c] sm:$0xf]
      %v715 = vld [vmem:[%s10] sm:$0x1]
      %v717 = vperm.slane %v715, 0
      %v735 = vunpack.c.l.b16 %v699
      %v736 = vunpack.c.l.b16 %v700
      %v737 = vunpack.c.l.b16 %v701
      %v738 = vunpack.c.l.b16 %v702
      %v739 = vunpack.c.l.b16 %v703
      %v740 = vunpack.c.l.b16 %v704
      %v741 = vunpack.c.l.b16 %v705
      %v742 = vunpack.c.l.b16 %v706
      %v743 = vunpack.c.l.b16 %v707
      %v744 = vunpack.c.l.b16 %v708
      %v745 = vunpack.c.l.b16 %v709
      %v746 = vunpack.c.l.b16 %v710
      %v747 = vunpack.c.l.b16 %v711
      %v748 = vunpack.c.l.b16 %v712
      %v749 = vunpack.c.l.b16 %v713
      %v750 = vunpack.c.l.b16 %v714
      %v751 = vpack.c.b16 %v736, %v735
      %v752 = vpack.c.b16 %v738, %v737
      %v753 = vpack.c.b16 %v740, %v739
      %v754 = vpack.c.b16 %v742, %v741
      %v755 = vpack.c.b16 %v744, %v743
      %v756 = vpack.c.b16 %v746, %v745
      %v757 = vpack.c.b16 %v748, %v747
      %v758 = vpack.c.b16 %v750, %v749
      %767 = vmatpush.bf16.msra.mxu0 %v758
      %768 = vmatpush.bf16.msra.mxu0 %v757
      %769 = vmatpush.bf16.msra.mxu0 %v756
      %770 = vmatpush.bf16.msra.mxu0 %v755
      %771 = vmatpush.bf16.msra.mxu0 %v754
      %772 = vmatpush.bf16.msra.mxu0 %v753
      %773 = vmatpush.bf16.msra.mxu0 %v752
      %774 = vmatpush.bf16.msra.mxu0 %v751
      %775 = vmatmul.bf16.gmra.mxu0 %v698
      %v776 = vpop.f32.mrf.mxu0
      %v777 = vadd.f32 %v717, %v776
      %v778 = vpop.f32.mrf.mxu0
      %v779 = vadd.f32 %v717, %v778
      %780 = vdwg.mxu0
      %v781 = vmax.f32 %v777, 0.0
      %v782 = vmax.f32 %v779, 0.0
      %783 = vst [vmem:[%s438] sm:$0xff] %v781
      %784 = vst [vmem:[%s438 + $0x8] sm:$0xff] %v782
      %s785 = smul.u32 2, %s27
      %p786 = scmp.lt.s32.totalorder %s26, 1
      %s787 = scalar_select %p786, %s26, 1
      %p788 = scmp.lt.s32.totalorder %s785, 1
      %s789 = scalar_select %p788, %s785, 1
      %s790 = smul.addr %s787, 2
      %s791 = sadd.s32 %s789, %s790
      %s792 = smul.addr %s791, 8
      %s793 = scalar_lea.vmem %s11, %s792
      // Predicated region
      $region65: #{prefil_forward.19} parent=63 // pred_check
        %p794 = pneg %p297
      $region66: #{prefil_forward.19} parent=63 // pred_check_branch
        %796 = sbr.rel (%p794) target = $region68
      $region67: #{prefil_forward.19} parent=63 // pred_region
        %s797 = smul.u32 2, %s27
      $region68: #{prefil_forward.19} parent=63 // pred_fallthru
        _
    $region64: #{prefil_forward.19} parent=5 // pred_fallthru
      _
    %p798 = scmp.le.s32.totalorder 2, %s17
    // Predicated region
    $region69: #{prefil_forward.19} parent=5 // pred_check
      %p799 = pneg %p798
    $region70: #{prefil_forward.19} parent=5 // pred_check_branch
      %801 = sbr.rel (%p799) target = $region72
    $region71: #{prefil_forward.19} parent=5 // pred_region
      %s802 = ssub.s32 %s17, 2
      // Predicated region
      $region73: #{prefil_forward.19} parent=71 // pred_check
        %p803 = pneg %p303
      $region74: #{prefil_forward.19} parent=71 // pred_check_branch
        %805 = sbr.rel (%p803) target = $region76
      $region75: #{prefil_forward.19} parent=71 // pred_region
        %s806 = smul.u32 2, %s29
        %p807 = scmp.lt.s32.totalorder %s28, 1
        %s808 = scalar_select %p807, %s28, 1
        %p809 = scmp.lt.s32.totalorder %s806, 1
        %s810 = scalar_select %p809, %s806, 1
        %s811 = smul.addr %s808, 2
        %s812 = sadd.s32 %s810, %s811
        %s813 = smul.addr %s812, 8
        %s814 = scalar_lea.vmem %s11, %s813
      $region76: #{prefil_forward.19} parent=71 // pred_fallthru
        _
    $region72: #{prefil_forward.19} parent=5 // pred_fallthru
      _
  $region6: #{prefil_forward.19} parent=0 // loop_footer
    %s21 = sadd.s32 1, %s17
  $region7: #{prefil_forward.19} parent=0 // loop_footer_branch
    %16 = sbr.rel target = $region3
  $region8: #{prefil_forward.19} parent=0 // loop_exit
    _

</llo_original>
